<compile_context>
chip_gen: v7x
topology: tpu7x:2x2x1
jax: 0.10.0
libtpu: 0.0.40
codegen_flags: <defaults>
</compile_context>

<pallas_src>
import math

import jax
import jax.numpy as jnp
from jax import lax
from jax.experimental import pallas as pl
from jax.experimental.pallas import tpu as pltpu

# --- module hyperparameters (fixed by the PyTorch source) -------------------
BLOCK_SIZE = 256
N_EMBED = 512
N_HEADS = 32
HEAD_SIZE = N_EMBED // N_HEADS              # 16
HEADS_PER_GROUP = 8                         # 8 * 16 = 128 lanes per group
N_GROUPS = N_HEADS // HEADS_PER_GROUP       # 4
GROUP_WIDTH = HEADS_PER_GROUP * HEAD_SIZE   # 128
QKV_WIDTH = 3 * GROUP_WIDTH                 # 384


def _pick_query_tile(T):
    """Largest query-row tile (multiple of 8, <= 128) that divides T."""
    for t in (128, 64, 32, 16, 8):
        if T % t == 0:
            return t
    return T


# ----------------------------------------------------------------------------
# Fused kernel: QKV projection + causal attention + output projection.
#   grid = (B, N_GROUPS).  Each program handles one (batch, head-group) pair
#   and accumulates its contribution of the output projection into the
#   VMEM-resident (T, C) output block (group axis is the reduction axis).
# ----------------------------------------------------------------------------
def _mha_fused_kernel(x_ref, wqkv_ref, wproj_ref, bias_ref, o_ref,
                      xb_ref, attn_ref):
    # x_ref    : (T, C) f32          wqkv_ref : (N_GROUPS, C, 384) bf16
    # wproj_ref: (N_GROUPS, 128, C) bf16      bias_ref : (1, C) f32
    # o_ref    : (T, C) f32 output/accumulator block
    # xb_ref   : (T, C) bf16 scratch (cached bf16 x, reused across groups)
    # attn_ref : (T, 128) bf16 scratch (this group's concat head outputs)
    g = pl.program_id(1)
    T = x_ref.shape[0]
    tq = _pick_query_tile(T)
    n_qt = T // tq

    # Once per batch (first group): cast x to bf16 into scratch and zero the
    # output accumulator (it stays VMEM-resident across the whole group axis).
    @pl.when(g == 0)
    def _():
        xb_ref[...] = x_ref[...].astype(jnp.bfloat16)
        o_ref[...] = jnp.zeros_like(o_ref)

    xb = xb_ref[...]                                          # (T, C) bf16

    # Fused QKV projection for this head group: (T,512)@(512,384) on the MXU,
    # f32 accumulation.  1/sqrt(head_size) is already folded into the Q weights.
    qkv = jnp.dot(xb, wqkv_ref[g], preferred_element_type=jnp.float32)  # (T,384)
    # Group-wide bf16 casts (once, not per head).
    q = qkv[:, 0:GROUP_WIDTH].astype(jnp.bfloat16)            # (T, 128)
    k = qkv[:, GROUP_WIDTH:2 * GROUP_WIDTH].astype(jnp.bfloat16)
    v = qkv[:, 2 * GROUP_WIDTH:3 * GROUP_WIDTH].astype(jnp.bfloat16)

    # Causal attention, tiled over query-row blocks: key blocks strictly above
    # the diagonal are skipped entirely (static slices, no work emitted).
    for qi in range(n_qt):
        q_lo = qi * tq
        kv_hi = q_lo + tq               # causal upper bound for this row block
        # Mask for this row block (only the diagonal kv block is ragged);
        # hoisted out of the head loop.
        rows = lax.broadcasted_iota(jnp.int32, (tq, kv_hi), 0) + q_lo
        cols = lax.broadcasted_iota(jnp.int32, (tq, kv_hi), 1)
        causal = cols <= rows

        for h in range(HEADS_PER_GROUP):
            lo = h * HEAD_SIZE
            hi = lo + HEAD_SIZE
            qh = q[q_lo:kv_hi, lo:hi]                          # (tq, 16) bf16
            kh = k[0:kv_hi, lo:hi]                             # (kv_hi, 16)
            vh = v[0:kv_hi, lo:hi]                             # (kv_hi, 16)

            # Scores: contract head dim directly (no k.T materialization).
            s = jnp.einsum("td,sd->ts", qh, kh,
                           preferred_element_type=jnp.float32)  # (tq, kv_hi)
            s = jnp.where(causal, s, -jnp.inf)

            # Numerically-stable softmax; denominator via EUP approx reciprocal
            # (~1e-3 relative error, dominated by the bf16 cast of P below).
            s = s - jnp.max(s, axis=-1, keepdims=True)
            p = jnp.exp(s)
            p = p * pl.reciprocal(jnp.sum(p, axis=-1, keepdims=True),
                                  approx=True)

            oh = jnp.dot(p.astype(jnp.bfloat16), vh,
                         preferred_element_type=jnp.float32)    # (tq, 16)
            # Static-offset store into the lane-dense per-group attention tile;
            # hides under the next head's MXU/EUP work.
            attn_ref[q_lo:kv_hi, lo:hi] = oh.astype(jnp.bfloat16)

    # Fused output projection (cross-group reduction): this group's 128
    # columns of the concatenated head output hit rows [g*128,(g+1)*128) of
    # W_proj; accumulate (T,128)@(128,C) into the resident (T, C) f32 output.
    o_ref[...] += jnp.dot(attn_ref[...], wproj_ref[g],
                          preferred_element_type=jnp.float32)

    @pl.when(g == N_GROUPS - 1)
    def _():
        o_ref[...] += bias_ref[...]


def multihead_attention(x, wqkv_g, wproj_g, b_proj):
    """x: (B, T, C) f32; wqkv_g: (N_GROUPS, C, 384) bf16;
    wproj_g: (N_GROUPS, 128, C) bf16; b_proj: (1, C) f32.
    Returns the full Multihead forward output, (B, T, C) f32."""
    B, T, C = x.shape
    return pl.pallas_call(
        _mha_fused_kernel,
        out_shape=jax.ShapeDtypeStruct((B, T, C), jnp.float32),
        grid_spec=pltpu.PrefetchScalarGridSpec(
            num_scalar_prefetch=0,
            # B leading & parallel (megacore split); group axis is the fused
            # output-projection reduction -> arbitrary.
            grid=(B, N_GROUPS),
            in_specs=[
                pl.BlockSpec((None, T, C), lambda b, g: (b, 0, 0)),   # x (f32)
                # Weights use constant index maps -> DMA'd once and kept
                # VMEM-resident for the whole grid (~2 MiB total).
                pl.BlockSpec((N_GROUPS, C, QKV_WIDTH), lambda b, g: (0, 0, 0)),
                pl.BlockSpec((N_GROUPS, GROUP_WIDTH, C), lambda b, g: (0, 0, 0)),
                pl.BlockSpec((1, C), lambda b, g: (0, 0)),            # bias
            ],
            # Same output block for every g -> acts as the cross-group
            # accumulator; written back to HBM once per batch.
            out_specs=pl.BlockSpec((None, T, C), lambda b, g: (b, 0, 0)),
            scratch_shapes=[
                pltpu.VMEM((T, C), jnp.bfloat16),             # cached bf16 x
                pltpu.VMEM((T, GROUP_WIDTH), jnp.bfloat16),   # group attn out
            ],
        ),
        compiler_params=pltpu.CompilerParams(
            dimension_semantics=("parallel", "arbitrary"),
        ),
    )(x, wqkv_g, wproj_g, b_proj)


# ----------------------------------------------------------------------------
# One-time weight packing (outside the jitted forward)
# ----------------------------------------------------------------------------
def prepare_params(params):
    scale = HEAD_SIZE ** (-0.5)     # 0.25 -- power of two, exact in bf16

    def group(w):
        # (N_HEADS, C, HEAD_SIZE) -> (N_GROUPS, C, GROUP_WIDTH).  Consecutive
        # heads are packed so the in-group column order matches
        # torch.cat(head outputs, dim=-1).
        w = w.reshape(N_GROUPS, HEADS_PER_GROUP, N_EMBED, HEAD_SIZE)
        return jnp.transpose(w, (0, 2, 1, 3)).reshape(
            N_GROUPS, N_EMBED, GROUP_WIDTH)

    wq = group(params["wq"]) * scale          # fold softmax scale into Q
    wk = group(params["wk"])
    wv = group(params["wv"])
    wqkv = jnp.concatenate([wq, wk, wv], axis=-1).astype(jnp.bfloat16)

    # Pre-transposed projection weight, split into per-group row blocks.
    wproj = params["w_proj"].reshape(
        N_GROUPS, GROUP_WIDTH, N_EMBED).astype(jnp.bfloat16)

    return {
        "wqkv": wqkv,                                  # (N_GROUPS, C, 384) bf16
        "wproj": wproj,                                # (N_GROUPS, 128, C) bf16
        "b_proj": params["b_proj"].astype(jnp.float32),  # (1, C) f32
    }


@jax.jit
def multihead_forward(x, prepped):
    return multihead_attention(x, prepped["wqkv"], prepped["wproj"],
                               prepped["b_proj"])


# ----------------------------------------------------------------------------
# Pure-JAX reference mirroring the kernel's numerics
# (bf16 MXU inputs, f32 accumulation, eval-mode dropout = identity)
# ----------------------------------------------------------------------------
def multihead_reference(x, params):
    B, T, C = x.shape
    xb = x.astype(jnp.bfloat16)
    scale = HEAD_SIZE ** (-0.5)
    mask = jnp.tril(jnp.ones((T, T), dtype=bool))
    outs = []
    for h in range(N_HEADS):
        wq = params["wq"][h].astype(jnp.bfloat16)
        wk = params["wk"][h].astype(jnp.bfloat16)
        wv = params["wv"][h].astype(jnp.bfloat16)
        q = jnp.einsum("btc,ch->bth", xb, wq, preferred_element_type=jnp.float32)
        k = jnp.einsum("btc,ch->bth", xb, wk, preferred_element_type=jnp.float32)
        v = jnp.einsum("btc,ch->bth", xb, wv, preferred_element_type=jnp.float32)
        s = jnp.einsum("btd,bsd->bts", q.astype(jnp.bfloat16),
                       k.astype(jnp.bfloat16),
                       preferred_element_type=jnp.float32) * scale
        s = jnp.where(mask, s, -jnp.inf)
        s = s - jnp.max(s, axis=-1, keepdims=True)
        p = jnp.exp(s)
        p = p / jnp.sum(p, axis=-1, keepdims=True)
        outs.append(jnp.einsum("bts,bsd->btd", p.astype(jnp.bfloat16),
                               v.astype(jnp.bfloat16),
                               preferred_element_type=jnp.float32))
    out = jnp.concatenate(outs, axis=-1).astype(jnp.bfloat16)   # (B, T, C)
    y = jnp.einsum("btc,cd->btd", out, params["w_proj"].astype(jnp.bfloat16),
                   preferred_element_type=jnp.float32) + params["b_proj"][0]
    return y


def init_params(key):
    ks = jax.random.split(key, 5)
    s_in = 1.0 / math.sqrt(N_EMBED)
    return {
        # stored pre-transposed: (in, out) per head / for the projection
        "wq": jax.random.uniform(ks[0], (N_HEADS, N_EMBED, HEAD_SIZE),
                                 jnp.float32, -s_in, s_in),
        "wk": jax.random.uniform(ks[1], (N_HEADS, N_EMBED, HEAD_SIZE),
                                 jnp.float32, -s_in, s_in),
        "wv": jax.random.uniform(ks[2], (N_HEADS, N_EMBED, HEAD_SIZE),
                                 jnp.float32, -s_in, s_in),
        "w_proj": jax.random.uniform(ks[3], (N_EMBED, N_EMBED),
                                     jnp.float32, -s_in, s_in),
        "b_proj": jax.random.uniform(ks[4], (1, N_EMBED),
                                     jnp.float32, -s_in, s_in),
    }


if __name__ == "__main__":
    key = jax.random.PRNGKey(0)
    k_x, k_p = jax.random.split(key)

    B, T = 2, 64  # T <= block_size (256); C is fixed at n_embed = 512
    x = jax.random.normal(k_x, (B, T, N_EMBED), dtype=jnp.float32)
    params = init_params(k_p)
    prepped = prepare_params(params)   # one-time weight packing, outside jit

    y = jax.block_until_ready(multihead_forward(x, prepped))
    y_ref = multihead_reference(x, params)

    assert y.shape == (B, T, N_EMBED)
    # bf16 MXU inputs (f32 accumulation) + EUP approx reciprocal in the softmax
    # denominator -> compare against a matched-numerics reference with a
    # correspondingly relaxed tolerance (differences are ~1e-3).
    assert jnp.allclose(y, y_ref, atol=1e-2, rtol=1e-2), "mismatch vs reference"

    print("KERNEL_OK")
</pallas_src>

<mosaic_0001>
module attributes {stable_mosaic.version = 11 : i64} {
  func.func @_mha_fused_kernel(%arg0: i32, %arg1: i32, %arg2: memref<1x64x512xf32, #tpu.memory_space<vmem>>, %arg3: memref<4x512x384xbf16, #tpu.memory_space<vmem>>, %arg4: memref<4x128x512xbf16, #tpu.memory_space<vmem>>, %arg5: memref<1x512xf32, #tpu.memory_space<vmem>>, %arg6: memref<1x64x512xf32, #tpu.memory_space<vmem>>, %arg7: memref<64x512xbf16, #tpu.memory_space<vmem>>, %arg8: memref<64x128xbf16, #tpu.memory_space<vmem>>) attributes {dimension_semantics = [#tpu.dimension_semantics<parallel>, #tpu.dimension_semantics<arbitrary>], iteration_bounds = array<i64: 2, 4>, scalar_prefetch = 0 : i64, scratch_operands = 2 : i64, tpu.core_type = #tpu.core_type<tc>, window_params = [{transform_indices = @transform_0, window_bounds = array<i64: 1, 64, 512>}, {pipeline_mode = #tpu.pipeline_mode<synchronous>, transform_indices = @transform_1, window_bounds = array<i64: 4, 512, 384>}, {pipeline_mode = #tpu.pipeline_mode<synchronous>, transform_indices = @transform_2, window_bounds = array<i64: 4, 128, 512>}, {pipeline_mode = #tpu.pipeline_mode<synchronous>, transform_indices = @transform_3, window_bounds = array<i64: 1, 512>}, {transform_indices = @transform_4, window_bounds = array<i64: 1, 64, 512>}]} {
    %c0_i32 = arith.constant 0 : i32
    %0 = arith.cmpi eq, %arg1, %c0_i32 : i32
    %1 = arith.extui %0 : i1 to i32
    %c0_i32_0 = arith.constant 0 : i32
    %2 = arith.cmpi ne, %1, %c0_i32_0 : i32
    scf.if %2 {
      %c0_66 = arith.constant 0 : index
      %c0_67 = arith.constant 0 : index
      %c0_68 = arith.constant 0 : index
      %193 = vector.load %arg2[%c0_66, %c0_67, %c0_68] : memref<1x64x512xf32, #tpu.memory_space<vmem>>, vector<1x64x512xf32>
      %194 = vector.shape_cast %193 : vector<1x64x512xf32> to vector<64x512xf32>
      %195 = arith.truncf %194 : vector<64x512xf32> to vector<64x512xbf16>
      %c0_69 = arith.constant 0 : index
      %c0_70 = arith.constant 0 : index
      %196 = vector.load %arg7[%c0_69, %c0_70] : memref<64x512xbf16, #tpu.memory_space<vmem>>, vector<64x512xbf16>
      tpu.vector_store %arg7[%c0_69, %c0_70], %195 {strides = array<i32>} : memref<64x512xbf16, #tpu.memory_space<vmem>>, vector<64x512xbf16>,
      %cst_71 = arith.constant 0.000000e+00 : f32
      %197 = vector.broadcast %cst_71 : f32 to vector<64x512xf32>
      %c0_72 = arith.constant 0 : index
      %c0_73 = arith.constant 0 : index
      %c0_74 = arith.constant 0 : index
      %198 = vector.load %arg6[%c0_72, %c0_73, %c0_74] : memref<1x64x512xf32, #tpu.memory_space<vmem>>, vector<1x64x512xf32>
      %199 = vector.shape_cast %198 : vector<1x64x512xf32> to vector<64x512xf32>
      %200 = vector.shape_cast %197 : vector<64x512xf32> to vector<1x64x512xf32>
      tpu.vector_store %arg6[%c0_72, %c0_73, %c0_74], %200 {strides = array<i32>} : memref<1x64x512xf32, #tpu.memory_space<vmem>>, vector<1x64x512xf32>,
    } else {
    }
    %c0 = arith.constant 0 : index
    %c0_1 = arith.constant 0 : index
    %3 = vector.load %arg7[%c0, %c0_1] : memref<64x512xbf16, #tpu.memory_space<vmem>>, vector<64x512xbf16>
    %4 = arith.index_cast %arg1 : i32 to index
    %c0_2 = arith.constant 0 : index
    %c0_3 = arith.constant 0 : index
    %5 = vector.load %arg3[%4, %c0_2, %c0_3] : memref<4x512x384xbf16, #tpu.memory_space<vmem>>, vector<1x512x384xbf16>
    %6 = vector.shape_cast %5 : vector<1x512x384xbf16> to vector<512x384xbf16>
    %cst = arith.constant dense<0.000000e+00> : vector<64x384xf32>
    %7 = tpu.matmul %3, %6, %cst {dimension_numbers = #tpu.dot_dimension_numbers<[1], [0], [0], [1], [0, 0, 1, 1], [], []>} : vector<64x512xbf16>, vector<512x384xbf16>, vector<64x384xf32> -> vector<64x384xf32>
    %8 = vector.extract_strided_slice %7 {offsets = [0, 0], sizes = [64, 128], strides = [1, 1]} : vector<64x384xf32> to vector<64x128xf32>
    %9 = arith.truncf %8 : vector<64x128xf32> to vector<64x128xbf16>
    %10 = vector.extract_strided_slice %7 {offsets = [0, 128], sizes = [64, 128], strides = [1, 1]} : vector<64x384xf32> to vector<64x128xf32>
    %11 = arith.truncf %10 : vector<64x128xf32> to vector<64x128xbf16>
    %12 = vector.extract_strided_slice %7 {offsets = [0, 256], sizes = [64, 128], strides = [1, 1]} : vector<64x384xf32> to vector<64x128xf32>
    %13 = arith.truncf %12 : vector<64x128xf32> to vector<64x128xbf16>
    %14 = tpu.iota {dimensions = array<i32: 0>} : vector<64x64xi32>
    %c0_i32_4 = arith.constant 0 : i32
    %15 = vector.broadcast %c0_i32_4 : i32 to vector<64x64xi32>
    %16 = arith.addi %14, %15 : vector<64x64xi32>
    %17 = tpu.iota {dimensions = array<i32: 1>} : vector<64x64xi32>
    %18 = arith.cmpi sle, %17, %16 : vector<64x64xi32>
    %19 = vector.extract_strided_slice %9 {offsets = [0, 0], sizes = [64, 16], strides = [1, 1]} : vector<64x128xbf16> to vector<64x16xbf16>
    %20 = vector.extract_strided_slice %11 {offsets = [0, 0], sizes = [64, 16], strides = [1, 1]} : vector<64x128xbf16> to vector<64x16xbf16>
    %21 = vector.extract_strided_slice %13 {offsets = [0, 0], sizes = [64, 16], strides = [1, 1]} : vector<64x128xbf16> to vector<64x16xbf16>
    "tpu.trace_start"() <{level = 10 : i32, message = "td,sd->ts"}> : () -> ()
    %cst_5 = arith.constant dense<0.000000e+00> : vector<64x64xf32>
    %22 = tpu.matmul %19, %20, %cst_5 {dimension_numbers = #tpu.dot_dimension_numbers<[1], [1], [0], [0], [0, 0, 1, 0], [], []>} : vector<64x16xbf16>, vector<64x16xbf16>, vector<64x64xf32> -> vector<64x64xf32>
    %cst_6 = arith.constant 0xFF800000 : f32
    "tpu.trace_stop"() : () -> ()
    %23 = vector.broadcast %cst_6 : f32 to vector<64x64xf32>
    %24 = arith.select %18, %22, %23 : vector<64x64xi1>, vector<64x64xf32>
    %cst_7 = arith.constant dense<0xFF800000> : vector<64xf32>
    %25 = vector.multi_reduction <maximumf>, %24, %cst_7 [1] : vector<64x64xf32> to vector<64xf32>
    %26 = vector.shape_cast %25 : vector<64xf32> to vector<64x1xf32>
    %27 = vector.broadcast %26 : vector<64x1xf32> to vector<64x64xf32>
    %28 = arith.subf %24, %27 : vector<64x64xf32>
    %29 = math.exp %28 : vector<64x64xf32>
    %cst_8 = arith.constant dense<0.000000e+00> : vector<64xf32>
    %30 = vector.multi_reduction <add>, %29, %cst_8 [1] : vector<64x64xf32> to vector<64xf32>
    %31 = vector.shape_cast %30 : vector<64xf32> to vector<64x1xf32>
    %32 = tpu.reciprocal %31 {approx = true} : vector<64x1xf32> -> vector<64x1xf32>
    %33 = vector.broadcast %32 : vector<64x1xf32> to vector<64x64xf32>
    %34 = arith.mulf %29, %33 : vector<64x64xf32>
    %35 = arith.truncf %34 : vector<64x64xf32> to vector<64x64xbf16>
    %cst_9 = arith.constant dense<0.000000e+00> : vector<64x16xf32>
    %36 = tpu.matmul %35, %21, %cst_9 {dimension_numbers = #tpu.dot_dimension_numbers<[1], [0], [0], [1], [0, 0, 1, 1], [], []>} : vector<64x64xbf16>, vector<64x16xbf16>, vector<64x16xf32> -> vector<64x16xf32>
    %37 = arith.truncf %36 : vector<64x16xf32> to vector<64x16xbf16>
    %c0_10 = arith.constant 0 : index
    %c0_11 = arith.constant 0 : index
    %38 = vector.load %arg8[%c0_10, %c0_11] : memref<64x128xbf16, #tpu.memory_space<vmem>>, vector<64x16xbf16>
    tpu.vector_store %arg8[%c0_10, %c0_11], %37 {strides = array<i32>} : memref<64x128xbf16, #tpu.memory_space<vmem>>, vector<64x16xbf16>,
    %39 = vector.extract_strided_slice %9 {offsets = [0, 16], sizes = [64, 16], strides = [1, 1]} : vector<64x128xbf16> to vector<64x16xbf16>
    %40 = vector.extract_strided_slice %11 {offsets = [0, 16], sizes = [64, 16], strides = [1, 1]} : vector<64x128xbf16> to vector<64x16xbf16>
    %41 = vector.extract_strided_slice %13 {offsets = [0, 16], sizes = [64, 16], strides = [1, 1]} : vector<64x128xbf16> to vector<64x16xbf16>
    "tpu.trace_start"() <{level = 10 : i32, message = "td,sd->ts"}> : () -> ()
    %cst_12 = arith.constant dense<0.000000e+00> : vector<64x64xf32>
    %42 = tpu.matmul %39, %40, %cst_12 {dimension_numbers = #tpu.dot_dimension_numbers<[1], [1], [0], [0], [0, 0, 1, 0], [], []>} : vector<64x16xbf16>, vector<64x16xbf16>, vector<64x64xf32> -> vector<64x64xf32>
    %cst_13 = arith.constant 0xFF800000 : f32
    "tpu.trace_stop"() : () -> ()
    %43 = vector.broadcast %cst_13 : f32 to vector<64x64xf32>
    %44 = arith.select %18, %42, %43 : vector<64x64xi1>, vector<64x64xf32>
    %cst_14 = arith.constant dense<0xFF800000> : vector<64xf32>
    %45 = vector.multi_reduction <maximumf>, %44, %cst_14 [1] : vector<64x64xf32> to vector<64xf32>
    %46 = vector.shape_cast %45 : vector<64xf32> to vector<64x1xf32>
    %47 = vector.broadcast %46 : vector<64x1xf32> to vector<64x64xf32>
    %48 = arith.subf %44, %47 : vector<64x64xf32>
    %49 = math.exp %48 : vector<64x64xf32>
    %cst_15 = arith.constant dense<0.000000e+00> : vector<64xf32>
    %50 = vector.multi_reduction <add>, %49, %cst_15 [1] : vector<64x64xf32> to vector<64xf32>
    %51 = vector.shape_cast %50 : vector<64xf32> to vector<64x1xf32>
    %52 = tpu.reciprocal %51 {approx = true} : vector<64x1xf32> -> vector<64x1xf32>
    %53 = vector.broadcast %52 : vector<64x1xf32> to vector<64x64xf32>
    %54 = arith.mulf %49, %53 : vector<64x64xf32>
    %55 = arith.truncf %54 : vector<64x64xf32> to vector<64x64xbf16>
    %cst_16 = arith.constant dense<0.000000e+00> : vector<64x16xf32>
    %56 = tpu.matmul %55, %41, %cst_16 {dimension_numbers = #tpu.dot_dimension_numbers<[1], [0], [0], [1], [0, 0, 1, 1], [], []>} : vector<64x64xbf16>, vector<64x16xbf16>, vector<64x16xf32> -> vector<64x16xf32>
    %57 = arith.truncf %56 : vector<64x16xf32> to vector<64x16xbf16>
    %c0_17 = arith.constant 0 : index
    %c16 = arith.constant 16 : index
    %58 = vector.load %arg8[%c0_17, %c16] : memref<64x128xbf16, #tpu.memory_space<vmem>>, vector<64x16xbf16>
    tpu.vector_store %arg8[%c0_17, %c16], %57 {strides = array<i32>} : memref<64x128xbf16, #tpu.memory_space<vmem>>, vector<64x16xbf16>,
    %59 = vector.extract_strided_slice %9 {offsets = [0, 32], sizes = [64, 16], strides = [1, 1]} : vector<64x128xbf16> to vector<64x16xbf16>
    %60 = vector.extract_strided_slice %11 {offsets = [0, 32], sizes = [64, 16], strides = [1, 1]} : vector<64x128xbf16> to vector<64x16xbf16>
    %61 = vector.extract_strided_slice %13 {offsets = [0, 32], sizes = [64, 16], strides = [1, 1]} : vector<64x128xbf16> to vector<64x16xbf16>
    "tpu.trace_start"() <{level = 10 : i32, message = "td,sd->ts"}> : () -> ()
    %cst_18 = arith.constant dense<0.000000e+00> : vector<64x64xf32>
    %62 = tpu.matmul %59, %60, %cst_18 {dimension_numbers = #tpu.dot_dimension_numbers<[1], [1], [0], [0], [0, 0, 1, 0], [], []>} : vector<64x16xbf16>, vector<64x16xbf16>, vector<64x64xf32> -> vector<64x64xf32>
    %cst_19 = arith.constant 0xFF800000 : f32
    "tpu.trace_stop"() : () -> ()
    %63 = vector.broadcast %cst_19 : f32 to vector<64x64xf32>
    %64 = arith.select %18, %62, %63 : vector<64x64xi1>, vector<64x64xf32>
    %cst_20 = arith.constant dense<0xFF800000> : vector<64xf32>
    %65 = vector.multi_reduction <maximumf>, %64, %cst_20 [1] : vector<64x64xf32> to vector<64xf32>
    %66 = vector.shape_cast %65 : vector<64xf32> to vector<64x1xf32>
    %67 = vector.broadcast %66 : vector<64x1xf32> to vector<64x64xf32>
    %68 = arith.subf %64, %67 : vector<64x64xf32>
    %69 = math.exp %68 : vector<64x64xf32>
    %cst_21 = arith.constant dense<0.000000e+00> : vector<64xf32>
    %70 = vector.multi_reduction <add>, %69, %cst_21 [1] : vector<64x64xf32> to vector<64xf32>
    %71 = vector.shape_cast %70 : vector<64xf32> to vector<64x1xf32>
    %72 = tpu.reciprocal %71 {approx = true} : vector<64x1xf32> -> vector<64x1xf32>
    %73 = vector.broadcast %72 : vector<64x1xf32> to vector<64x64xf32>
    %74 = arith.mulf %69, %73 : vector<64x64xf32>
    %75 = arith.truncf %74 : vector<64x64xf32> to vector<64x64xbf16>
    %cst_22 = arith.constant dense<0.000000e+00> : vector<64x16xf32>
    %76 = tpu.matmul %75, %61, %cst_22 {dimension_numbers = #tpu.dot_dimension_numbers<[1], [0], [0], [1], [0, 0, 1, 1], [], []>} : vector<64x64xbf16>, vector<64x16xbf16>, vector<64x16xf32> -> vector<64x16xf32>
    %77 = arith.truncf %76 : vector<64x16xf32> to vector<64x16xbf16>
    %c0_23 = arith.constant 0 : index
    %c32 = arith.constant 32 : index
    %78 = vector.load %arg8[%c0_23, %c32] : memref<64x128xbf16, #tpu.memory_space<vmem>>, vector<64x16xbf16>
    tpu.vector_store %arg8[%c0_23, %c32], %77 {strides = array<i32>} : memref<64x128xbf16, #tpu.memory_space<vmem>>, vector<64x16xbf16>,
    %79 = vector.extract_strided_slice %9 {offsets = [0, 48], sizes = [64, 16], strides = [1, 1]} : vector<64x128xbf16> to vector<64x16xbf16>
    %80 = vector.extract_strided_slice %11 {offsets = [0, 48], sizes = [64, 16], strides = [1, 1]} : vector<64x128xbf16> to vector<64x16xbf16>
    %81 = vector.extract_strided_slice %13 {offsets = [0, 48], sizes = [64, 16], strides = [1, 1]} : vector<64x128xbf16> to vector<64x16xbf16>
    "tpu.trace_start"() <{level = 10 : i32, message = "td,sd->ts"}> : () -> ()
    %cst_24 = arith.constant dense<0.000000e+00> : vector<64x64xf32>
    %82 = tpu.matmul %79, %80, %cst_24 {dimension_numbers = #tpu.dot_dimension_numbers<[1], [1], [0], [0], [0, 0, 1, 0], [], []>} : vector<64x16xbf16>, vector<64x16xbf16>, vector<64x64xf32> -> vector<64x64xf32>
    %cst_25 = arith.constant 0xFF800000 : f32
    "tpu.trace_stop"() : () -> ()
    %83 = vector.broadcast %cst_25 : f32 to vector<64x64xf32>
    %84 = arith.select %18, %82, %83 : vector<64x64xi1>, vector<64x64xf32>
    %cst_26 = arith.constant dense<0xFF800000> : vector<64xf32>
    %85 = vector.multi_reduction <maximumf>, %84, %cst_26 [1] : vector<64x64xf32> to vector<64xf32>
    %86 = vector.shape_cast %85 : vector<64xf32> to vector<64x1xf32>
    %87 = vector.broadcast %86 : vector<64x1xf32> to vector<64x64xf32>
    %88 = arith.subf %84, %87 : vector<64x64xf32>
    %89 = math.exp %88 : vector<64x64xf32>
    %cst_27 = arith.constant dense<0.000000e+00> : vector<64xf32>
    %90 = vector.multi_reduction <add>, %89, %cst_27 [1] : vector<64x64xf32> to vector<64xf32>
    %91 = vector.shape_cast %90 : vector<64xf32> to vector<64x1xf32>
    %92 = tpu.reciprocal %91 {approx = true} : vector<64x1xf32> -> vector<64x1xf32>
    %93 = vector.broadcast %92 : vector<64x1xf32> to vector<64x64xf32>
    %94 = arith.mulf %89, %93 : vector<64x64xf32>
    %95 = arith.truncf %94 : vector<64x64xf32> to vector<64x64xbf16>
    %cst_28 = arith.constant dense<0.000000e+00> : vector<64x16xf32>
    %96 = tpu.matmul %95, %81, %cst_28 {dimension_numbers = #tpu.dot_dimension_numbers<[1], [0], [0], [1], [0, 0, 1, 1], [], []>} : vector<64x64xbf16>, vector<64x16xbf16>, vector<64x16xf32> -> vector<64x16xf32>
    %97 = arith.truncf %96 : vector<64x16xf32> to vector<64x16xbf16>
    %c0_29 = arith.constant 0 : index
    %c48 = arith.constant 48 : index
    %98 = vector.load %arg8[%c0_29, %c48] : memref<64x128xbf16, #tpu.memory_space<vmem>>, vector<64x16xbf16>
    tpu.vector_store %arg8[%c0_29, %c48], %97 {strides = array<i32>} : memref<64x128xbf16, #tpu.memory_space<vmem>>, vector<64x16xbf16>,
    %99 = vector.extract_strided_slice %9 {offsets = [0, 64], sizes = [64, 16], strides = [1, 1]} : vector<64x128xbf16> to vector<64x16xbf16>
    %100 = vector.extract_strided_slice %11 {offsets = [0, 64], sizes = [64, 16], strides = [1, 1]} : vector<64x128xbf16> to vector<64x16xbf16>
    %101 = vector.extract_strided_slice %13 {offsets = [0, 64], sizes = [64, 16], strides = [1, 1]} : vector<64x128xbf16> to vector<64x16xbf16>
    "tpu.trace_start"() <{level = 10 : i32, message = "td,sd->ts"}> : () -> ()
    %cst_30 = arith.constant dense<0.000000e+00> : vector<64x64xf32>
    %102 = tpu.matmul %99, %100, %cst_30 {dimension_numbers = #tpu.dot_dimension_numbers<[1], [1], [0], [0], [0, 0, 1, 0], [], []>} : vector<64x16xbf16>, vector<64x16xbf16>, vector<64x64xf32> -> vector<64x64xf32>
    %cst_31 = arith.constant 0xFF800000 : f32
    "tpu.trace_stop"() : () -> ()
    %103 = vector.broadcast %cst_31 : f32 to vector<64x64xf32>
    %104 = arith.select %18, %102, %103 : vector<64x64xi1>, vector<64x64xf32>
    %cst_32 = arith.constant dense<0xFF800000> : vector<64xf32>
    %105 = vector.multi_reduction <maximumf>, %104, %cst_32 [1] : vector<64x64xf32> to vector<64xf32>
    %106 = vector.shape_cast %105 : vector<64xf32> to vector<64x1xf32>
    %107 = vector.broadcast %106 : vector<64x1xf32> to vector<64x64xf32>
    %108 = arith.subf %104, %107 : vector<64x64xf32>
    %109 = math.exp %108 : vector<64x64xf32>
    %cst_33 = arith.constant dense<0.000000e+00> : vector<64xf32>
    %110 = vector.multi_reduction <add>, %109, %cst_33 [1] : vector<64x64xf32> to vector<64xf32>
    %111 = vector.shape_cast %110 : vector<64xf32> to vector<64x1xf32>
    %112 = tpu.reciprocal %111 {approx = true} : vector<64x1xf32> -> vector<64x1xf32>
    %113 = vector.broadcast %112 : vector<64x1xf32> to vector<64x64xf32>
    %114 = arith.mulf %109, %113 : vector<64x64xf32>
    %115 = arith.truncf %114 : vector<64x64xf32> to vector<64x64xbf16>
    %cst_34 = arith.constant dense<0.000000e+00> : vector<64x16xf32>
    %116 = tpu.matmul %115, %101, %cst_34 {dimension_numbers = #tpu.dot_dimension_numbers<[1], [0], [0], [1], [0, 0, 1, 1], [], []>} : vector<64x64xbf16>, vector<64x16xbf16>, vector<64x16xf32> -> vector<64x16xf32>
    %117 = arith.truncf %116 : vector<64x16xf32> to vector<64x16xbf16>
    %c0_35 = arith.constant 0 : index
    %c64 = arith.constant 64 : index
    %118 = vector.load %arg8[%c0_35, %c64] : memref<64x128xbf16, #tpu.memory_space<vmem>>, vector<64x16xbf16>
    tpu.vector_store %arg8[%c0_35, %c64], %117 {strides = array<i32>} : memref<64x128xbf16, #tpu.memory_space<vmem>>, vector<64x16xbf16>,
    %119 = vector.extract_strided_slice %9 {offsets = [0, 80], sizes = [64, 16], strides = [1, 1]} : vector<64x128xbf16> to vector<64x16xbf16>
    %120 = vector.extract_strided_slice %11 {offsets = [0, 80], sizes = [64, 16], strides = [1, 1]} : vector<64x128xbf16> to vector<64x16xbf16>
    %121 = vector.extract_strided_slice %13 {offsets = [0, 80], sizes = [64, 16], strides = [1, 1]} : vector<64x128xbf16> to vector<64x16xbf16>
    "tpu.trace_start"() <{level = 10 : i32, message = "td,sd->ts"}> : () -> ()
    %cst_36 = arith.constant dense<0.000000e+00> : vector<64x64xf32>
    %122 = tpu.matmul %119, %120, %cst_36 {dimension_numbers = #tpu.dot_dimension_numbers<[1], [1], [0], [0], [0, 0, 1, 0], [], []>} : vector<64x16xbf16>, vector<64x16xbf16>, vector<64x64xf32> -> vector<64x64xf32>
    %cst_37 = arith.constant 0xFF800000 : f32
    "tpu.trace_stop"() : () -> ()
    %123 = vector.broadcast %cst_37 : f32 to vector<64x64xf32>
    %124 = arith.select %18, %122, %123 : vector<64x64xi1>, vector<64x64xf32>
    %cst_38 = arith.constant dense<0xFF800000> : vector<64xf32>
    %125 = vector.multi_reduction <maximumf>, %124, %cst_38 [1] : vector<64x64xf32> to vector<64xf32>
    %126 = vector.shape_cast %125 : vector<64xf32> to vector<64x1xf32>
    %127 = vector.broadcast %126 : vector<64x1xf32> to vector<64x64xf32>
    %128 = arith.subf %124, %127 : vector<64x64xf32>
    %129 = math.exp %128 : vector<64x64xf32>
    %cst_39 = arith.constant dense<0.000000e+00> : vector<64xf32>
    %130 = vector.multi_reduction <add>, %129, %cst_39 [1] : vector<64x64xf32> to vector<64xf32>
    %131 = vector.shape_cast %130 : vector<64xf32> to vector<64x1xf32>
    %132 = tpu.reciprocal %131 {approx = true} : vector<64x1xf32> -> vector<64x1xf32>
    %133 = vector.broadcast %132 : vector<64x1xf32> to vector<64x64xf32>
    %134 = arith.mulf %129, %133 : vector<64x64xf32>
    %135 = arith.truncf %134 : vector<64x64xf32> to vector<64x64xbf16>
    %cst_40 = arith.constant dense<0.000000e+00> : vector<64x16xf32>
    %136 = tpu.matmul %135, %121, %cst_40 {dimension_numbers = #tpu.dot_dimension_numbers<[1], [0], [0], [1], [0, 0, 1, 1], [], []>} : vector<64x64xbf16>, vector<64x16xbf16>, vector<64x16xf32> -> vector<64x16xf32>
    %137 = arith.truncf %136 : vector<64x16xf32> to vector<64x16xbf16>
    %c0_41 = arith.constant 0 : index
    %c80 = arith.constant 80 : index
    %138 = vector.load %arg8[%c0_41, %c80] : memref<64x128xbf16, #tpu.memory_space<vmem>>, vector<64x16xbf16>
    tpu.vector_store %arg8[%c0_41, %c80], %137 {strides = array<i32>} : memref<64x128xbf16, #tpu.memory_space<vmem>>, vector<64x16xbf16>,
    %139 = vector.extract_strided_slice %9 {offsets = [0, 96], sizes = [64, 16], strides = [1, 1]} : vector<64x128xbf16> to vector<64x16xbf16>
    %140 = vector.extract_strided_slice %11 {offsets = [0, 96], sizes = [64, 16], strides = [1, 1]} : vector<64x128xbf16> to vector<64x16xbf16>
    %141 = vector.extract_strided_slice %13 {offsets = [0, 96], sizes = [64, 16], strides = [1, 1]} : vector<64x128xbf16> to vector<64x16xbf16>
    "tpu.trace_start"() <{level = 10 : i32, message = "td,sd->ts"}> : () -> ()
    %cst_42 = arith.constant dense<0.000000e+00> : vector<64x64xf32>
    %142 = tpu.matmul %139, %140, %cst_42 {dimension_numbers = #tpu.dot_dimension_numbers<[1], [1], [0], [0], [0, 0, 1, 0], [], []>} : vector<64x16xbf16>, vector<64x16xbf16>, vector<64x64xf32> -> vector<64x64xf32>
    %cst_43 = arith.constant 0xFF800000 : f32
    "tpu.trace_stop"() : () -> ()
    %143 = vector.broadcast %cst_43 : f32 to vector<64x64xf32>
    %144 = arith.select %18, %142, %143 : vector<64x64xi1>, vector<64x64xf32>
    %cst_44 = arith.constant dense<0xFF800000> : vector<64xf32>
    %145 = vector.multi_reduction <maximumf>, %144, %cst_44 [1] : vector<64x64xf32> to vector<64xf32>
    %146 = vector.shape_cast %145 : vector<64xf32> to vector<64x1xf32>
    %147 = vector.broadcast %146 : vector<64x1xf32> to vector<64x64xf32>
    %148 = arith.subf %144, %147 : vector<64x64xf32>
    %149 = math.exp %148 : vector<64x64xf32>
    %cst_45 = arith.constant dense<0.000000e+00> : vector<64xf32>
    %150 = vector.multi_reduction <add>, %149, %cst_45 [1] : vector<64x64xf32> to vector<64xf32>
    %151 = vector.shape_cast %150 : vector<64xf32> to vector<64x1xf32>
    %152 = tpu.reciprocal %151 {approx = true} : vector<64x1xf32> -> vector<64x1xf32>
    %153 = vector.broadcast %152 : vector<64x1xf32> to vector<64x64xf32>
    %154 = arith.mulf %149, %153 : vector<64x64xf32>
    %155 = arith.truncf %154 : vector<64x64xf32> to vector<64x64xbf16>
    %cst_46 = arith.constant dense<0.000000e+00> : vector<64x16xf32>
    %156 = tpu.matmul %155, %141, %cst_46 {dimension_numbers = #tpu.dot_dimension_numbers<[1], [0], [0], [1], [0, 0, 1, 1], [], []>} : vector<64x64xbf16>, vector<64x16xbf16>, vector<64x16xf32> -> vector<64x16xf32>
    %157 = arith.truncf %156 : vector<64x16xf32> to vector<64x16xbf16>
    %c0_47 = arith.constant 0 : index
    %c96 = arith.constant 96 : index
    %158 = vector.load %arg8[%c0_47, %c96] : memref<64x128xbf16, #tpu.memory_space<vmem>>, vector<64x16xbf16>
    tpu.vector_store %arg8[%c0_47, %c96], %157 {strides = array<i32>} : memref<64x128xbf16, #tpu.memory_space<vmem>>, vector<64x16xbf16>,
    %159 = vector.extract_strided_slice %9 {offsets = [0, 112], sizes = [64, 16], strides = [1, 1]} : vector<64x128xbf16> to vector<64x16xbf16>
    %160 = vector.extract_strided_slice %11 {offsets = [0, 112], sizes = [64, 16], strides = [1, 1]} : vector<64x128xbf16> to vector<64x16xbf16>
    %161 = vector.extract_strided_slice %13 {offsets = [0, 112], sizes = [64, 16], strides = [1, 1]} : vector<64x128xbf16> to vector<64x16xbf16>
    "tpu.trace_start"() <{level = 10 : i32, message = "td,sd->ts"}> : () -> ()
    %cst_48 = arith.constant dense<0.000000e+00> : vector<64x64xf32>
    %162 = tpu.matmul %159, %160, %cst_48 {dimension_numbers = #tpu.dot_dimension_numbers<[1], [1], [0], [0], [0, 0, 1, 0], [], []>} : vector<64x16xbf16>, vector<64x16xbf16>, vector<64x64xf32> -> vector<64x64xf32>
    %cst_49 = arith.constant 0xFF800000 : f32
    "tpu.trace_stop"() : () -> ()
    %163 = vector.broadcast %cst_49 : f32 to vector<64x64xf32>
    %164 = arith.select %18, %162, %163 : vector<64x64xi1>, vector<64x64xf32>
    %cst_50 = arith.constant dense<0xFF800000> : vector<64xf32>
    %165 = vector.multi_reduction <maximumf>, %164, %cst_50 [1] : vector<64x64xf32> to vector<64xf32>
    %166 = vector.shape_cast %165 : vector<64xf32> to vector<64x1xf32>
    %167 = vector.broadcast %166 : vector<64x1xf32> to vector<64x64xf32>
    %168 = arith.subf %164, %167 : vector<64x64xf32>
    %169 = math.exp %168 : vector<64x64xf32>
    %cst_51 = arith.constant dense<0.000000e+00> : vector<64xf32>
    %170 = vector.multi_reduction <add>, %169, %cst_51 [1] : vector<64x64xf32> to vector<64xf32>
    %171 = vector.shape_cast %170 : vector<64xf32> to vector<64x1xf32>
    %172 = tpu.reciprocal %171 {approx = true} : vector<64x1xf32> -> vector<64x1xf32>
    %173 = vector.broadcast %172 : vector<64x1xf32> to vector<64x64xf32>
    %174 = arith.mulf %169, %173 : vector<64x64xf32>
    %175 = arith.truncf %174 : vector<64x64xf32> to vector<64x64xbf16>
    %cst_52 = arith.constant dense<0.000000e+00> : vector<64x16xf32>
    %176 = tpu.matmul %175, %161, %cst_52 {dimension_numbers = #tpu.dot_dimension_numbers<[1], [0], [0], [1], [0, 0, 1, 1], [], []>} : vector<64x64xbf16>, vector<64x16xbf16>, vector<64x16xf32> -> vector<64x16xf32>
    %177 = arith.truncf %176 : vector<64x16xf32> to vector<64x16xbf16>
    %c0_53 = arith.constant 0 : index
    %c112 = arith.constant 112 : index
    %178 = vector.load %arg8[%c0_53, %c112] : memref<64x128xbf16, #tpu.memory_space<vmem>>, vector<64x16xbf16>
    tpu.vector_store %arg8[%c0_53, %c112], %177 {strides = array<i32>} : memref<64x128xbf16, #tpu.memory_space<vmem>>, vector<64x16xbf16>,
    %c0_54 = arith.constant 0 : index
    %c0_55 = arith.constant 0 : index
    %c0_56 = arith.constant 0 : index
    %179 = vector.load %arg6[%c0_54, %c0_55, %c0_56] : memref<1x64x512xf32, #tpu.memory_space<vmem>>, vector<1x64x512xf32>
    %180 = vector.shape_cast %179 : vector<1x64x512xf32> to vector<64x512xf32>
    %c0_57 = arith.constant 0 : index
    %c0_58 = arith.constant 0 : index
    %181 = vector.load %arg8[%c0_57, %c0_58] : memref<64x128xbf16, #tpu.memory_space<vmem>>, vector<64x128xbf16>
    %182 = arith.index_cast %arg1 : i32 to index
    %c0_59 = arith.constant 0 : index
    %c0_60 = arith.constant 0 : index
    %183 = vector.load %arg4[%182, %c0_59, %c0_60] : memref<4x128x512xbf16, #tpu.memory_space<vmem>>, vector<1x128x512xbf16>
    %184 = vector.shape_cast %183 : vector<1x128x512xbf16> to vector<128x512xbf16>
    %cst_61 = arith.constant dense<0.000000e+00> : vector<64x512xf32>
    %185 = tpu.matmul %181, %184, %cst_61 {dimension_numbers = #tpu.dot_dimension_numbers<[1], [0], [0], [1], [0, 0, 1, 1], [], []>} : vector<64x128xbf16>, vector<128x512xbf16>, vector<64x512xf32> -> vector<64x512xf32>
    %186 = arith.addf %180, %185 : vector<64x512xf32>
    %c0_62 = arith.constant 0 : index
    %c0_63 = arith.constant 0 : index
    %c0_64 = arith.constant 0 : index
    %187 = vector.load %arg6[%c0_62, %c0_63, %c0_64] : memref<1x64x512xf32, #tpu.memory_space<vmem>>, vector<1x64x512xf32>
    %188 = vector.shape_cast %187 : vector<1x64x512xf32> to vector<64x512xf32>
    %189 = vector.shape_cast %186 : vector<64x512xf32> to vector<1x64x512xf32>
    tpu.vector_store %arg6[%c0_62, %c0_63, %c0_64], %189 {strides = array<i32>} : memref<1x64x512xf32, #tpu.memory_space<vmem>>, vector<1x64x512xf32>,
    %c3_i32 = arith.constant 3 : i32
    %190 = arith.cmpi eq, %arg1, %c3_i32 : i32
    %191 = arith.extui %190 : i1 to i32
    %c0_i32_65 = arith.constant 0 : i32
    %192 = arith.cmpi ne, %191, %c0_i32_65 : i32
    scf.if %192 {
      %c0_66 = arith.constant 0 : index
      %c0_67 = arith.constant 0 : index
      %c0_68 = arith.constant 0 : index
      %193 = vector.load %arg6[%c0_66, %c0_67, %c0_68] : memref<1x64x512xf32, #tpu.memory_space<vmem>>, vector<1x64x512xf32>
      %194 = vector.shape_cast %193 : vector<1x64x512xf32> to vector<64x512xf32>
      %c0_69 = arith.constant 0 : index
      %c0_70 = arith.constant 0 : index
      %195 = vector.load %arg5[%c0_69, %c0_70] : memref<1x512xf32, #tpu.memory_space<vmem>>, vector<1x512xf32>
      %196 = vector.broadcast %195 : vector<1x512xf32> to vector<64x512xf32>
      %197 = arith.addf %194, %196 : vector<64x512xf32>
      %c0_71 = arith.constant 0 : index
      %c0_72 = arith.constant 0 : index
      %c0_73 = arith.constant 0 : index
      %198 = vector.load %arg6[%c0_71, %c0_72, %c0_73] : memref<1x64x512xf32, #tpu.memory_space<vmem>>, vector<1x64x512xf32>
      %199 = vector.shape_cast %198 : vector<1x64x512xf32> to vector<64x512xf32>
      %200 = vector.shape_cast %197 : vector<64x512xf32> to vector<1x64x512xf32>
      tpu.vector_store %arg6[%c0_71, %c0_72, %c0_73], %200 {strides = array<i32>} : memref<1x64x512xf32, #tpu.memory_space<vmem>>, vector<1x64x512xf32>,
    } else {
    }
    return
  }
  func.func @transform_0(%arg0: i32, %arg1: i32) -> (i32, i32, i32) {
    %c0_i32 = arith.constant 0 : i32
    %c0_i32_0 = arith.constant 0 : i32
    %c0_i32_1 = arith.constant 0 : i32
    return %arg0, %c0_i32, %c0_i32_0 : i32, i32, i32
  }
  func.func @transform_1(%arg0: i32, %arg1: i32) -> (i32, i32, i32) {
    %c0_i32 = arith.constant 0 : i32
    %c0_i32_0 = arith.constant 0 : i32
    %c0_i32_1 = arith.constant 0 : i32
    %c0_i32_2 = arith.constant 0 : i32
    return %c0_i32, %c0_i32_0, %c0_i32_1 : i32, i32, i32
  }
  func.func @transform_2(%arg0: i32, %arg1: i32) -> (i32, i32, i32) {
    %c0_i32 = arith.constant 0 : i32
    %c0_i32_0 = arith.constant 0 : i32
    %c0_i32_1 = arith.constant 0 : i32
    %c0_i32_2 = arith.constant 0 : i32
    return %c0_i32, %c0_i32_0, %c0_i32_1 : i32, i32, i32
  }
  func.func @transform_3(%arg0: i32, %arg1: i32) -> (i32, i32) {
    %c0_i32 = arith.constant 0 : i32
    %c0_i32_0 = arith.constant 0 : i32
    %c0_i32_1 = arith.constant 0 : i32
    return %c0_i32, %c0_i32_0 : i32, i32
  }
  func.func @transform_4(%arg0: i32, %arg1: i32) -> (i32, i32, i32) {
    %c0_i32 = arith.constant 0 : i32
    %c0_i32_0 = arith.constant 0 : i32
    %c0_i32_1 = arith.constant 0 : i32
    return %arg0, %c0_i32, %c0_i32_0 : i32, i32, i32
  }
}

</mosaic_0001>

<llo_original>
// kernel: multihead_forward.1
$region0: #{multihead_forward.1}
  #allocation0 [shape = 'u32[]', space=smem, size = 0x4, offset = 0x4, fixed_abs, tag = 'smem constant byte address 0x4 - core index']
  #allocation1 [shape = 'u32[144,128]{1,0:T(1,128)}', space=vmem, size = 0x12000, scoped, tag = 'internal scratch']
  #allocation2 [shape = 'bf16[64,512]{1,0:T(16,128)(2,1)}', space=vmem, size = 0x10000, scoped, tag = 'scratch operand']
  #allocation3 [shape = 'bf16[64,128]{1,0:T(16,128)(2,1)}', space=vmem, size = 0x4000, scoped, tag = 'scratch operand']
  %s0 = inlined_call_operand.hbm [shape: f32[2,64,512], index: 0, kind: input, shape index: {}]
  %s1 = inlined_call_operand.hbm [shape: bf16[4,512,384], index: 1, kind: input, shape index: {}]
  %s2 = inlined_call_operand.hbm [shape: bf16[4,128,512], index: 2, kind: input, shape index: {}]
  %s3 = inlined_call_operand.hbm [shape: f32[1,512], index: 3, kind: input, shape index: {}]
  %s4 = inlined_call_operand.hbm [shape: f32[2,64,512], index: 4, kind: output, shape index: {}]
  %s5 = sld [smem:[#allocation0]]
  $region73: #{multihead_forward.1} parent=0
    _
  %s7 = ssub.s32 1, %s5
  %s8 = scalar_select 0, %s7, %s5
  $region1: #{multihead_forward.1} parent=0
    #allocation4 [shape = 'u8[262144]{0}', space=vmem, size = 0x40000, scoped, tag = 'input window, operand 0']
    #allocation5 [shape = 's32[2]{0}', space=sflag, size = 0x8, scoped, tag = 'scoped memory for multihead_forward.1']
    #allocation6 [shape = 's32[2]{0}', space=sflag, size = 0x8, scoped, tag = 'scoped memory for multihead_forward.1']
    #allocation7 [shape = 'u8[1572864]{0}', space=vmem, size = 0x180000, scoped, tag = 'input window, operand 1, single buffered']
    #allocation8 [shape = 's32[1]{0}', space=sflag, size = 0x4, scoped, tag = 'scoped memory for multihead_forward.1']
    #allocation9 [shape = 'u8[524288]{0}', space=vmem, size = 0x80000, scoped, tag = 'input window, operand 2, single buffered']
    #allocation10 [shape = 'u8[2048]{0}', space=vmem, size = 0x800, scoped, tag = 'input window, operand 3, single buffered']
    #allocation11 [shape = 's32[1]{0}', space=sflag, size = 0x4, scoped, tag = 'scoped memory for multihead_forward.1']
    #allocation12 [shape = 'u8[262144]{0}', space=vmem, size = 0x40000, scoped, tag = 'output window, operand 0']
    %9 = vsyncpa [#allocation5], 0
    %s10 = scalar_lea.sflag [#allocation5], 1
    %11 = vsyncpa %s10, 0
    %12 = vsyncpa [#allocation8], 0
    %13 = vsyncpa [#allocation11], 0
    %14 = vsyncpa [#allocation6], 0
    %s15 = scalar_lea.sflag [#allocation6], 1
    %16 = vsyncpa %s15, 0
    loop: start=0, step=1, limit=10
    $region2: #{multihead_forward.1} parent=1 // loop_pre_header
      _
    $region3: #{multihead_forward.1} parent=1 // loop_header
      %s18 = sphi 0, %s22
      %p19 = scmp.ge.s32.totalorder %s18, 10
      %s25 = sphi 0, %s37
      %s26 = sphi 0, %s33
      %s27 = sphi 0, %s25
      %s28 = sphi 0, %s26
      %s29 = sphi 0, %s27
      %s30 = sphi 0, %s28
      %s40 = sphi 0, %s42
      %s43 = sphi 0, %s40
      %s44 = sphi 0, %s43
      %s60 = sphi 0, %s44
      %s64 = sphi 0, %s64
      %s66 = sphi 0, %s64
      %s67 = sphi 0, %s66
      %s81 = sphi 0, %s67
      %s85 = sphi 0, %s85
      %s87 = sphi 0, %s85
      %s88 = sphi 0, %s87
      %s102 = sphi 0, %s88
      %s106 = sphi 0, %s106
      %s108 = sphi 0, %s106
      %s109 = sphi 0, %s108
      %s123 = sphi 0, %s109
      %s129 = sphi 0, %s131
      %s132 = sphi 0, %s129
      %s133 = sphi 0, %s132
      %s149 = sphi 0, %s133
    $region4: #{multihead_forward.1} parent=1 // loop_header_branch
      %21 = sbr.rel (%p19) target = $region8
    $region5: #{multihead_forward.1} parent=1 // loop_body
      %s23 = ssub.s32 %s18, 1
      %s24 = ssub.s32 %s18, 2
      %s31 = sadd.s32 1, %s26
      %p32 = scmp.ge.s32.totalorder %s31, 4
      %s33 = scalar_select %p32, 0, %s31
      %s34 = sadd.s32 1, %s25
      %s35 = scalar_select %p32, %s34, %s25
      %p36 = scmp.ge.s32.totalorder %s35, 2
      %s37 = scalar_select %p36, 0, %s35
      %s38 = ssub.s32 %s25, %s37
      %p39 = scmp.eq.s32.totalorder %s38, 0
      %s41 = sadd.s32 %s40, 1
      %s42 = scalar_select %p39, %s40, %s41
      %p45 = pneg %p39
      %p46 = scmp.eq.s32.totalorder %s18, 7
      %p47 = por %p45, %p46
      %p48 = scmp.ne.s32.totalorder %s40, %s43
      %p49 = scmp.eq.s32.totalorder %s18, 0
      %p50 = por %p48, %p49
      %p51 = scmp.ne.s32.totalorder %s40, %s43
      %p52 = scmp.eq.s32.totalorder %s23, 7
      %p53 = por %p51, %p52
      %p54 = scmp.ne.s32.totalorder %s43, %s44
      %p55 = scmp.eq.s32.totalorder %s23, 0
      %p56 = por %p54, %p55
      %p57 = scmp.ne.s32.totalorder %s43, %s44
      %p58 = scmp.eq.s32.totalorder %s24, 7
      %p59 = por %p57, %p58
      %p61 = scmp.ne.s32.totalorder %s44, %s60
      %p62 = scmp.eq.s32.totalorder %s24, 0
      %p63 = por %p61, %p62
      %s65 = sadd.s32 %s64, 1
      %p68 = scmp.eq.s32.totalorder %s18, 7
      %p69 = scmp.ne.s32.totalorder %s64, %s66
      %p70 = scmp.eq.s32.totalorder %s18, 0
      %p71 = por %p69, %p70
      %p72 = scmp.ne.s32.totalorder %s64, %s66
      %p73 = scmp.eq.s32.totalorder %s23, 7
      %p74 = por %p72, %p73
      %p75 = scmp.ne.s32.totalorder %s66, %s67
      %p76 = scmp.eq.s32.totalorder %s23, 0
      %p77 = por %p75, %p76
      %p78 = scmp.ne.s32.totalorder %s66, %s67
      %p79 = scmp.eq.s32.totalorder %s24, 7
      %p80 = por %p78, %p79
      %p82 = scmp.ne.s32.totalorder %s67, %s81
      %p83 = scmp.eq.s32.totalorder %s24, 0
      %p84 = por %p82, %p83
      %s86 = sadd.s32 %s85, 1
      %p89 = scmp.eq.s32.totalorder %s18, 7
      %p90 = scmp.ne.s32.totalorder %s85, %s87
      %p91 = scmp.eq.s32.totalorder %s18, 0
      %p92 = por %p90, %p91
      %p93 = scmp.ne.s32.totalorder %s85, %s87
      %p94 = scmp.eq.s32.totalorder %s23, 7
      %p95 = por %p93, %p94
      %p96 = scmp.ne.s32.totalorder %s87, %s88
      %p97 = scmp.eq.s32.totalorder %s23, 0
      %p98 = por %p96, %p97
      %p99 = scmp.ne.s32.totalorder %s87, %s88
      %p100 = scmp.eq.s32.totalorder %s24, 7
      %p101 = por %p99, %p100
      %p103 = scmp.ne.s32.totalorder %s88, %s102
      %p104 = scmp.eq.s32.totalorder %s24, 0
      %p105 = por %p103, %p104
      %s107 = sadd.s32 %s106, 1
      %p110 = scmp.eq.s32.totalorder %s18, 7
      %p111 = scmp.ne.s32.totalorder %s106, %s108
      %p112 = scmp.eq.s32.totalorder %s18, 0
      %p113 = por %p111, %p112
      %p114 = scmp.ne.s32.totalorder %s106, %s108
      %p115 = scmp.eq.s32.totalorder %s23, 7
      %p116 = por %p114, %p115
      %p117 = scmp.ne.s32.totalorder %s108, %s109
      %p118 = scmp.eq.s32.totalorder %s23, 0
      %p119 = por %p117, %p118
      %p120 = scmp.ne.s32.totalorder %s108, %s109
      %p121 = scmp.eq.s32.totalorder %s24, 7
      %p122 = por %p120, %p121
      %p124 = scmp.ne.s32.totalorder %s109, %s123
      %p125 = scmp.eq.s32.totalorder %s24, 0
      %p126 = por %p124, %p125
      %s127 = ssub.s32 %s25, %s37
      %p128 = scmp.eq.s32.totalorder %s127, 0
      %s130 = sadd.s32 %s129, 1
      %s131 = scalar_select %p128, %s129, %s130
      %p134 = pneg %p128
      %p135 = scmp.eq.s32.totalorder %s18, 7
      %p136 = por %p134, %p135
      %p137 = scmp.ne.s32.totalorder %s129, %s132
      %p138 = scmp.eq.s32.totalorder %s18, 0
      %p139 = por %p137, %p138
      %p140 = scmp.ne.s32.totalorder %s129, %s132
      %p141 = scmp.eq.s32.totalorder %s23, 7
      %p142 = por %p140, %p141
      %p143 = scmp.ne.s32.totalorder %s132, %s133
      %p144 = scmp.eq.s32.totalorder %s23, 0
      %p145 = por %p143, %p144
      %p146 = scmp.ne.s32.totalorder %s132, %s133
      %p147 = scmp.eq.s32.totalorder %s24, 7
      %p148 = por %p146, %p147
      %p150 = scmp.ne.s32.totalorder %s133, %s149
      %p151 = scmp.eq.s32.totalorder %s24, 0
      %p152 = por %p150, %p151
      %p153 = scmp.le.s32.totalorder 1, %s18
      %p154 = scmp.lt.s32.totalorder %s18, 9
      %p155 = pnand %p153, %p154
      %p156 = pneg %p155
      // Predicated region
      $region9: #{multihead_forward.1} parent=5 // pred_check
        _
      $region10: #{multihead_forward.1} parent=5 // pred_check_branch
        %158 = sbr.rel (%p155) target = $region12
      $region11: #{multihead_forward.1} parent=5 // pred_region
        %s159 = ssub.s32 %s18, 1
        // Predicated region
        $region13: #{multihead_forward.1} parent=11 // pred_check
          %p160 = pneg %p77
        $region14: #{multihead_forward.1} parent=11 // pred_check_branch
          %162 = sbr.rel (%p160) target = $region16
        $region15: #{multihead_forward.1} parent=11 // pred_region
          %s164 = ssub.s32 49152, 49152
          %165 = vsyncadd [#allocation8], %s164
          %s166 = sshll.u32 [#allocation7], 4
          %s167 = int_to_ptr.vmem [resolvable:$true] %s166
          %172 = dma.hbm_to_vmem [thread:$0]  %s1, 49152, %s167, [#allocation8], 192, 192, 12
        $region16: #{multihead_forward.1} parent=11 // pred_fallthru
          _
        // Predicated region
        $region17: #{multihead_forward.1} parent=11 // pred_check
          %p173 = pneg %p98
        $region18: #{multihead_forward.1} parent=11 // pred_check_branch
          %175 = sbr.rel (%p173) target = $region20
        $region19: #{multihead_forward.1} parent=11 // pred_region
          %s177 = ssub.s32 16384, 16384
          %178 = vsyncadd [#allocation8], %s177
          %s179 = sshll.u32 [#allocation9], 4
          %s180 = int_to_ptr.vmem [resolvable:$true] %s179
          %185 = dma.hbm_to_vmem [thread:$0]  %s2, 16384, %s180, [#allocation8], 256, 256, 16
        $region20: #{multihead_forward.1} parent=11 // pred_fallthru
          _
        // Predicated region
        $region21: #{multihead_forward.1} parent=11 // pred_check
          %p186 = pneg %p119
        $region22: #{multihead_forward.1} parent=11 // pred_check_branch
          %188 = sbr.rel (%p186) target = $region24
        $region23: #{multihead_forward.1} parent=11 // pred_region
          %s190 = ssub.s32 64, 64
          %191 = vsyncadd [#allocation11], %s190
          %s193 = sshll.u32 [#allocation10], 4
          %s194 = int_to_ptr.vmem [resolvable:$true] %s193
          %196 = dma.hbm_to_vmem [thread:$0]  %s3, 64, %s194, [#allocation11]
        $region24: #{multihead_forward.1} parent=11 // pred_fallthru
          _
      $region12: #{multihead_forward.1} parent=5 // pred_fallthru
        _
      %p197 = scmp.lt.s32.totalorder %s18, 8
      // Predicated region
      $region25: #{multihead_forward.1} parent=5 // pred_check
        %p198 = pneg %p197
      $region26: #{multihead_forward.1} parent=5 // pred_check_branch
        %200 = sbr.rel (%p198) target = $region28
      $region27: #{multihead_forward.1} parent=5 // pred_region
        // Predicated region
        $region29: #{multihead_forward.1} parent=27 // pred_check
          %p201 = pneg %p50
        $region30: #{multihead_forward.1} parent=27 // pred_check_branch
          %203 = sbr.rel (%p201) target = $region32
        $region31: #{multihead_forward.1} parent=27 // pred_region
          %s204 = sand.u32 %s40, 1
          %s205 = scalar_lea.sflag [#allocation5], %s204
          %s206 = sand.u32 %s40, 1
          %s207 = smul.addr %s206, 256
          %s208 = scalar_lea.vmem [#allocation4], %s207
          %s210 = ssub.s32 4096, 4096
          %211 = vsyncadd %s205, %s210
          %s212 = smul.addr %s25, 32
          %s213 = smul.addr %s212, 128
          %s214 = scalar_lea.hbm %s0, %s213
          %s215 = sshll.u32 %s208, 4
          %s216 = int_to_ptr.vmem [resolvable:$true] %s215
          %221 = dma.hbm_to_vmem [thread:$0]  %s214, 4096, %s216, %s205, 512, 512, 32
        $region32: #{multihead_forward.1} parent=27 // pred_fallthru
          _
      $region28: #{multihead_forward.1} parent=5 // pred_fallthru
        _
      %p222 = scmp.le.s32.totalorder 1, %s18
      %p223 = scmp.lt.s32.totalorder %s18, 9
      %p224 = pnand %p222, %p223
      %p225 = pneg %p224
      // Predicated region
      $region33: #{multihead_forward.1} parent=5 // pred_check
        _
      $region34: #{multihead_forward.1} parent=5 // pred_check_branch
        %227 = sbr.rel (%p224) target = $region36
      $region35: #{multihead_forward.1} parent=5 // pred_region
        %s228 = ssub.s32 %s18, 1
        %s229 = sand.u32 %s43, 1
        %s230 = scalar_lea.sflag [#allocation5], %s229
        %s231 = sand.u32 %s43, 1
        %s232 = smul.addr %s231, 256
        %s233 = scalar_lea.vmem [#allocation4], %s232
        // Predicated region
        $region37: #{multihead_forward.1} parent=35 // pred_check
          %p234 = pneg %p56
        $region38: #{multihead_forward.1} parent=35 // pred_check_branch
          %236 = sbr.rel (%p234) target = $region40
        $region39: #{multihead_forward.1} parent=35 // pred_region
          %237 = dma.done %s230, 4096
        $region40: #{multihead_forward.1} parent=35 // pred_fallthru
          _
        // Predicated region
        $region41: #{multihead_forward.1} parent=35 // pred_check
          %p238 = pneg %p77
        $region42: #{multihead_forward.1} parent=35 // pred_check_branch
          %240 = sbr.rel (%p238) target = $region44
        $region43: #{multihead_forward.1} parent=35 // pred_region
          %241 = dma.done [#allocation8], 49152
        $region44: #{multihead_forward.1} parent=35 // pred_fallthru
          _
        // Predicated region
        $region45: #{multihead_forward.1} parent=35 // pred_check
          %p242 = pneg %p98
        $region46: #{multihead_forward.1} parent=35 // pred_check_branch
          %244 = sbr.rel (%p242) target = $region48
        $region47: #{multihead_forward.1} parent=35 // pred_region
          %245 = dma.done [#allocation8], 16384
        $region48: #{multihead_forward.1} parent=35 // pred_fallthru
          _
        // Predicated region
        $region49: #{multihead_forward.1} parent=35 // pred_check
          %p246 = pneg %p119
        $region50: #{multihead_forward.1} parent=35 // pred_check_branch
          %248 = sbr.rel (%p246) target = $region52
        $region51: #{multihead_forward.1} parent=35 // pred_region
          %249 = dma.done [#allocation11], 64
        $region52: #{multihead_forward.1} parent=35 // pred_fallthru
          _
        %s250 = sand.u32 %s43, 1
        %s251 = scalar_lea.sflag [#allocation5], %s250
        %s252 = sand.u32 %s43, 1
        %s253 = smul.addr %s252, 256
        %s254 = scalar_lea.vmem [#allocation4], %s253
        %p255 = pneg %p56
        %p256 = pneg %p53
        %p257 = pneg %p77
        %p258 = pneg %p74
        %p259 = pneg %p98
        %p260 = pneg %p95
        %p261 = pneg %p119
        %p262 = pneg %p116
        %p263 = pneg %p145
        %p264 = pneg %p142
        %s265 = sand.u32 %s132, 1
        %s266 = scalar_lea.sflag [#allocation6], %s265
        %s267 = sand.u32 %s132, 1
        %s268 = smul.addr %s267, 256
        %s269 = scalar_lea.vmem [#allocation12], %s268
        %p271 = scmp.eq.s32.totalorder %s28, 0
        // Predicated region
        $region53: #{multihead_forward.1} parent=35 // pred_check
          %p272 = pneg %p271
        $region54: #{multihead_forward.1} parent=35 // pred_check_branch
          %274 = sbr.rel (%p272) target = $region56
        $region55: #{multihead_forward.1} parent=35 // pred_region
          %v275 = vld [vmem:[%s233] sm:$0xff]
          %v276 = vld [vmem:[%s233 + $0x8] sm:$0xff]
          %v277 = vld [vmem:[%s233 + $0x10] sm:$0xff]
          %v278 = vld [vmem:[%s233 + $0x18] sm:$0xff]
          %v279 = vld [vmem:[%s233 + $0x20] sm:$0xff]
          %v280 = vld [vmem:[%s233 + $0x28] sm:$0xff]
          %v281 = vld [vmem:[%s233 + $0x30] sm:$0xff]
          %v282 = vld [vmem:[%s233 + $0x38] sm:$0xff]
          %v283 = vld [vmem:[%s233 + $0x40] sm:$0xff]
          %v284 = vld [vmem:[%s233 + $0x48] sm:$0xff]
          %v285 = vld [vmem:[%s233 + $0x50] sm:$0xff]
          %v286 = vld [vmem:[%s233 + $0x58] sm:$0xff]
          %v287 = vld [vmem:[%s233 + $0x60] sm:$0xff]
          %v288 = vld [vmem:[%s233 + $0x68] sm:$0xff]
          %v289 = vld [vmem:[%s233 + $0x70] sm:$0xff]
          %v290 = vld [vmem:[%s233 + $0x78] sm:$0xff]
          %v291 = vld [vmem:[%s233 + $0x80] sm:$0xff]
          %v292 = vld [vmem:[%s233 + $0x88] sm:$0xff]
          %v293 = vld [vmem:[%s233 + $0x90] sm:$0xff]
          %v294 = vld [vmem:[%s233 + $0x98] sm:$0xff]
          %v295 = vld [vmem:[%s233 + $0xa0] sm:$0xff]
          %v296 = vld [vmem:[%s233 + $0xa8] sm:$0xff]
          %v297 = vld [vmem:[%s233 + $0xb0] sm:$0xff]
          %v298 = vld [vmem:[%s233 + $0xb8] sm:$0xff]
          %v299 = vld [vmem:[%s233 + $0xc0] sm:$0xff]
          %v300 = vld [vmem:[%s233 + $0xc8] sm:$0xff]
          %v301 = vld [vmem:[%s233 + $0xd0] sm:$0xff]
          %v302 = vld [vmem:[%s233 + $0xd8] sm:$0xff]
          %v303 = vld [vmem:[%s233 + $0xe0] sm:$0xff]
          %v304 = vld [vmem:[%s233 + $0xe8] sm:$0xff]
          %v305 = vld [vmem:[%s233 + $0xf0] sm:$0xff]
          %v306 = vld [vmem:[%s233 + $0xf8] sm:$0xff]
          %v307 = vpack.c.bf16 %v279, %v275
          %v308 = vpack.c.bf16 %v280, %v276
          %v309 = vpack.c.bf16 %v281, %v277
          %v310 = vpack.c.bf16 %v282, %v278
          %v311 = vpack.c.bf16 %v287, %v283
          %v312 = vpack.c.bf16 %v288, %v284
          %v313 = vpack.c.bf16 %v289, %v285
          %v314 = vpack.c.bf16 %v290, %v286
          %v315 = vpack.c.bf16 %v295, %v291
          %v316 = vpack.c.bf16 %v296, %v292
          %v317 = vpack.c.bf16 %v297, %v293
          %v318 = vpack.c.bf16 %v298, %v294
          %v319 = vpack.c.bf16 %v303, %v299
          %v320 = vpack.c.bf16 %v304, %v300
          %v321 = vpack.c.bf16 %v305, %v301
          %v322 = vpack.c.bf16 %v306, %v302
          %323 = vst [vmem:[#allocation2] sm:$0xff] %v307
          %324 = vst [vmem:[#allocation2 + $0x8] sm:$0xff] %v308
          %325 = vst [vmem:[#allocation2 + $0x10] sm:$0xff] %v309
          %326 = vst [vmem:[#allocation2 + $0x18] sm:$0xff] %v310
          %327 = vst [vmem:[#allocation2 + $0x20] sm:$0xff] %v311
          %328 = vst [vmem:[#allocation2 + $0x28] sm:$0xff] %v312
          %329 = vst [vmem:[#allocation2 + $0x30] sm:$0xff] %v313
          %330 = vst [vmem:[#allocation2 + $0x38] sm:$0xff] %v314
          %331 = vst [vmem:[#allocation2 + $0x40] sm:$0xff] %v315
          %332 = vst [vmem:[#allocation2 + $0x48] sm:$0xff] %v316
          %333 = vst [vmem:[#allocation2 + $0x50] sm:$0xff] %v317
          %334 = vst [vmem:[#allocation2 + $0x58] sm:$0xff] %v318
          %335 = vst [vmem:[#allocation2 + $0x60] sm:$0xff] %v319
          %336 = vst [vmem:[#allocation2 + $0x68] sm:$0xff] %v320
          %337 = vst [vmem:[#allocation2 + $0x70] sm:$0xff] %v321
          %338 = vst [vmem:[#allocation2 + $0x78] sm:$0xff] %v322
          %339 = vst [vmem:[%s269] sm:$0xff] 0.0
          %340 = vst [vmem:[%s269 + $0x8] sm:$0xff] 0.0
          %341 = vst [vmem:[%s269 + $0x10] sm:$0xff] 0.0
          %342 = vst [vmem:[%s269 + $0x18] sm:$0xff] 0.0
          %343 = vst [vmem:[%s269 + $0x20] sm:$0xff] 0.0
          %344 = vst [vmem:[%s269 + $0x28] sm:$0xff] 0.0
          %345 = vst [vmem:[%s269 + $0x30] sm:$0xff] 0.0
          %346 = vst [vmem:[%s269 + $0x38] sm:$0xff] 0.0
          %347 = vst [vmem:[%s269 + $0x40] sm:$0xff] 0.0
          %348 = vst [vmem:[%s269 + $0x48] sm:$0xff] 0.0
          %349 = vst [vmem:[%s269 + $0x50] sm:$0xff] 0.0
          %350 = vst [vmem:[%s269 + $0x58] sm:$0xff] 0.0
          %351 = vst [vmem:[%s269 + $0x60] sm:$0xff] 0.0
          %352 = vst [vmem:[%s269 + $0x68] sm:$0xff] 0.0
          %353 = vst [vmem:[%s269 + $0x70] sm:$0xff] 0.0
          %354 = vst [vmem:[%s269 + $0x78] sm:$0xff] 0.0
          %355 = vst [vmem:[%s269 + $0x80] sm:$0xff] 0.0
          %356 = vst [vmem:[%s269 + $0x88] sm:$0xff] 0.0
          %357 = vst [vmem:[%s269 + $0x90] sm:$0xff] 0.0
          %358 = vst [vmem:[%s269 + $0x98] sm:$0xff] 0.0
          %359 = vst [vmem:[%s269 + $0xa0] sm:$0xff] 0.0
          %360 = vst [vmem:[%s269 + $0xa8] sm:$0xff] 0.0
          %361 = vst [vmem:[%s269 + $0xb0] sm:$0xff] 0.0
          %362 = vst [vmem:[%s269 + $0xb8] sm:$0xff] 0.0
          %363 = vst [vmem:[%s269 + $0xc0] sm:$0xff] 0.0
          %364 = vst [vmem:[%s269 + $0xc8] sm:$0xff] 0.0
          %365 = vst [vmem:[%s269 + $0xd0] sm:$0xff] 0.0
          %366 = vst [vmem:[%s269 + $0xd8] sm:$0xff] 0.0
          %367 = vst [vmem:[%s269 + $0xe0] sm:$0xff] 0.0
          %368 = vst [vmem:[%s269 + $0xe8] sm:$0xff] 0.0
          %369 = vst [vmem:[%s269 + $0xf0] sm:$0xff] 0.0
          %370 = vst [vmem:[%s269 + $0xf8] sm:$0xff] 0.0
        $region56: #{multihead_forward.1} parent=35 // pred_fallthru
          _
        %v371 = vld [vmem:[#allocation2] sm:$0xff]
        %v372 = vld [vmem:[#allocation2 + $0x8] sm:$0xff]
        %v373 = vld [vmem:[#allocation2 + $0x10] sm:$0xff]
        %v374 = vld [vmem:[#allocation2 + $0x18] sm:$0xff]
        %v375 = vld [vmem:[#allocation2 + $0x20] sm:$0xff]
        %v376 = vld [vmem:[#allocation2 + $0x28] sm:$0xff]
        %v377 = vld [vmem:[#allocation2 + $0x30] sm:$0xff]
        %v378 = vld [vmem:[#allocation2 + $0x38] sm:$0xff]
        %v379 = vld [vmem:[#allocation2 + $0x40] sm:$0xff]
        %v380 = vld [vmem:[#allocation2 + $0x48] sm:$0xff]
        %v381 = vld [vmem:[#allocation2 + $0x50] sm:$0xff]
        %v382 = vld [vmem:[#allocation2 + $0x58] sm:$0xff]
        %v383 = vld [vmem:[#allocation2 + $0x60] sm:$0xff]
        %v384 = vld [vmem:[#allocation2 + $0x68] sm:$0xff]
        %v385 = vld [vmem:[#allocation2 + $0x70] sm:$0xff]
        %v386 = vld [vmem:[#allocation2 + $0x78] sm:$0xff]
        %s387 = smul.u32 %s28, 192
        %s388 = smul.addr %s387, 4
        %s389 = scalar_lea.vmem [#allocation7], %s388
        %v390 = vld [vmem:[%s389] sm:$0xff]
        %v391 = vld [vmem:[%s389 + $0x8] sm:$0xf]
        %v392 = vld [vmem:[%s389 + $0xc] sm:$0xff]
        %v393 = vld [vmem:[%s389 + $0x14] sm:$0xf]
        %v394 = vld [vmem:[%s389 + $0x18] sm:$0xff]
        %v395 = vld [vmem:[%s389 + $0x20] sm:$0xf]
        %v396 = vld [vmem:[%s389 + $0x24] sm:$0xff]
        %v397 = vld [vmem:[%s389 + $0x2c] sm:$0xf]
        %v398 = vld [vmem:[%s389 + $0x30] sm:$0xff]
        %v399 = vld [vmem:[%s389 + $0x38] sm:$0xf]
        %v400 = vld [vmem:[%s389 + $0x3c] sm:$0xff]
        %v401 = vld [vmem:[%s389 + $0x44] sm:$0xf]
        %v402 = vld [vmem:[%s389 + $0x48] sm:$0xff]
        %v403 = vld [vmem:[%s389 + $0x50] sm:$0xf]
        %v404 = vld [vmem:[%s389 + $0x54] sm:$0xff]
        %v405 = vld [vmem:[%s389 + $0x5c] sm:$0xf]
        %v406 = vld [vmem:[%s389 + $0x60] sm:$0xff]
        %v407 = vld [vmem:[%s389 + $0x68] sm:$0xf]
        %v408 = vld [vmem:[%s389 + $0x6c] sm:$0xff]
        %v409 = vld [vmem:[%s389 + $0x74] sm:$0xf]
        %v410 = vld [vmem:[%s389 + $0x78] sm:$0xff]
        %v411 = vld [vmem:[%s389 + $0x80] sm:$0xf]
        %v412 = vld [vmem:[%s389 + $0x84] sm:$0xff]
        %v413 = vld [vmem:[%s389 + $0x8c] sm:$0xf]
        %v414 = vld [vmem:[%s389 + $0x90] sm:$0xff]
        %v415 = vld [vmem:[%s389 + $0x98] sm:$0xf]
        %v416 = vld [vmem:[%s389 + $0x9c] sm:$0xff]
        %v417 = vld [vmem:[%s389 + $0xa4] sm:$0xf]
        %v418 = vld [vmem:[%s389 + $0xa8] sm:$0xff]
        %v419 = vld [vmem:[%s389 + $0xb0] sm:$0xf]
        %v420 = vld [vmem:[%s389 + $0xb4] sm:$0xff]
        %v421 = vld [vmem:[%s389 + $0xbc] sm:$0xf]
        %v422 = vld [vmem:[%s389 + $0xc0] sm:$0xff]
        %v423 = vld [vmem:[%s389 + $0xc8] sm:$0xf]
        %v424 = vld [vmem:[%s389 + $0xcc] sm:$0xff]
        %v425 = vld [vmem:[%s389 + $0xd4] sm:$0xf]
        %v426 = vld [vmem:[%s389 + $0xd8] sm:$0xff]
        %v427 = vld [vmem:[%s389 + $0xe0] sm:$0xf]
        %v428 = vld [vmem:[%s389 + $0xe4] sm:$0xff]
        %v429 = vld [vmem:[%s389 + $0xec] sm:$0xf]
        %v430 = vld [vmem:[%s389 + $0xf0] sm:$0xff]
        %v431 = vld [vmem:[%s389 + $0xf8] sm:$0xf]
        %v432 = vld [vmem:[%s389 + $0xfc] sm:$0xff]
        %v433 = vld [vmem:[%s389 + $0x104] sm:$0xf]
        %v434 = vld [vmem:[%s389 + $0x108] sm:$0xff]
        %v435 = vld [vmem:[%s389 + $0x110] sm:$0xf]
        %v436 = vld [vmem:[%s389 + $0x114] sm:$0xff]
        %v437 = vld [vmem:[%s389 + $0x11c] sm:$0xf]
        %v438 = vld [vmem:[%s389 + $0x120] sm:$0xff]
        %v439 = vld [vmem:[%s389 + $0x128] sm:$0xf]
        %v440 = vld [vmem:[%s389 + $0x12c] sm:$0xff]
        %v441 = vld [vmem:[%s389 + $0x134] sm:$0xf]
        %v442 = vld [vmem:[%s389 + $0x138] sm:$0xff]
        %v443 = vld [vmem:[%s389 + $0x140] sm:$0xf]
        %v444 = vld [vmem:[%s389 + $0x144] sm:$0xff]
        %v445 = vld [vmem:[%s389 + $0x14c] sm:$0xf]
        %v446 = vld [vmem:[%s389 + $0x150] sm:$0xff]
        %v447 = vld [vmem:[%s389 + $0x158] sm:$0xf]
        %v448 = vld [vmem:[%s389 + $0x15c] sm:$0xff]
        %v449 = vld [vmem:[%s389 + $0x164] sm:$0xf]
        %v450 = vld [vmem:[%s389 + $0x168] sm:$0xff]
        %v451 = vld [vmem:[%s389 + $0x170] sm:$0xf]
        %v452 = vld [vmem:[%s389 + $0x174] sm:$0xff]
        %v453 = vld [vmem:[%s389 + $0x17c] sm:$0xf]
        %v454 = vld [vmem:[%s389 + $0x180] sm:$0xff]
        %v455 = vld [vmem:[%s389 + $0x188] sm:$0xf]
        %v456 = vld [vmem:[%s389 + $0x18c] sm:$0xff]
        %v457 = vld [vmem:[%s389 + $0x194] sm:$0xf]
        %v458 = vld [vmem:[%s389 + $0x198] sm:$0xff]
        %v459 = vld [vmem:[%s389 + $0x1a0] sm:$0xf]
        %v460 = vld [vmem:[%s389 + $0x1a4] sm:$0xff]
        %v461 = vld [vmem:[%s389 + $0x1ac] sm:$0xf]
        %v462 = vld [vmem:[%s389 + $0x1b0] sm:$0xff]
        %v463 = vld [vmem:[%s389 + $0x1b8] sm:$0xf]
        %v464 = vld [vmem:[%s389 + $0x1bc] sm:$0xff]
        %v465 = vld [vmem:[%s389 + $0x1c4] sm:$0xf]
        %v466 = vld [vmem:[%s389 + $0x1c8] sm:$0xff]
        %v467 = vld [vmem:[%s389 + $0x1d0] sm:$0xf]
        %v468 = vld [vmem:[%s389 + $0x1d4] sm:$0xff]
        %v469 = vld [vmem:[%s389 + $0x1dc] sm:$0xf]
        %v470 = vld [vmem:[%s389 + $0x1e0] sm:$0xff]
        %v471 = vld [vmem:[%s389 + $0x1e8] sm:$0xf]
        %v472 = vld [vmem:[%s389 + $0x1ec] sm:$0xff]
        %v473 = vld [vmem:[%s389 + $0x1f4] sm:$0xf]
        %v474 = vld [vmem:[%s389 + $0x1f8] sm:$0xff]
        %v475 = vld [vmem:[%s389 + $0x200] sm:$0xf]
        %v476 = vld [vmem:[%s389 + $0x204] sm:$0xff]
        %v477 = vld [vmem:[%s389 + $0x20c] sm:$0xf]
        %v478 = vld [vmem:[%s389 + $0x210] sm:$0xff]
        %v479 = vld [vmem:[%s389 + $0x218] sm:$0xf]
        %v480 = vld [vmem:[%s389 + $0x21c] sm:$0xff]
        %v481 = vld [vmem:[%s389 + $0x224] sm:$0xf]
        %v482 = vld [vmem:[%s389 + $0x228] sm:$0xff]
        %v483 = vld [vmem:[%s389 + $0x230] sm:$0xf]
        %v484 = vld [vmem:[%s389 + $0x234] sm:$0xff]
        %v485 = vld [vmem:[%s389 + $0x23c] sm:$0xf]
        %v486 = vld [vmem:[%s389 + $0x240] sm:$0xff]
        %v487 = vld [vmem:[%s389 + $0x248] sm:$0xf]
        %v488 = vld [vmem:[%s389 + $0x24c] sm:$0xff]
        %v489 = vld [vmem:[%s389 + $0x254] sm:$0xf]
        %v490 = vld [vmem:[%s389 + $0x258] sm:$0xff]
        %v491 = vld [vmem:[%s389 + $0x260] sm:$0xf]
        %v492 = vld [vmem:[%s389 + $0x264] sm:$0xff]
        %v493 = vld [vmem:[%s389 + $0x26c] sm:$0xf]
        %v494 = vld [vmem:[%s389 + $0x270] sm:$0xff]
        %v495 = vld [vmem:[%s389 + $0x278] sm:$0xf]
        %v496 = vld [vmem:[%s389 + $0x27c] sm:$0xff]
        %v497 = vld [vmem:[%s389 + $0x284] sm:$0xf]
        %v498 = vld [vmem:[%s389 + $0x288] sm:$0xff]
        %v499 = vld [vmem:[%s389 + $0x290] sm:$0xf]
        %v500 = vld [vmem:[%s389 + $0x294] sm:$0xff]
        %v501 = vld [vmem:[%s389 + $0x29c] sm:$0xf]
        %v502 = vld [vmem:[%s389 + $0x2a0] sm:$0xff]
        %v503 = vld [vmem:[%s389 + $0x2a8] sm:$0xf]
        %v504 = vld [vmem:[%s389 + $0x2ac] sm:$0xff]
        %v505 = vld [vmem:[%s389 + $0x2b4] sm:$0xf]
        %v506 = vld [vmem:[%s389 + $0x2b8] sm:$0xff]
        %v507 = vld [vmem:[%s389 + $0x2c0] sm:$0xf]
        %v508 = vld [vmem:[%s389 + $0x2c4] sm:$0xff]
        %v509 = vld [vmem:[%s389 + $0x2cc] sm:$0xf]
        %v510 = vld [vmem:[%s389 + $0x2d0] sm:$0xff]
        %v511 = vld [vmem:[%s389 + $0x2d8] sm:$0xf]
        %v512 = vld [vmem:[%s389 + $0x2dc] sm:$0xff]
        %v513 = vld [vmem:[%s389 + $0x2e4] sm:$0xf]
        %v514 = vld [vmem:[%s389 + $0x2e8] sm:$0xff]
        %v515 = vld [vmem:[%s389 + $0x2f0] sm:$0xf]
        %v516 = vld [vmem:[%s389 + $0x2f4] sm:$0xff]
        %v517 = vld [vmem:[%s389 + $0x2fc] sm:$0xf]
        %v646 = vunpack.c.l.b16 %v390
        %v647 = vunpack.c.h.b16 %v390
        %v648 = vunpack.c.l.b16 %v391
        %v649 = vunpack.c.l.b16 %v392
        %v650 = vunpack.c.h.b16 %v392
        %v651 = vunpack.c.l.b16 %v393
        %v652 = vunpack.c.l.b16 %v394
        %v653 = vunpack.c.h.b16 %v394
        %v654 = vunpack.c.l.b16 %v395
        %v655 = vunpack.c.l.b16 %v396
        %v656 = vunpack.c.h.b16 %v396
        %v657 = vunpack.c.l.b16 %v397
        %v658 = vunpack.c.l.b16 %v398
        %v659 = vunpack.c.h.b16 %v398
        %v660 = vunpack.c.l.b16 %v399
        %v661 = vunpack.c.l.b16 %v400
        %v662 = vunpack.c.h.b16 %v400
        %v663 = vunpack.c.l.b16 %v401
        %v664 = vunpack.c.l.b16 %v402
        %v665 = vunpack.c.h.b16 %v402
        %v666 = vunpack.c.l.b16 %v403
        %v667 = vunpack.c.l.b16 %v404
        %v668 = vunpack.c.h.b16 %v404
        %v669 = vunpack.c.l.b16 %v405
        %v670 = vunpack.c.l.b16 %v406
        %v671 = vunpack.c.h.b16 %v406
        %v672 = vunpack.c.l.b16 %v407
        %v673 = vunpack.c.l.b16 %v408
        %v674 = vunpack.c.h.b16 %v408
        %v675 = vunpack.c.l.b16 %v409
        %v676 = vunpack.c.l.b16 %v410
        %v677 = vunpack.c.h.b16 %v410
        %v678 = vunpack.c.l.b16 %v411
        %v679 = vunpack.c.l.b16 %v412
        %v680 = vunpack.c.h.b16 %v412
        %v681 = vunpack.c.l.b16 %v413
        %v682 = vunpack.c.l.b16 %v414
        %v683 = vunpack.c.h.b16 %v414
        %v684 = vunpack.c.l.b16 %v415
        %v685 = vunpack.c.l.b16 %v416
        %v686 = vunpack.c.h.b16 %v416
        %v687 = vunpack.c.l.b16 %v417
        %v688 = vunpack.c.l.b16 %v418
        %v689 = vunpack.c.h.b16 %v418
        %v690 = vunpack.c.l.b16 %v419
        %v691 = vunpack.c.l.b16 %v420
        %v692 = vunpack.c.h.b16 %v420
        %v693 = vunpack.c.l.b16 %v421
        %v694 = vunpack.c.l.b16 %v422
        %v695 = vunpack.c.h.b16 %v422
        %v696 = vunpack.c.l.b16 %v423
        %v697 = vunpack.c.l.b16 %v424
        %v698 = vunpack.c.h.b16 %v424
        %v699 = vunpack.c.l.b16 %v425
        %v700 = vunpack.c.l.b16 %v426
        %v701 = vunpack.c.h.b16 %v426
        %v702 = vunpack.c.l.b16 %v427
        %v703 = vunpack.c.l.b16 %v428
        %v704 = vunpack.c.h.b16 %v428
        %v705 = vunpack.c.l.b16 %v429
        %v706 = vunpack.c.l.b16 %v430
        %v707 = vunpack.c.h.b16 %v430
        %v708 = vunpack.c.l.b16 %v431
        %v709 = vunpack.c.l.b16 %v432
        %v710 = vunpack.c.h.b16 %v432
        %v711 = vunpack.c.l.b16 %v433
        %v712 = vunpack.c.l.b16 %v434
        %v713 = vunpack.c.h.b16 %v434
        %v714 = vunpack.c.l.b16 %v435
        %v715 = vunpack.c.l.b16 %v436
        %v716 = vunpack.c.h.b16 %v436
        %v717 = vunpack.c.l.b16 %v437
        %v718 = vunpack.c.l.b16 %v438
        %v719 = vunpack.c.h.b16 %v438
        %v720 = vunpack.c.l.b16 %v439
        %v721 = vunpack.c.l.b16 %v440
        %v722 = vunpack.c.h.b16 %v440
        %v723 = vunpack.c.l.b16 %v441
        %v724 = vunpack.c.l.b16 %v442
        %v725 = vunpack.c.h.b16 %v442
        %v726 = vunpack.c.l.b16 %v443
        %v727 = vunpack.c.l.b16 %v444
        %v728 = vunpack.c.h.b16 %v444
        %v729 = vunpack.c.l.b16 %v445
        %v730 = vunpack.c.l.b16 %v446
        %v731 = vunpack.c.h.b16 %v446
        %v732 = vunpack.c.l.b16 %v447
        %v733 = vunpack.c.l.b16 %v448
        %v734 = vunpack.c.h.b16 %v448
        %v735 = vunpack.c.l.b16 %v449
        %v736 = vunpack.c.l.b16 %v450
        %v737 = vunpack.c.h.b16 %v450
        %v738 = vunpack.c.l.b16 %v451
        %v739 = vunpack.c.l.b16 %v452
        %v740 = vunpack.c.h.b16 %v452
        %v741 = vunpack.c.l.b16 %v453
        %v742 = vunpack.c.l.b16 %v454
        %v743 = vunpack.c.h.b16 %v454
        %v744 = vunpack.c.l.b16 %v455
        %v745 = vunpack.c.l.b16 %v456
        %v746 = vunpack.c.h.b16 %v456
        %v747 = vunpack.c.l.b16 %v457
        %v748 = vunpack.c.l.b16 %v458
        %v749 = vunpack.c.h.b16 %v458
        %v750 = vunpack.c.l.b16 %v459
        %v751 = vunpack.c.l.b16 %v460
        %v752 = vunpack.c.h.b16 %v460
        %v753 = vunpack.c.l.b16 %v461
        %v754 = vunpack.c.l.b16 %v462
        %v755 = vunpack.c.h.b16 %v462
        %v756 = vunpack.c.l.b16 %v463
        %v757 = vunpack.c.l.b16 %v464
        %v758 = vunpack.c.h.b16 %v464
        %v759 = vunpack.c.l.b16 %v465
        %v760 = vunpack.c.l.b16 %v466
        %v761 = vunpack.c.h.b16 %v466
        %v762 = vunpack.c.l.b16 %v467
        %v763 = vunpack.c.l.b16 %v468
        %v764 = vunpack.c.h.b16 %v468
        %v765 = vunpack.c.l.b16 %v469
        %v766 = vunpack.c.l.b16 %v470
        %v767 = vunpack.c.h.b16 %v470
        %v768 = vunpack.c.l.b16 %v471
        %v769 = vunpack.c.l.b16 %v472
        %v770 = vunpack.c.h.b16 %v472
        %v771 = vunpack.c.l.b16 %v473
        %v772 = vunpack.c.l.b16 %v474
        %v773 = vunpack.c.h.b16 %v474
        %v774 = vunpack.c.l.b16 %v475
        %v775 = vunpack.c.l.b16 %v476
        %v776 = vunpack.c.h.b16 %v476
        %v777 = vunpack.c.l.b16 %v477
        %v778 = vunpack.c.l.b16 %v478
        %v779 = vunpack.c.h.b16 %v478
        %v780 = vunpack.c.l.b16 %v479
        %v781 = vunpack.c.l.b16 %v480
        %v782 = vunpack.c.h.b16 %v480
        %v783 = vunpack.c.l.b16 %v481
        %v784 = vunpack.c.l.b16 %v482
        %v785 = vunpack.c.h.b16 %v482
        %v786 = vunpack.c.l.b16 %v483
        %v787 = vunpack.c.l.b16 %v484
        %v788 = vunpack.c.h.b16 %v484
        %v789 = vunpack.c.l.b16 %v485
        %v790 = vunpack.c.l.b16 %v486
        %v791 = vunpack.c.h.b16 %v486
        %v792 = vunpack.c.l.b16 %v487
        %v793 = vunpack.c.l.b16 %v488
        %v794 = vunpack.c.h.b16 %v488
        %v795 = vunpack.c.l.b16 %v489
        %v796 = vunpack.c.l.b16 %v490
        %v797 = vunpack.c.h.b16 %v490
        %v798 = vunpack.c.l.b16 %v491
        %v799 = vunpack.c.l.b16 %v492
        %v800 = vunpack.c.h.b16 %v492
        %v801 = vunpack.c.l.b16 %v493
        %v802 = vunpack.c.l.b16 %v494
        %v803 = vunpack.c.h.b16 %v494
        %v804 = vunpack.c.l.b16 %v495
        %v805 = vunpack.c.l.b16 %v496
        %v806 = vunpack.c.h.b16 %v496
        %v807 = vunpack.c.l.b16 %v497
        %v808 = vunpack.c.l.b16 %v498
        %v809 = vunpack.c.h.b16 %v498
        %v810 = vunpack.c.l.b16 %v499
        %v811 = vunpack.c.l.b16 %v500
        %v812 = vunpack.c.h.b16 %v500
        %v813 = vunpack.c.l.b16 %v501
        %v814 = vunpack.c.l.b16 %v502
        %v815 = vunpack.c.h.b16 %v502
        %v816 = vunpack.c.l.b16 %v503
        %v817 = vunpack.c.l.b16 %v504
        %v818 = vunpack.c.h.b16 %v504
        %v819 = vunpack.c.l.b16 %v505
        %v820 = vunpack.c.l.b16 %v506
        %v821 = vunpack.c.h.b16 %v506
        %v822 = vunpack.c.l.b16 %v507
        %v823 = vunpack.c.l.b16 %v508
        %v824 = vunpack.c.h.b16 %v508
        %v825 = vunpack.c.l.b16 %v509
        %v826 = vunpack.c.l.b16 %v510
        %v827 = vunpack.c.h.b16 %v510
        %v828 = vunpack.c.l.b16 %v511
        %v829 = vunpack.c.l.b16 %v512
        %v830 = vunpack.c.h.b16 %v512
        %v831 = vunpack.c.l.b16 %v513
        %v832 = vunpack.c.l.b16 %v514
        %v833 = vunpack.c.h.b16 %v514
        %v834 = vunpack.c.l.b16 %v515
        %v835 = vunpack.c.l.b16 %v516
        %v836 = vunpack.c.h.b16 %v516
        %v837 = vunpack.c.l.b16 %v517
        %v838 = vpack.c.b16 %v649, %v646
        %v839 = vpack.c.b16 %v650, %v647
        %v840 = vpack.c.b16 %v651, %v648
        %v841 = vpack.c.b16 %v655, %v652
        %v842 = vpack.c.b16 %v656, %v653
        %v843 = vpack.c.b16 %v657, %v654
        %v844 = vpack.c.b16 %v661, %v658
        %v845 = vpack.c.b16 %v662, %v659
        %v846 = vpack.c.b16 %v663, %v660
        %v847 = vpack.c.b16 %v667, %v664
        %v848 = vpack.c.b16 %v668, %v665
        %v849 = vpack.c.b16 %v669, %v666
        %v850 = vpack.c.b16 %v673, %v670
        %v851 = vpack.c.b16 %v674, %v671
        %v852 = vpack.c.b16 %v675, %v672
        %v853 = vpack.c.b16 %v679, %v676
        %v854 = vpack.c.b16 %v680, %v677
        %v855 = vpack.c.b16 %v681, %v678
        %v856 = vpack.c.b16 %v685, %v682
        %v857 = vpack.c.b16 %v686, %v683
        %v858 = vpack.c.b16 %v687, %v684
        %v859 = vpack.c.b16 %v691, %v688
        %v860 = vpack.c.b16 %v692, %v689
        %v861 = vpack.c.b16 %v693, %v690
        %v862 = vpack.c.b16 %v697, %v694
        %v863 = vpack.c.b16 %v698, %v695
        %v864 = vpack.c.b16 %v699, %v696
        %v865 = vpack.c.b16 %v703, %v700
        %v866 = vpack.c.b16 %v704, %v701
        %v867 = vpack.c.b16 %v705, %v702
        %v868 = vpack.c.b16 %v709, %v706
        %v869 = vpack.c.b16 %v710, %v707
        %v870 = vpack.c.b16 %v711, %v708
        %v871 = vpack.c.b16 %v715, %v712
        %v872 = vpack.c.b16 %v716, %v713
        %v873 = vpack.c.b16 %v717, %v714
        %v874 = vpack.c.b16 %v721, %v718
        %v875 = vpack.c.b16 %v722, %v719
        %v876 = vpack.c.b16 %v723, %v720
        %v877 = vpack.c.b16 %v727, %v724
        %v878 = vpack.c.b16 %v728, %v725
        %v879 = vpack.c.b16 %v729, %v726
        %v880 = vpack.c.b16 %v733, %v730
        %v881 = vpack.c.b16 %v734, %v731
        %v882 = vpack.c.b16 %v735, %v732
        %v883 = vpack.c.b16 %v739, %v736
        %v884 = vpack.c.b16 %v740, %v737
        %v885 = vpack.c.b16 %v741, %v738
        %v886 = vpack.c.b16 %v745, %v742
        %v887 = vpack.c.b16 %v746, %v743
        %v888 = vpack.c.b16 %v747, %v744
        %v889 = vpack.c.b16 %v751, %v748
        %v890 = vpack.c.b16 %v752, %v749
        %v891 = vpack.c.b16 %v753, %v750
        %v892 = vpack.c.b16 %v757, %v754
        %v893 = vpack.c.b16 %v758, %v755
        %v894 = vpack.c.b16 %v759, %v756
        %v895 = vpack.c.b16 %v763, %v760
        %v896 = vpack.c.b16 %v764, %v761
        %v897 = vpack.c.b16 %v765, %v762
        %v898 = vpack.c.b16 %v769, %v766
        %v899 = vpack.c.b16 %v770, %v767
        %v900 = vpack.c.b16 %v771, %v768
        %v901 = vpack.c.b16 %v775, %v772
        %v902 = vpack.c.b16 %v776, %v773
        %v903 = vpack.c.b16 %v777, %v774
        %v904 = vpack.c.b16 %v781, %v778
        %v905 = vpack.c.b16 %v782, %v779
        %v906 = vpack.c.b16 %v783, %v780
        %v907 = vpack.c.b16 %v787, %v784
        %v908 = vpack.c.b16 %v788, %v785
        %v909 = vpack.c.b16 %v789, %v786
        %v910 = vpack.c.b16 %v793, %v790
        %v911 = vpack.c.b16 %v794, %v791
        %v912 = vpack.c.b16 %v795, %v792
        %v913 = vpack.c.b16 %v799, %v796
        %v914 = vpack.c.b16 %v800, %v797
        %v915 = vpack.c.b16 %v801, %v798
        %v916 = vpack.c.b16 %v805, %v802
        %v917 = vpack.c.b16 %v806, %v803
        %v918 = vpack.c.b16 %v807, %v804
        %v919 = vpack.c.b16 %v811, %v808
        %v920 = vpack.c.b16 %v812, %v809
        %v921 = vpack.c.b16 %v813, %v810
        %v922 = vpack.c.b16 %v817, %v814
        %v923 = vpack.c.b16 %v818, %v815
        %v924 = vpack.c.b16 %v819, %v816
        %v925 = vpack.c.b16 %v823, %v820
        %v926 = vpack.c.b16 %v824, %v821
        %v927 = vpack.c.b16 %v825, %v822
        %v928 = vpack.c.b16 %v829, %v826
        %v929 = vpack.c.b16 %v830, %v827
        %v930 = vpack.c.b16 %v831, %v828
        %v931 = vpack.c.b16 %v835, %v832
        %v932 = vpack.c.b16 %v836, %v833
        %v933 = vpack.c.b16 %v837, %v834
        %1030 = vmatprep.subr.bf16.mxu0 %v839
        %1031 = vmatpush1.bf16.msra.mxu0 %v838
        %1032 = vmatprep.subr.bf16.mxu0 %v842
        %1033 = vmatpush1.bf16.msra.mxu0 %v841
        %1034 = vmatprep.subr.bf16.mxu0 %v845
        %1035 = vmatpush1.bf16.msra.mxu0 %v844
        %1036 = vmatprep.subr.bf16.mxu0 %v848
        %1037 = vmatpush1.bf16.msra.mxu0 %v847
        %1038 = vmatprep.subr.bf16.mxu0 %v851
        %1039 = vmatpush1.bf16.msra.mxu0 %v850
        %1040 = vmatprep.subr.bf16.mxu0 %v854
        %1041 = vmatpush1.bf16.msra.mxu0 %v853
        %1042 = vmatprep.subr.bf16.mxu0 %v857
        %1043 = vmatpush1.bf16.msra.mxu0 %v856
        %1044 = vmatprep.subr.bf16.mxu0 %v860
        %1045 = vmatpush1.bf16.msra.mxu0 %v859
        %1046 = vmatprep.subr.bf16.mxu0 %v863
        %1047 = vmatpush1.bf16.msra.mxu0 %v862
        %1048 = vmatprep.subr.bf16.mxu0 %v866
        %1049 = vmatpush1.bf16.msra.mxu0 %v865
        %1050 = vmatprep.subr.bf16.mxu0 %v869
        %1051 = vmatpush1.bf16.msra.mxu0 %v868
        %1052 = vmatprep.subr.bf16.mxu0 %v872
        %1053 = vmatpush1.bf16.msra.mxu0 %v871
        %1054 = vmatprep.subr.bf16.mxu0 %v875
        %1055 = vmatpush1.bf16.msra.mxu0 %v874
        %1056 = vmatprep.subr.bf16.mxu0 %v878
        %1057 = vmatpush1.bf16.msra.mxu0 %v877
        %1058 = vmatprep.subr.bf16.mxu0 %v881
        %1059 = vmatpush1.bf16.msra.mxu0 %v880
        %1060 = vmatprep.subr.bf16.mxu0 %v884
        %1061 = vmatpush1.bf16.msra.mxu0 %v883
        %1062 = vmatprep.mubr.bf16.mxu0 %v372
        %1063 = vmatmul.mubr.bf16.gmra.mrb[0].mxu0 %v371
        %v1064 = vpop.f32.mrb[0].mxu0
        %v1065 = vadd.f32 0.0, %v1064
        %v1066 = vpop.f32.mrb[0].mxu0
        %v1067 = vadd.f32 0.0, %v1066
        %v1068 = vpop.f32.mrb[0].mxu0
        %v1069 = vadd.f32 0.0, %v1068
        %v1070 = vpop.f32.mrb[0].mxu0
        %v1071 = vadd.f32 0.0, %v1070
        %1072 = vmatprep.mubr.bf16.mxu0 %v376
        %1073 = vmatmul.mubr.bf16.gmra.mrb[0].mxu0 %v375
        %v1074 = vpop.f32.mrb[0].mxu0
        %v1075 = vadd.f32 0.0, %v1074
        %v1076 = vpop.f32.mrb[0].mxu0
        %v1077 = vadd.f32 0.0, %v1076
        %v1078 = vpop.f32.mrb[0].mxu0
        %v1079 = vadd.f32 0.0, %v1078
        %v1080 = vpop.f32.mrb[0].mxu0
        %v1081 = vadd.f32 0.0, %v1080
        %1082 = vmatprep.mubr.bf16.mxu0 %v380
        %1083 = vmatmul.mubr.bf16.gmra.mrb[0].mxu0 %v379
        %v1084 = vpop.f32.mrb[0].mxu0
        %v1085 = vadd.f32 0.0, %v1084
        %v1086 = vpop.f32.mrb[0].mxu0
        %v1087 = vadd.f32 0.0, %v1086
        %v1088 = vpop.f32.mrb[0].mxu0
        %v1089 = vadd.f32 0.0, %v1088
        %v1090 = vpop.f32.mrb[0].mxu0
        %v1091 = vadd.f32 0.0, %v1090
        %1092 = vmatprep.mubr.bf16.mxu0 %v384
        %1093 = vmatmul.mubr.bf16.gmra.mrb[0].mxu0 %v383
        %v1094 = vpop.f32.mrb[0].mxu0
        %v1095 = vadd.f32 0.0, %v1094
        %v1096 = vpop.f32.mrb[0].mxu0
        %v1097 = vadd.f32 0.0, %v1096
        %v1098 = vpop.f32.mrb[0].mxu0
        %v1099 = vadd.f32 0.0, %v1098
        %v1100 = vpop.f32.mrb[0].mxu0
        %v1101 = vadd.f32 0.0, %v1100
        %1102 = vdwg.mxu0
        %1103 = vmatprep.subr.bf16.mxu0 %v887
        %1104 = vmatpush1.bf16.msra.mxu0 %v886
        %1105 = vmatprep.subr.bf16.mxu0 %v890
        %1106 = vmatpush1.bf16.msra.mxu0 %v889
        %1107 = vmatprep.subr.bf16.mxu0 %v893
        %1108 = vmatpush1.bf16.msra.mxu0 %v892
        %1109 = vmatprep.subr.bf16.mxu0 %v896
        %1110 = vmatpush1.bf16.msra.mxu0 %v895
        %1111 = vmatprep.subr.bf16.mxu0 %v899
        %1112 = vmatpush1.bf16.msra.mxu0 %v898
        %1113 = vmatprep.subr.bf16.mxu0 %v902
        %1114 = vmatpush1.bf16.msra.mxu0 %v901
        %1115 = vmatprep.subr.bf16.mxu0 %v905
        %1116 = vmatpush1.bf16.msra.mxu0 %v904
        %1117 = vmatprep.subr.bf16.mxu0 %v908
        %1118 = vmatpush1.bf16.msra.mxu0 %v907
        %1119 = vmatprep.subr.bf16.mxu0 %v911
        %1120 = vmatpush1.bf16.msra.mxu0 %v910
        %1121 = vmatprep.subr.bf16.mxu0 %v914
        %1122 = vmatpush1.bf16.msra.mxu0 %v913
        %1123 = vmatprep.subr.bf16.mxu0 %v917
        %1124 = vmatpush1.bf16.msra.mxu0 %v916
        %1125 = vmatprep.subr.bf16.mxu0 %v920
        %1126 = vmatpush1.bf16.msra.mxu0 %v919
        %1127 = vmatprep.subr.bf16.mxu0 %v923
        %1128 = vmatpush1.bf16.msra.mxu0 %v922
        %1129 = vmatprep.subr.bf16.mxu0 %v926
        %1130 = vmatpush1.bf16.msra.mxu0 %v925
        %1131 = vmatprep.subr.bf16.mxu0 %v929
        %1132 = vmatpush1.bf16.msra.mxu0 %v928
        %1133 = vmatprep.subr.bf16.mxu0 %v932
        %1134 = vmatpush1.bf16.msra.mxu0 %v931
        %1135 = vmatprep.mubr.bf16.mxu0 %v374
        %1136 = vmatmul.mubr.bf16.gmra.mrb[0].mxu0 %v373
        %v1137 = vpop.f32.mrb[0].mxu0
        %v1138 = vadd.f32 %v1065, %v1137
        %v1139 = vpop.f32.mrb[0].mxu0
        %v1140 = vadd.f32 %v1067, %v1139
        %v1141 = vpop.f32.mrb[0].mxu0
        %v1142 = vadd.f32 %v1069, %v1141
        %v1143 = vpop.f32.mrb[0].mxu0
        %v1144 = vadd.f32 %v1071, %v1143
        %1145 = vmatprep.mubr.bf16.mxu0 %v378
        %1146 = vmatmul.mubr.bf16.gmra.mrb[0].mxu0 %v377
        %v1147 = vpop.f32.mrb[0].mxu0
        %v1148 = vadd.f32 %v1075, %v1147
        %v1149 = vpop.f32.mrb[0].mxu0
        %v1150 = vadd.f32 %v1077, %v1149
        %v1151 = vpop.f32.mrb[0].mxu0
        %v1152 = vadd.f32 %v1079, %v1151
        %v1153 = vpop.f32.mrb[0].mxu0
        %v1154 = vadd.f32 %v1081, %v1153
        %1155 = vmatprep.mubr.bf16.mxu0 %v382
        %1156 = vmatmul.mubr.bf16.gmra.mrb[0].mxu0 %v381
        %v1157 = vpop.f32.mrb[0].mxu0
        %v1158 = vadd.f32 %v1085, %v1157
        %v1159 = vpop.f32.mrb[0].mxu0
        %v1160 = vadd.f32 %v1087, %v1159
        %v1161 = vpop.f32.mrb[0].mxu0
        %v1162 = vadd.f32 %v1089, %v1161
        %v1163 = vpop.f32.mrb[0].mxu0
        %v1164 = vadd.f32 %v1091, %v1163
        %1165 = vmatprep.mubr.bf16.mxu0 %v386
        %1166 = vmatmul.mubr.bf16.gmra.mrb[0].mxu0 %v385
        %v1167 = vpop.f32.mrb[0].mxu0
        %v1168 = vadd.f32 %v1095, %v1167
        %v1169 = vpop.f32.mrb[0].mxu0
        %v1170 = vadd.f32 %v1097, %v1169
        %v1171 = vpop.f32.mrb[0].mxu0
        %v1172 = vadd.f32 %v1099, %v1171
        %v1173 = vpop.f32.mrb[0].mxu0
        %v1174 = vadd.f32 %v1101, %v1173
        %1175 = vdwg.mxu0
        %1176 = vmatprep.subr.bf16.mxu0 0
        %1177 = vmatpush1.bf16.msra.mxu0 %v840
        %1178 = vmatprep.subr.bf16.mxu0 0
        %1179 = vmatpush1.bf16.msra.mxu0 %v843
        %1180 = vmatprep.subr.bf16.mxu0 0
        %1181 = vmatpush1.bf16.msra.mxu0 %v846
        %1182 = vmatprep.subr.bf16.mxu0 0
        %1183 = vmatpush1.bf16.msra.mxu0 %v849
        %1184 = vmatprep.subr.bf16.mxu0 0
        %1185 = vmatpush1.bf16.msra.mxu0 %v852
        %1186 = vmatprep.subr.bf16.mxu0 0
        %1187 = vmatpush1.bf16.msra.mxu0 %v855
        %1188 = vmatprep.subr.bf16.mxu0 0
        %1189 = vmatpush1.bf16.msra.mxu0 %v858
        %1190 = vmatprep.subr.bf16.mxu0 0
        %1191 = vmatpush1.bf16.msra.mxu0 %v861
        %1192 = vmatprep.subr.bf16.mxu0 0
        %1193 = vmatpush1.bf16.msra.mxu0 %v864
        %1194 = vmatprep.subr.bf16.mxu0 0
        %1195 = vmatpush1.bf16.msra.mxu0 %v867
        %1196 = vmatprep.subr.bf16.mxu0 0
        %1197 = vmatpush1.bf16.msra.mxu0 %v870
        %1198 = vmatprep.subr.bf16.mxu0 0
        %1199 = vmatpush1.bf16.msra.mxu0 %v873
        %1200 = vmatprep.subr.bf16.mxu0 0
        %1201 = vmatpush1.bf16.msra.mxu0 %v876
        %1202 = vmatprep.subr.bf16.mxu0 0
        %1203 = vmatpush1.bf16.msra.mxu0 %v879
        %1204 = vmatprep.subr.bf16.mxu0 0
        %1205 = vmatpush1.bf16.msra.mxu0 %v882
        %1206 = vmatprep.subr.bf16.mxu0 0
        %1207 = vmatpush1.bf16.msra.mxu0 %v885
        %1208 = vmatprep.mubr.bf16.mxu0 %v372
        %1209 = vmatmul.mubr.bf16.gmra.mrb[0].mxu0 %v371
        %v1210 = vpop.f32.mrb[0].mxu0
        %v1211 = vadd.f32 0.0, %v1210
        %v1212 = vpop.f32.mrb[0].mxu0
        %v1213 = vpop.f32.mrb[0].mxu0
        %v1214 = vadd.f32 0.0, %v1213
        %v1215 = vpop.f32.mrb[0].mxu0
        %1216 = vmatprep.mubr.bf16.mxu0 %v376
        %1217 = vmatmul.mubr.bf16.gmra.mrb[0].mxu0 %v375
        %v1218 = vpop.f32.mrb[0].mxu0
        %v1219 = vadd.f32 0.0, %v1218
        %v1220 = vpop.f32.mrb[0].mxu0
        %v1221 = vpop.f32.mrb[0].mxu0
        %v1222 = vadd.f32 0.0, %v1221
        %v1223 = vpop.f32.mrb[0].mxu0
        %1224 = vmatprep.mubr.bf16.mxu0 %v380
        %1225 = vmatmul.mubr.bf16.gmra.mrb[0].mxu0 %v379
        %v1226 = vpop.f32.mrb[0].mxu0
        %v1227 = vadd.f32 0.0, %v1226
        %v1228 = vpop.f32.mrb[0].mxu0
        %v1229 = vpop.f32.mrb[0].mxu0
        %v1230 = vadd.f32 0.0, %v1229
        %v1231 = vpop.f32.mrb[0].mxu0
        %1232 = vmatprep.mubr.bf16.mxu0 %v384
        %1233 = vmatmul.mubr.bf16.gmra.mrb[0].mxu0 %v383
        %v1234 = vpop.f32.mrb[0].mxu0
        %v1235 = vadd.f32 0.0, %v1234
        %v1236 = vpop.f32.mrb[0].mxu0
        %v1237 = vpop.f32.mrb[0].mxu0
        %v1238 = vadd.f32 0.0, %v1237
        %v1239 = vpop.f32.mrb[0].mxu0
        %1240 = vdwg.mxu0
        %1241 = vmatprep.subr.bf16.mxu0 0
        %1242 = vmatpush1.bf16.msra.mxu0 %v888
        %1243 = vmatprep.subr.bf16.mxu0 0
        %1244 = vmatpush1.bf16.msra.mxu0 %v891
        %1245 = vmatprep.subr.bf16.mxu0 0
        %1246 = vmatpush1.bf16.msra.mxu0 %v894
        %1247 = vmatprep.subr.bf16.mxu0 0
        %1248 = vmatpush1.bf16.msra.mxu0 %v897
        %1249 = vmatprep.subr.bf16.mxu0 0
        %1250 = vmatpush1.bf16.msra.mxu0 %v900
        %1251 = vmatprep.subr.bf16.mxu0 0
        %1252 = vmatpush1.bf16.msra.mxu0 %v903
        %1253 = vmatprep.subr.bf16.mxu0 0
        %1254 = vmatpush1.bf16.msra.mxu0 %v906
        %1255 = vmatprep.subr.bf16.mxu0 0
        %1256 = vmatpush1.bf16.msra.mxu0 %v909
        %1257 = vmatprep.subr.bf16.mxu0 0
        %1258 = vmatpush1.bf16.msra.mxu0 %v912
        %1259 = vmatprep.subr.bf16.mxu0 0
        %1260 = vmatpush1.bf16.msra.mxu0 %v915
        %1261 = vmatprep.subr.bf16.mxu0 0
        %1262 = vmatpush1.bf16.msra.mxu0 %v918
        %1263 = vmatprep.subr.bf16.mxu0 0
        %1264 = vmatpush1.bf16.msra.mxu0 %v921
        %1265 = vmatprep.subr.bf16.mxu0 0
        %1266 = vmatpush1.bf16.msra.mxu0 %v924
        %1267 = vmatprep.subr.bf16.mxu0 0
        %1268 = vmatpush1.bf16.msra.mxu0 %v927
        %1269 = vmatprep.subr.bf16.mxu0 0
        %1270 = vmatpush1.bf16.msra.mxu0 %v930
        %1271 = vmatprep.subr.bf16.mxu0 0
        %1272 = vmatpush1.bf16.msra.mxu0 %v933
        %1273 = vmatprep.mubr.bf16.mxu0 %v374
        %1274 = vmatmul.mubr.bf16.gmra.mrb[0].mxu0 %v373
        %v1275 = vpop.f32.mrb[0].mxu0
        %v1276 = vadd.f32 %v1211, %v1275
        %v1277 = vpop.f32.mrb[0].mxu0
        %v1278 = vpop.f32.mrb[0].mxu0
        %v1279 = vadd.f32 %v1214, %v1278
        %v1280 = vpop.f32.mrb[0].mxu0
        %1281 = vmatprep.mubr.bf16.mxu0 %v378
        %1282 = vmatmul.mubr.bf16.gmra.mrb[0].mxu0 %v377
        %v1283 = vpop.f32.mrb[0].mxu0
        %v1284 = vadd.f32 %v1219, %v1283
        %v1285 = vpop.f32.mrb[0].mxu0
        %v1286 = vpop.f32.mrb[0].mxu0
        %v1287 = vadd.f32 %v1222, %v1286
        %v1288 = vpop.f32.mrb[0].mxu0
        %1289 = vmatprep.mubr.bf16.mxu0 %v382
        %1290 = vmatmul.mubr.bf16.gmra.mrb[0].mxu0 %v381
        %v1291 = vpop.f32.mrb[0].mxu0
        %v1292 = vadd.f32 %v1227, %v1291
        %v1293 = vpop.f32.mrb[0].mxu0
        %v1294 = vpop.f32.mrb[0].mxu0
        %v1295 = vadd.f32 %v1230, %v1294
        %v1296 = vpop.f32.mrb[0].mxu0
        %1297 = vmatprep.mubr.bf16.mxu0 %v386
        %1298 = vmatmul.mubr.bf16.gmra.mrb[0].mxu0 %v385
        %v1299 = vpop.f32.mrb[0].mxu0
        %v1300 = vadd.f32 %v1235, %v1299
        %v1301 = vpop.f32.mrb[0].mxu0
        %v1302 = vpop.f32.mrb[0].mxu0
        %v1303 = vadd.f32 %v1238, %v1302
        %v1304 = vpop.f32.mrb[0].mxu0
        %1305 = vdwg.mxu0
        %v1306 = vpack.c.bf16 %v1142, %v1138
        %v1307 = vpack.c.bf16 %v1152, %v1148
        %v1308 = vpack.c.bf16 %v1162, %v1158
        %v1309 = vpack.c.bf16 %v1172, %v1168
        %v1310 = vpack.c.bf16 %v1144, %v1140
        %v1311 = vpack.c.bf16 %v1154, %v1150
        %v1312 = vpack.c.bf16 %v1164, %v1160
        %v1313 = vpack.c.bf16 %v1174, %v1170
        %v1314 = vpack.c.bf16 %v1279, %v1276
        %v1315 = vpack.c.bf16 %v1287, %v1284
        %v1316 = vpack.c.bf16 %v1295, %v1292
        %v1317 = vpack.c.bf16 %v1303, %v1300
        %v1318 = vlaneseq
        %v1319 = vshrl.u32 %v1318, 7
        %v1320 = vadd.s32 %v1319, 8
        %v1321 = vadd.s32 %v1319, 16
        %v1322 = vadd.s32 %v1319, 24
        %v1323 = vadd.s32 %v1319, 32
        %v1324 = vadd.s32 %v1319, 40
        %v1325 = vadd.s32 %v1319, 48
        %v1326 = vadd.s32 %v1319, 56
        %v1327 = vlaneseq
        %v1328 = vand.u32 %v1327, 127
        %vm1329 = vcmp.le.s32.totalorder %v1328, %v1319
        %vm1330 = vcmp.le.s32.totalorder %v1328, %v1320
        %vm1331 = vcmp.le.s32.totalorder %v1328, %v1321
        %vm1332 = vcmp.le.s32.totalorder %v1328, %v1322
        %vm1333 = vcmp.le.s32.totalorder %v1328, %v1323
        %vm1334 = vcmp.le.s32.totalorder %v1328, %v1324
        %vm1335 = vcmp.le.s32.totalorder %v1328, %v1325
        %vm1336 = vcmp.le.s32.totalorder %v1328, %v1326
        %vm1337 = vcmask 130048
        %v1339 = vsel %vm1337, %v1306, 0
        %v1342 = vsel %vm1337, %v1307, 0
        %v1345 = vsel %vm1337, %v1308, 0
        %v1348 = vsel %vm1337, %v1309, 0
        %v1351 = vsel %vm1337, %v1310, 0
        %v1354 = vsel %vm1337, %v1311, 0
        %v1357 = vsel %vm1337, %v1312, 0
        %v1360 = vsel %vm1337, %v1313, 0
        %1362 = vmatprep.subr.bf16.mxu0 0
        %1363 = vmatpush1.bf16.xpose.msra.mxu0 %v1351
        %1364 = vmatprep.subr.bf16.mxu0 0
        %1365 = vmatpush1.bf16.xpose.msra.mxu0 %v1354
        %1366 = vmatprep.subr.bf16.mxu0 0
        %1367 = vmatpush1.bf16.xpose.msra.mxu0 %v1357
        %1368 = vmatprep.subr.bf16.mxu0 0
        %1369 = vmatpush1.bf16.xpose.msra.mxu0 %v1360
        %1370 = vmatprep.subr.bf16.mxu0 0
        %1371 = vmatpush1.bf16.xpose.msra.mxu0 0
        %1372 = vmatprep.subr.bf16.mxu0 0
        %1373 = vmatpush1.bf16.xpose.msra.mxu0 0
        %1374 = vmatprep.subr.bf16.mxu0 0
        %1375 = vmatpush1.bf16.xpose.msra.mxu0 0
        %1376 = vmatprep.subr.bf16.mxu0 0
        %1377 = vmatpush1.bf16.xpose.msra.mxu0 0
        %1378 = vmatprep.subr.bf16.mxu0 0
        %1379 = vmatpush1.bf16.xpose.msra.mxu0 0
        %1380 = vmatprep.subr.bf16.mxu0 0
        %1381 = vmatpush1.bf16.xpose.msra.mxu0 0
        %1382 = vmatprep.subr.bf16.mxu0 0
        %1383 = vmatpush1.bf16.xpose.msra.mxu0 0
        %1384 = vmatprep.subr.bf16.mxu0 0
        %1385 = vmatpush1.bf16.xpose.msra.mxu0 0
        %1386 = vmatprep.subr.bf16.mxu0 0
        %1387 = vmatpush1.bf16.xpose.msra.mxu0 0
        %1388 = vmatprep.subr.bf16.mxu0 0
        %1389 = vmatpush1.bf16.xpose.msra.mxu0 0
        %1390 = vmatprep.subr.bf16.mxu0 0
        %1391 = vmatpush1.bf16.xpose.msra.mxu0 0
        %1392 = vmatprep.subr.bf16.mxu0 0
        %1393 = vmatpush1.bf16.xpose.msra.mxu0 0
        %1394 = vmatprep.mubr.bf16.mxu0 0
        %1395 = vmatmul.mubr.bf16.gmra.mrb[0].mxu0 %v1339
        %v1396 = vpop.f32.mrb[0].mxu0
        %v1397 = vadd.f32 0.0, %v1396
        %v1398 = vpop.f32.mrb[0].mxu0
        %v1399 = vpop.f32.mrb[0].mxu0
        %v1400 = vadd.f32 0.0, %v1399
        %v1401 = vpop.f32.mrb[0].mxu0
        %1402 = vmatprep.mubr.bf16.mxu0 0
        %1403 = vmatmul.mubr.bf16.gmra.mrb[0].mxu0 %v1342
        %v1404 = vpop.f32.mrb[0].mxu0
        %v1405 = vadd.f32 0.0, %v1404
        %v1406 = vpop.f32.mrb[0].mxu0
        %v1407 = vpop.f32.mrb[0].mxu0
        %v1408 = vadd.f32 0.0, %v1407
        %v1409 = vpop.f32.mrb[0].mxu0
        %1410 = vmatprep.mubr.bf16.mxu0 0
        %1411 = vmatmul.mubr.bf16.gmra.mrb[0].mxu0 %v1345
        %v1412 = vpop.f32.mrb[0].mxu0
        %v1413 = vadd.f32 0.0, %v1412
        %v1414 = vpop.f32.mrb[0].mxu0
        %v1415 = vpop.f32.mrb[0].mxu0
        %v1416 = vadd.f32 0.0, %v1415
        %v1417 = vpop.f32.mrb[0].mxu0
        %1418 = vmatprep.mubr.bf16.mxu0 0
        %1419 = vmatmul.mubr.bf16.gmra.mrb[0].mxu0 %v1348
        %v1420 = vpop.f32.mrb[0].mxu0
        %v1421 = vadd.f32 0.0, %v1420
        %v1422 = vpop.f32.mrb[0].mxu0
        %v1423 = vpop.f32.mrb[0].mxu0
        %v1424 = vadd.f32 0.0, %v1423
        %v1425 = vpop.f32.mrb[0].mxu0
        %1426 = vdwg.mxu0
        %v1427 = vsel %vm1329, %v1397, -inf
        %v1428 = vsel %vm1330, %v1400, -inf
        %v1429 = vsel %vm1331, %v1405, -inf
        %v1430 = vsel %vm1332, %v1408, -inf
        %v1431 = vsel %vm1333, %v1413, -inf
        %v1432 = vsel %vm1334, %v1416, -inf
        %v1433 = vsel %vm1335, %v1421, -inf
        %v1434 = vsel %vm1336, %v1424, -inf
        %vm1435 = vcmask 523264
        %v1436 = vsel %vm1435, %v1427, -inf
        %1437 = vmax.xlane.f32.xlu0 %v1436
        %v1438 = vpop.xlane.xlu0 %1437
        %v1439 = vsel %vm1435, %v1428, -inf
        %1440 = vmax.xlane.f32.xlu0 %v1439
        %v1441 = vpop.xlane.xlu0 %1440
        %v1442 = vsel %vm1435, %v1429, -inf
        %1443 = vmax.xlane.f32.xlu0 %v1442
        %v1444 = vpop.xlane.xlu0 %1443
        %v1445 = vsel %vm1435, %v1430, -inf
        %1446 = vmax.xlane.f32.xlu0 %v1445
        %v1447 = vpop.xlane.xlu0 %1446
        %v1448 = vsel %vm1435, %v1431, -inf
        %1449 = vmax.xlane.f32.xlu0 %v1448
        %v1450 = vpop.xlane.xlu0 %1449
        %v1451 = vsel %vm1435, %v1432, -inf
        %1452 = vmax.xlane.f32.xlu0 %v1451
        %v1453 = vpop.xlane.xlu0 %1452
        %v1454 = vsel %vm1435, %v1433, -inf
        %1455 = vmax.xlane.f32.xlu0 %v1454
        %v1456 = vpop.xlane.xlu0 %1455
        %v1457 = vsel %vm1435, %v1434, -inf
        %1458 = vmax.xlane.f32.xlu0 %v1457
        %v1459 = vpop.xlane.xlu0 %1458
        %v1460 = vsub.f32 %v1427, %v1438
        %v1461 = vsub.f32 %v1428, %v1441
        %v1462 = vsub.f32 %v1429, %v1444
        %v1463 = vsub.f32 %v1430, %v1447
        %v1464 = vsub.f32 %v1431, %v1450
        %v1465 = vsub.f32 %v1432, %v1453
        %v1466 = vsub.f32 %v1433, %v1456
        %v1467 = vsub.f32 %v1434, %v1459
        %v1468 = vmul.f32 %v1460, 1.442695
        %v1469 = vpow.pop %v1468
        %v1470 = vmul.f32 %v1461, 1.442695
        %v1471 = vpow.pop %v1470
        %v1472 = vmul.f32 %v1462, 1.442695
        %v1473 = vpow.pop %v1472
        %v1474 = vmul.f32 %v1463, 1.442695
        %v1475 = vpow.pop %v1474
        %v1476 = vmul.f32 %v1464, 1.442695
        %v1477 = vpow.pop %v1476
        %v1478 = vmul.f32 %v1465, 1.442695
        %v1479 = vpow.pop %v1478
        %v1480 = vmul.f32 %v1466, 1.442695
        %v1481 = vpow.pop %v1480
        %v1482 = vmul.f32 %v1467, 1.442695
        %v1483 = vpow.pop %v1482
        %v1484 = vsel %vm1435, %v1469, 0.0
        %1485 = vadd.xlane.f32.xlu0 %v1484
        %v1486 = vpop.xlane.xlu0 %1485
        %v1487 = vsel %vm1435, %v1471, 0.0
        %1488 = vadd.xlane.f32.xlu0 %v1487
        %v1489 = vpop.xlane.xlu0 %1488
        %v1490 = vsel %vm1435, %v1473, 0.0
        %1491 = vadd.xlane.f32.xlu0 %v1490
        %v1492 = vpop.xlane.xlu0 %1491
        %v1493 = vsel %vm1435, %v1475, 0.0
        %1494 = vadd.xlane.f32.xlu0 %v1493
        %v1495 = vpop.xlane.xlu0 %1494
        %v1496 = vsel %vm1435, %v1477, 0.0
        %1497 = vadd.xlane.f32.xlu0 %v1496
        %v1498 = vpop.xlane.xlu0 %1497
        %v1499 = vsel %vm1435, %v1479, 0.0
        %1500 = vadd.xlane.f32.xlu0 %v1499
        %v1501 = vpop.xlane.xlu0 %1500
        %v1502 = vsel %vm1435, %v1481, 0.0
        %1503 = vadd.xlane.f32.xlu0 %v1502
        %v1504 = vpop.xlane.xlu0 %1503
        %v1505 = vsel %vm1435, %v1483, 0.0
        %1506 = vadd.xlane.f32.xlu0 %v1505
        %v1507 = vpop.xlane.xlu0 %1506
        %v1508 = vrcp.pop %v1486
        %v1509 = vrcp.pop %v1489
        %v1510 = vrcp.pop %v1492
        %v1511 = vrcp.pop %v1495
        %v1512 = vrcp.pop %v1498
        %v1513 = vrcp.pop %v1501
        %v1514 = vrcp.pop %v1504
        %v1515 = vrcp.pop %v1507
        %v1516 = vmul.f32 %v1469, %v1508
        %v1517 = vmul.f32 %v1471, %v1509
        %v1518 = vmul.f32 %v1473, %v1510
        %v1519 = vmul.f32 %v1475, %v1511
        %v1520 = vmul.f32 %v1477, %v1512
        %v1521 = vmul.f32 %v1479, %v1513
        %v1522 = vmul.f32 %v1481, %v1514
        %v1523 = vmul.f32 %v1483, %v1515
        %v1524 = vpack.c.bf16 %v1517, %v1516
        %v1525 = vpack.c.bf16 %v1519, %v1518
        %v1526 = vpack.c.bf16 %v1521, %v1520
        %v1527 = vpack.c.bf16 %v1523, %v1522
        %v1529 = vsel %vm1435, %v1524, 0
        %v1532 = vsel %vm1435, %v1525, 0
        %v1535 = vsel %vm1435, %v1526, 0
        %v1538 = vsel %vm1435, %v1527, 0
        %1540 = vmatprep.subr.bf16.mxu0 0
        %1541 = vmatpush1.bf16.msra.mxu0 %v1314
        %1542 = vmatprep.subr.bf16.mxu0 0
        %1543 = vmatpush1.bf16.msra.mxu0 %v1315
        %1544 = vmatprep.subr.bf16.mxu0 0
        %1545 = vmatpush1.bf16.msra.mxu0 %v1316
        %1546 = vmatprep.subr.bf16.mxu0 0
        %1547 = vmatpush1.bf16.msra.mxu0 %v1317
        %1548 = vmatprep.subr.bf16.mxu0 0
        %1549 = vmatpush1.bf16.msra.mxu0 0
        %1550 = vmatprep.subr.bf16.mxu0 0
        %1551 = vmatpush1.bf16.msra.mxu0 0
        %1552 = vmatprep.subr.bf16.mxu0 0
        %1553 = vmatpush1.bf16.msra.mxu0 0
        %1554 = vmatprep.subr.bf16.mxu0 0
        %1555 = vmatpush1.bf16.msra.mxu0 0
        %1556 = vmatprep.subr.bf16.mxu0 0
        %1557 = vmatpush1.bf16.msra.mxu0 0
        %1558 = vmatprep.subr.bf16.mxu0 0
        %1559 = vmatpush1.bf16.msra.mxu0 0
        %1560 = vmatprep.subr.bf16.mxu0 0
        %1561 = vmatpush1.bf16.msra.mxu0 0
        %1562 = vmatprep.subr.bf16.mxu0 0
        %1563 = vmatpush1.bf16.msra.mxu0 0
        %1564 = vmatprep.subr.bf16.mxu0 0
        %1565 = vmatpush1.bf16.msra.mxu0 0
        %1566 = vmatprep.subr.bf16.mxu0 0
        %1567 = vmatpush1.bf16.msra.mxu0 0
        %1568 = vmatprep.subr.bf16.mxu0 0
        %1569 = vmatpush1.bf16.msra.mxu0 0
        %1570 = vmatprep.subr.bf16.mxu0 0
        %1571 = vmatpush1.bf16.msra.mxu0 0
        %1572 = vmatprep.mubr.bf16.mxu0 0
        %1573 = vmatmul.mubr.bf16.gmra.mrb[0].mxu0 %v1529
        %v1574 = vpop.f32.mrb[0].mxu0
        %v1575 = vadd.f32 0.0, %v1574
        %v1576 = vpop.f32.mrb[0].mxu0
        %v1577 = vpop.f32.mrb[0].mxu0
        %v1578 = vadd.f32 0.0, %v1577
        %v1579 = vpop.f32.mrb[0].mxu0
        %1580 = vmatprep.mubr.bf16.mxu0 0
        %1581 = vmatmul.mubr.bf16.gmra.mrb[0].mxu0 %v1532
        %v1582 = vpop.f32.mrb[0].mxu0
        %v1583 = vadd.f32 0.0, %v1582
        %v1584 = vpop.f32.mrb[0].mxu0
        %v1585 = vpop.f32.mrb[0].mxu0
        %v1586 = vadd.f32 0.0, %v1585
        %v1587 = vpop.f32.mrb[0].mxu0
        %1588 = vmatprep.mubr.bf16.mxu0 0
        %1589 = vmatmul.mubr.bf16.gmra.mrb[0].mxu0 %v1535
        %v1590 = vpop.f32.mrb[0].mxu0
        %v1591 = vadd.f32 0.0, %v1590
        %v1592 = vpop.f32.mrb[0].mxu0
        %v1593 = vpop.f32.mrb[0].mxu0
        %v1594 = vadd.f32 0.0, %v1593
        %v1595 = vpop.f32.mrb[0].mxu0
        %1596 = vmatprep.mubr.bf16.mxu0 0
        %1597 = vmatmul.mubr.bf16.gmra.mrb[0].mxu0 %v1538
        %v1598 = vpop.f32.mrb[0].mxu0
        %v1599 = vadd.f32 0.0, %v1598
        %v1600 = vpop.f32.mrb[0].mxu0
        %v1601 = vpop.f32.mrb[0].mxu0
        %v1602 = vadd.f32 0.0, %v1601
        %v1603 = vpop.f32.mrb[0].mxu0
        %1604 = vdwg.mxu0
        %v1605 = vpack.c.bf16 %v1578, %v1575
        %v1606 = vpack.c.bf16 %v1586, %v1583
        %v1607 = vpack.c.bf16 %v1594, %v1591
        %v1608 = vpack.c.bf16 %v1602, %v1599
        %1609 = vst.msk [vmem:[#allocation3] sm:$0xff] %vm1337, %v1605
        %1610 = vst.msk [vmem:[#allocation3 + $0x8] sm:$0xff] %vm1337, %v1606
        %1611 = vst.msk [vmem:[#allocation3 + $0x10] sm:$0xff] %vm1337, %v1607
        %1612 = vst.msk [vmem:[#allocation3 + $0x18] sm:$0xff] %vm1337, %v1608
        %1617 = vrot.lane.b32.xlu0 %v1306, 112
        %v1618 = vpop.permute.xlu0 %1617
        %1619 = vrot.lane.b32.xlu0 %v1307, 112
        %v1620 = vpop.permute.xlu0 %1619
        %1621 = vrot.lane.b32.xlu0 %v1308, 112
        %v1622 = vpop.permute.xlu0 %1621
        %1623 = vrot.lane.b32.xlu0 %v1309, 112
        %v1624 = vpop.permute.xlu0 %1623
        %1629 = vrot.lane.b32.xlu0 %v1310, 112
        %v1630 = vpop.permute.xlu0 %1629
        %1631 = vrot.lane.b32.xlu0 %v1311, 112
        %v1632 = vpop.permute.xlu0 %1631
        %1633 = vrot.lane.b32.xlu0 %v1312, 112
        %v1634 = vpop.permute.xlu0 %1633
        %1635 = vrot.lane.b32.xlu0 %v1313, 112
        %v1636 = vpop.permute.xlu0 %1635
        %v1638 = vsel %vm1337, %v1618, 0
        %v1641 = vsel %vm1337, %v1620, 0
        %v1644 = vsel %vm1337, %v1622, 0
        %v1647 = vsel %vm1337, %v1624, 0
        %v1650 = vsel %vm1337, %v1630, 0
        %v1653 = vsel %vm1337, %v1632, 0
        %v1656 = vsel %vm1337, %v1634, 0
        %v1659 = vsel %vm1337, %v1636, 0
        %1661 = vmatprep.subr.bf16.mxu0 0
        %1662 = vmatpush1.bf16.xpose.msra.mxu0 %v1650
        %1663 = vmatprep.subr.bf16.mxu0 0
        %1664 = vmatpush1.bf16.xpose.msra.mxu0 %v1653
        %1665 = vmatprep.subr.bf16.mxu0 0
        %1666 = vmatpush1.bf16.xpose.msra.mxu0 %v1656
        %1667 = vmatprep.subr.bf16.mxu0 0
        %1668 = vmatpush1.bf16.xpose.msra.mxu0 %v1659
        %1669 = vmatprep.subr.bf16.mxu0 0
        %1670 = vmatpush1.bf16.xpose.msra.mxu0 0
        %1671 = vmatprep.subr.bf16.mxu0 0
        %1672 = vmatpush1.bf16.xpose.msra.mxu0 0
        %1673 = vmatprep.subr.bf16.mxu0 0
        %1674 = vmatpush1.bf16.xpose.msra.mxu0 0
        %1675 = vmatprep.subr.bf16.mxu0 0
        %1676 = vmatpush1.bf16.xpose.msra.mxu0 0
        %1677 = vmatprep.subr.bf16.mxu0 0
        %1678 = vmatpush1.bf16.xpose.msra.mxu0 0
        %1679 = vmatprep.subr.bf16.mxu0 0
        %1680 = vmatpush1.bf16.xpose.msra.mxu0 0
        %1681 = vmatprep.subr.bf16.mxu0 0
        %1682 = vmatpush1.bf16.xpose.msra.mxu0 0
        %1683 = vmatprep.subr.bf16.mxu0 0
        %1684 = vmatpush1.bf16.xpose.msra.mxu0 0
        %1685 = vmatprep.subr.bf16.mxu0 0
        %1686 = vmatpush1.bf16.xpose.msra.mxu0 0
        %1687 = vmatprep.subr.bf16.mxu0 0
        %1688 = vmatpush1.bf16.xpose.msra.mxu0 0
        %1689 = vmatprep.subr.bf16.mxu0 0
        %1690 = vmatpush1.bf16.xpose.msra.mxu0 0
        %1691 = vmatprep.subr.bf16.mxu0 0
        %1692 = vmatpush1.bf16.xpose.msra.mxu0 0
        %1693 = vmatprep.mubr.bf16.mxu0 0
        %1694 = vmatmul.mubr.bf16.gmra.mrb[0].mxu0 %v1638
        %v1695 = vpop.f32.mrb[0].mxu0
        %v1696 = vadd.f32 0.0, %v1695
        %v1697 = vpop.f32.mrb[0].mxu0
        %v1698 = vpop.f32.mrb[0].mxu0
        %v1699 = vadd.f32 0.0, %v1698
        %v1700 = vpop.f32.mrb[0].mxu0
        %1701 = vmatprep.mubr.bf16.mxu0 0
        %1702 = vmatmul.mubr.bf16.gmra.mrb[0].mxu0 %v1641
        %v1703 = vpop.f32.mrb[0].mxu0
        %v1704 = vadd.f32 0.0, %v1703
        %v1705 = vpop.f32.mrb[0].mxu0
        %v1706 = vpop.f32.mrb[0].mxu0
        %v1707 = vadd.f32 0.0, %v1706
        %v1708 = vpop.f32.mrb[0].mxu0
        %1709 = vmatprep.mubr.bf16.mxu0 0
        %1710 = vmatmul.mubr.bf16.gmra.mrb[0].mxu0 %v1644
        %v1711 = vpop.f32.mrb[0].mxu0
        %v1712 = vadd.f32 0.0, %v1711
        %v1713 = vpop.f32.mrb[0].mxu0
        %v1714 = vpop.f32.mrb[0].mxu0
        %v1715 = vadd.f32 0.0, %v1714
        %v1716 = vpop.f32.mrb[0].mxu0
        %1717 = vmatprep.mubr.bf16.mxu0 0
        %1718 = vmatmul.mubr.bf16.gmra.mrb[0].mxu0 %v1647
        %v1719 = vpop.f32.mrb[0].mxu0
        %v1720 = vadd.f32 0.0, %v1719
        %v1721 = vpop.f32.mrb[0].mxu0
        %v1722 = vpop.f32.mrb[0].mxu0
        %v1723 = vadd.f32 0.0, %v1722
        %v1724 = vpop.f32.mrb[0].mxu0
        %1725 = vdwg.mxu0
        %v1726 = vsel %vm1329, %v1696, -inf
        %v1727 = vsel %vm1330, %v1699, -inf
        %v1728 = vsel %vm1331, %v1704, -inf
        %v1729 = vsel %vm1332, %v1707, -inf
        %v1730 = vsel %vm1333, %v1712, -inf
        %v1731 = vsel %vm1334, %v1715, -inf
        %v1732 = vsel %vm1335, %v1720, -inf
        %v1733 = vsel %vm1336, %v1723, -inf
        %v1734 = vsel %vm1435, %v1726, -inf
        %1735 = vmax.xlane.f32.xlu0 %v1734
        %v1736 = vpop.xlane.xlu0 %1735
        %v1737 = vsel %vm1435, %v1727, -inf
        %1738 = vmax.xlane.f32.xlu0 %v1737
        %v1739 = vpop.xlane.xlu0 %1738
        %v1740 = vsel %vm1435, %v1728, -inf
        %1741 = vmax.xlane.f32.xlu0 %v1740
        %v1742 = vpop.xlane.xlu0 %1741
        %v1743 = vsel %vm1435, %v1729, -inf
        %1744 = vmax.xlane.f32.xlu0 %v1743
        %v1745 = vpop.xlane.xlu0 %1744
        %v1746 = vsel %vm1435, %v1730, -inf
        %1747 = vmax.xlane.f32.xlu0 %v1746
        %v1748 = vpop.xlane.xlu0 %1747
        %v1749 = vsel %vm1435, %v1731, -inf
        %1750 = vmax.xlane.f32.xlu0 %v1749
        %v1751 = vpop.xlane.xlu0 %1750
        %v1752 = vsel %vm1435, %v1732, -inf
        %1753 = vmax.xlane.f32.xlu0 %v1752
        %v1754 = vpop.xlane.xlu0 %1753
        %v1755 = vsel %vm1435, %v1733, -inf
        %1756 = vmax.xlane.f32.xlu0 %v1755
        %v1757 = vpop.xlane.xlu0 %1756
        %v1758 = vsub.f32 %v1726, %v1736
        %v1759 = vsub.f32 %v1727, %v1739
        %v1760 = vsub.f32 %v1728, %v1742
        %v1761 = vsub.f32 %v1729, %v1745
        %v1762 = vsub.f32 %v1730, %v1748
        %v1763 = vsub.f32 %v1731, %v1751
        %v1764 = vsub.f32 %v1732, %v1754
        %v1765 = vsub.f32 %v1733, %v1757
        %v1766 = vmul.f32 %v1758, 1.442695
        %v1767 = vpow.pop %v1766
        %v1768 = vmul.f32 %v1759, 1.442695
        %v1769 = vpow.pop %v1768
        %v1770 = vmul.f32 %v1760, 1.442695
        %v1771 = vpow.pop %v1770
        %v1772 = vmul.f32 %v1761, 1.442695
        %v1773 = vpow.pop %v1772
        %v1774 = vmul.f32 %v1762, 1.442695
        %v1775 = vpow.pop %v1774
        %v1776 = vmul.f32 %v1763, 1.442695
        %v1777 = vpow.pop %v1776
        %v1778 = vmul.f32 %v1764, 1.442695
        %v1779 = vpow.pop %v1778
        %v1780 = vmul.f32 %v1765, 1.442695
        %v1781 = vpow.pop %v1780
        %v1782 = vsel %vm1435, %v1767, 0.0
        %1783 = vadd.xlane.f32.xlu0 %v1782
        %v1784 = vpop.xlane.xlu0 %1783
        %v1785 = vsel %vm1435, %v1769, 0.0
        %1786 = vadd.xlane.f32.xlu0 %v1785
        %v1787 = vpop.xlane.xlu0 %1786
        %v1788 = vsel %vm1435, %v1771, 0.0
        %1789 = vadd.xlane.f32.xlu0 %v1788
        %v1790 = vpop.xlane.xlu0 %1789
        %v1791 = vsel %vm1435, %v1773, 0.0
        %1792 = vadd.xlane.f32.xlu0 %v1791
        %v1793 = vpop.xlane.xlu0 %1792
        %v1794 = vsel %vm1435, %v1775, 0.0
        %1795 = vadd.xlane.f32.xlu0 %v1794
        %v1796 = vpop.xlane.xlu0 %1795
        %v1797 = vsel %vm1435, %v1777, 0.0
        %1798 = vadd.xlane.f32.xlu0 %v1797
        %v1799 = vpop.xlane.xlu0 %1798
        %v1800 = vsel %vm1435, %v1779, 0.0
        %1801 = vadd.xlane.f32.xlu0 %v1800
        %v1802 = vpop.xlane.xlu0 %1801
        %v1803 = vsel %vm1435, %v1781, 0.0
        %1804 = vadd.xlane.f32.xlu0 %v1803
        %v1805 = vpop.xlane.xlu0 %1804
        %v1806 = vrcp.pop %v1784
        %v1807 = vrcp.pop %v1787
        %v1808 = vrcp.pop %v1790
        %v1809 = vrcp.pop %v1793
        %v1810 = vrcp.pop %v1796
        %v1811 = vrcp.pop %v1799
        %v1812 = vrcp.pop %v1802
        %v1813 = vrcp.pop %v1805
        %v1814 = vmul.f32 %v1767, %v1806
        %v1815 = vmul.f32 %v1769, %v1807
        %v1816 = vmul.f32 %v1771, %v1808
        %v1817 = vmul.f32 %v1773, %v1809
        %v1818 = vmul.f32 %v1775, %v1810
        %v1819 = vmul.f32 %v1777, %v1811
        %v1820 = vmul.f32 %v1779, %v1812
        %v1821 = vmul.f32 %v1781, %v1813
        %v1822 = vpack.c.bf16 %v1815, %v1814
        %v1823 = vpack.c.bf16 %v1817, %v1816
        %v1824 = vpack.c.bf16 %v1819, %v1818
        %v1825 = vpack.c.bf16 %v1821, %v1820
        %1830 = vrot.lane.b32.xlu0 %v1314, 112
        %v1831 = vpop.permute.xlu0 %1830
        %1832 = vrot.lane.b32.xlu0 %v1315, 112
        %v1833 = vpop.permute.xlu0 %1832
        %1834 = vrot.lane.b32.xlu0 %v1316, 112
        %v1835 = vpop.permute.xlu0 %1834
        %1836 = vrot.lane.b32.xlu0 %v1317, 112
        %v1837 = vpop.permute.xlu0 %1836
        %v1843 = vsel %vm1435, %v1822, 0
        %v1846 = vsel %vm1435, %v1823, 0
        %v1849 = vsel %vm1435, %v1824, 0
        %v1852 = vsel %vm1435, %v1825, 0
        %1854 = vmatprep.subr.bf16.mxu0 0
        %1855 = vmatpush1.bf16.msra.mxu0 %v1831
        %1856 = vmatprep.subr.bf16.mxu0 0
        %1857 = vmatpush1.bf16.msra.mxu0 %v1833
        %1858 = vmatprep.subr.bf16.mxu0 0
        %1859 = vmatpush1.bf16.msra.mxu0 %v1835
        %1860 = vmatprep.subr.bf16.mxu0 0
        %1861 = vmatpush1.bf16.msra.mxu0 %v1837
        %1862 = vmatprep.subr.bf16.mxu0 0
        %1863 = vmatpush1.bf16.msra.mxu0 0
        %1864 = vmatprep.subr.bf16.mxu0 0
        %1865 = vmatpush1.bf16.msra.mxu0 0
        %1866 = vmatprep.subr.bf16.mxu0 0
        %1867 = vmatpush1.bf16.msra.mxu0 0
        %1868 = vmatprep.subr.bf16.mxu0 0
        %1869 = vmatpush1.bf16.msra.mxu0 0
        %1870 = vmatprep.subr.bf16.mxu0 0
        %1871 = vmatpush1.bf16.msra.mxu0 0
        %1872 = vmatprep.subr.bf16.mxu0 0
        %1873 = vmatpush1.bf16.msra.mxu0 0
        %1874 = vmatprep.subr.bf16.mxu0 0
        %1875 = vmatpush1.bf16.msra.mxu0 0
        %1876 = vmatprep.subr.bf16.mxu0 0
        %1877 = vmatpush1.bf16.msra.mxu0 0
        %1878 = vmatprep.subr.bf16.mxu0 0
        %1879 = vmatpush1.bf16.msra.mxu0 0
        %1880 = vmatprep.subr.bf16.mxu0 0
        %1881 = vmatpush1.bf16.msra.mxu0 0
        %1882 = vmatprep.subr.bf16.mxu0 0
        %1883 = vmatpush1.bf16.msra.mxu0 0
        %1884 = vmatprep.subr.bf16.mxu0 0
        %1885 = vmatpush1.bf16.msra.mxu0 0
        %1886 = vmatprep.mubr.bf16.mxu0 0
        %1887 = vmatmul.mubr.bf16.gmra.mrb[0].mxu0 %v1843
        %v1888 = vpop.f32.mrb[0].mxu0
        %v1889 = vadd.f32 0.0, %v1888
        %v1890 = vpop.f32.mrb[0].mxu0
        %v1891 = vpop.f32.mrb[0].mxu0
        %v1892 = vadd.f32 0.0, %v1891
        %v1893 = vpop.f32.mrb[0].mxu0
        %1894 = vmatprep.mubr.bf16.mxu0 0
        %1895 = vmatmul.mubr.bf16.gmra.mrb[0].mxu0 %v1846
        %v1896 = vpop.f32.mrb[0].mxu0
        %v1897 = vadd.f32 0.0, %v1896
        %v1898 = vpop.f32.mrb[0].mxu0
        %v1899 = vpop.f32.mrb[0].mxu0
        %v1900 = vadd.f32 0.0, %v1899
        %v1901 = vpop.f32.mrb[0].mxu0
        %1902 = vmatprep.mubr.bf16.mxu0 0
        %1903 = vmatmul.mubr.bf16.gmra.mrb[0].mxu0 %v1849
        %v1904 = vpop.f32.mrb[0].mxu0
        %v1905 = vadd.f32 0.0, %v1904
        %v1906 = vpop.f32.mrb[0].mxu0
        %v1907 = vpop.f32.mrb[0].mxu0
        %v1908 = vadd.f32 0.0, %v1907
        %v1909 = vpop.f32.mrb[0].mxu0
        %1910 = vmatprep.mubr.bf16.mxu0 0
        %1911 = vmatmul.mubr.bf16.gmra.mrb[0].mxu0 %v1852
        %v1912 = vpop.f32.mrb[0].mxu0
        %v1913 = vadd.f32 0.0, %v1912
        %v1914 = vpop.f32.mrb[0].mxu0
        %v1915 = vpop.f32.mrb[0].mxu0
        %v1916 = vadd.f32 0.0, %v1915
        %v1917 = vpop.f32.mrb[0].mxu0
        %1918 = vdwg.mxu0
        %v1919 = vpack.c.bf16 %v1892, %v1889
        %v1920 = vpack.c.bf16 %v1900, %v1897
        %v1921 = vpack.c.bf16 %v1908, %v1905
        %v1922 = vpack.c.bf16 %v1916, %v1913
        %1927 = vrot.lane.b32.xlu0 %v1919, 16
        %v1928 = vpop.permute.xlu0 %1927
        %1929 = vrot.lane.b32.xlu0 %v1920, 16
        %v1930 = vpop.permute.xlu0 %1929
        %1931 = vrot.lane.b32.xlu0 %v1921, 16
        %v1932 = vpop.permute.xlu0 %1931
        %1933 = vrot.lane.b32.xlu0 %v1922, 16
        %v1934 = vpop.permute.xlu0 %1933
        %vm1939 = vcmask 261248
        %1940 = vst.msk [vmem:[#allocation3] sm:$0xff] %vm1939, %v1928
        %1941 = vst.msk [vmem:[#allocation3 + $0x8] sm:$0xff] %vm1939, %v1930
        %1942 = vst.msk [vmem:[#allocation3 + $0x10] sm:$0xff] %vm1939, %v1932
        %1943 = vst.msk [vmem:[#allocation3 + $0x18] sm:$0xff] %vm1939, %v1934
        %1944 = vrot.lane.b32.xlu0 %v1306, 96
        %v1945 = vpop.permute.xlu0 %1944
        %1946 = vrot.lane.b32.xlu0 %v1307, 96
        %v1947 = vpop.permute.xlu0 %1946
        %1948 = vrot.lane.b32.xlu0 %v1308, 96
        %v1949 = vpop.permute.xlu0 %1948
        %1950 = vrot.lane.b32.xlu0 %v1309, 96
        %v1951 = vpop.permute.xlu0 %1950
        %1952 = vrot.lane.b32.xlu0 %v1310, 96
        %v1953 = vpop.permute.xlu0 %1952
        %1954 = vrot.lane.b32.xlu0 %v1311, 96
        %v1955 = vpop.permute.xlu0 %1954
        %1956 = vrot.lane.b32.xlu0 %v1312, 96
        %v1957 = vpop.permute.xlu0 %1956
        %1958 = vrot.lane.b32.xlu0 %v1313, 96
        %v1959 = vpop.permute.xlu0 %1958
        %v1961 = vsel %vm1337, %v1945, 0
        %v1964 = vsel %vm1337, %v1947, 0
        %v1967 = vsel %vm1337, %v1949, 0
        %v1970 = vsel %vm1337, %v1951, 0
        %v1973 = vsel %vm1337, %v1953, 0
        %v1976 = vsel %vm1337, %v1955, 0
        %v1979 = vsel %vm1337, %v1957, 0
        %v1982 = vsel %vm1337, %v1959, 0
        %1984 = vmatprep.subr.bf16.mxu0 0
        %1985 = vmatpush1.bf16.xpose.msra.mxu0 %v1973
        %1986 = vmatprep.subr.bf16.mxu0 0
        %1987 = vmatpush1.bf16.xpose.msra.mxu0 %v1976
        %1988 = vmatprep.subr.bf16.mxu0 0
        %1989 = vmatpush1.bf16.xpose.msra.mxu0 %v1979
        %1990 = vmatprep.subr.bf16.mxu0 0
        %1991 = vmatpush1.bf16.xpose.msra.mxu0 %v1982
        %1992 = vmatprep.subr.bf16.mxu0 0
        %1993 = vmatpush1.bf16.xpose.msra.mxu0 0
        %1994 = vmatprep.subr.bf16.mxu0 0
        %1995 = vmatpush1.bf16.xpose.msra.mxu0 0
        %1996 = vmatprep.subr.bf16.mxu0 0
        %1997 = vmatpush1.bf16.xpose.msra.mxu0 0
        %1998 = vmatprep.subr.bf16.mxu0 0
        %1999 = vmatpush1.bf16.xpose.msra.mxu0 0
        %2000 = vmatprep.subr.bf16.mxu0 0
        %2001 = vmatpush1.bf16.xpose.msra.mxu0 0
        %2002 = vmatprep.subr.bf16.mxu0 0
        %2003 = vmatpush1.bf16.xpose.msra.mxu0 0
        %2004 = vmatprep.subr.bf16.mxu0 0
        %2005 = vmatpush1.bf16.xpose.msra.mxu0 0
        %2006 = vmatprep.subr.bf16.mxu0 0
        %2007 = vmatpush1.bf16.xpose.msra.mxu0 0
        %2008 = vmatprep.subr.bf16.mxu0 0
        %2009 = vmatpush1.bf16.xpose.msra.mxu0 0
        %2010 = vmatprep.subr.bf16.mxu0 0
        %2011 = vmatpush1.bf16.xpose.msra.mxu0 0
        %2012 = vmatprep.subr.bf16.mxu0 0
        %2013 = vmatpush1.bf16.xpose.msra.mxu0 0
        %2014 = vmatprep.subr.bf16.mxu0 0
        %2015 = vmatpush1.bf16.xpose.msra.mxu0 0
        %2016 = vmatprep.mubr.bf16.mxu0 0
        %2017 = vmatmul.mubr.bf16.gmra.mrb[0].mxu0 %v1961
        %v2018 = vpop.f32.mrb[0].mxu0
        %v2019 = vadd.f32 0.0, %v2018
        %v2020 = vpop.f32.mrb[0].mxu0
        %v2021 = vpop.f32.mrb[0].mxu0
        %v2022 = vadd.f32 0.0, %v2021
        %v2023 = vpop.f32.mrb[0].mxu0
        %2024 = vmatprep.mubr.bf16.mxu0 0
        %2025 = vmatmul.mubr.bf16.gmra.mrb[0].mxu0 %v1964
        %v2026 = vpop.f32.mrb[0].mxu0
        %v2027 = vadd.f32 0.0, %v2026
        %v2028 = vpop.f32.mrb[0].mxu0
        %v2029 = vpop.f32.mrb[0].mxu0
        %v2030 = vadd.f32 0.0, %v2029
        %v2031 = vpop.f32.mrb[0].mxu0
        %2032 = vmatprep.mubr.bf16.mxu0 0
        %2033 = vmatmul.mubr.bf16.gmra.mrb[0].mxu0 %v1967
        %v2034 = vpop.f32.mrb[0].mxu0
        %v2035 = vadd.f32 0.0, %v2034
        %v2036 = vpop.f32.mrb[0].mxu0
        %v2037 = vpop.f32.mrb[0].mxu0
        %v2038 = vadd.f32 0.0, %v2037
        %v2039 = vpop.f32.mrb[0].mxu0
        %2040 = vmatprep.mubr.bf16.mxu0 0
        %2041 = vmatmul.mubr.bf16.gmra.mrb[0].mxu0 %v1970
        %v2042 = vpop.f32.mrb[0].mxu0
        %v2043 = vadd.f32 0.0, %v2042
        %v2044 = vpop.f32.mrb[0].mxu0
        %v2045 = vpop.f32.mrb[0].mxu0
        %v2046 = vadd.f32 0.0, %v2045
        %v2047 = vpop.f32.mrb[0].mxu0
        %2048 = vdwg.mxu0
        %v2049 = vsel %vm1329, %v2019, -inf
        %v2050 = vsel %vm1330, %v2022, -inf
        %v2051 = vsel %vm1331, %v2027, -inf
        %v2052 = vsel %vm1332, %v2030, -inf
        %v2053 = vsel %vm1333, %v2035, -inf
        %v2054 = vsel %vm1334, %v2038, -inf
        %v2055 = vsel %vm1335, %v2043, -inf
        %v2056 = vsel %vm1336, %v2046, -inf
        %v2057 = vsel %vm1435, %v2049, -inf
        %2058 = vmax.xlane.f32.xlu0 %v2057
        %v2059 = vpop.xlane.xlu0 %2058
        %v2060 = vsel %vm1435, %v2050, -inf
        %2061 = vmax.xlane.f32.xlu0 %v2060
        %v2062 = vpop.xlane.xlu0 %2061
        %v2063 = vsel %vm1435, %v2051, -inf
        %2064 = vmax.xlane.f32.xlu0 %v2063
        %v2065 = vpop.xlane.xlu0 %2064
        %v2066 = vsel %vm1435, %v2052, -inf
        %2067 = vmax.xlane.f32.xlu0 %v2066
        %v2068 = vpop.xlane.xlu0 %2067
        %v2069 = vsel %vm1435, %v2053, -inf
        %2070 = vmax.xlane.f32.xlu0 %v2069
        %v2071 = vpop.xlane.xlu0 %2070
        %v2072 = vsel %vm1435, %v2054, -inf
        %2073 = vmax.xlane.f32.xlu0 %v2072
        %v2074 = vpop.xlane.xlu0 %2073
        %v2075 = vsel %vm1435, %v2055, -inf
        %2076 = vmax.xlane.f32.xlu0 %v2075
        %v2077 = vpop.xlane.xlu0 %2076
        %v2078 = vsel %vm1435, %v2056, -inf
        %2079 = vmax.xlane.f32.xlu0 %v2078
        %v2080 = vpop.xlane.xlu0 %2079
        %v2081 = vsub.f32 %v2049, %v2059
        %v2082 = vsub.f32 %v2050, %v2062
        %v2083 = vsub.f32 %v2051, %v2065
        %v2084 = vsub.f32 %v2052, %v2068
        %v2085 = vsub.f32 %v2053, %v2071
        %v2086 = vsub.f32 %v2054, %v2074
        %v2087 = vsub.f32 %v2055, %v2077
        %v2088 = vsub.f32 %v2056, %v2080
        %v2089 = vmul.f32 %v2081, 1.442695
        %v2090 = vpow.pop %v2089
        %v2091 = vmul.f32 %v2082, 1.442695
        %v2092 = vpow.pop %v2091
        %v2093 = vmul.f32 %v2083, 1.442695
        %v2094 = vpow.pop %v2093
        %v2095 = vmul.f32 %v2084, 1.442695
        %v2096 = vpow.pop %v2095
        %v2097 = vmul.f32 %v2085, 1.442695
        %v2098 = vpow.pop %v2097
        %v2099 = vmul.f32 %v2086, 1.442695
        %v2100 = vpow.pop %v2099
        %v2101 = vmul.f32 %v2087, 1.442695
        %v2102 = vpow.pop %v2101
        %v2103 = vmul.f32 %v2088, 1.442695
        %v2104 = vpow.pop %v2103
        %v2105 = vsel %vm1435, %v2090, 0.0
        %2106 = vadd.xlane.f32.xlu0 %v2105
        %v2107 = vpop.xlane.xlu0 %2106
        %v2108 = vsel %vm1435, %v2092, 0.0
        %2109 = vadd.xlane.f32.xlu0 %v2108
        %v2110 = vpop.xlane.xlu0 %2109
        %v2111 = vsel %vm1435, %v2094, 0.0
        %2112 = vadd.xlane.f32.xlu0 %v2111
        %v2113 = vpop.xlane.xlu0 %2112
        %v2114 = vsel %vm1435, %v2096, 0.0
        %2115 = vadd.xlane.f32.xlu0 %v2114
        %v2116 = vpop.xlane.xlu0 %2115
        %v2117 = vsel %vm1435, %v2098, 0.0
        %2118 = vadd.xlane.f32.xlu0 %v2117
        %v2119 = vpop.xlane.xlu0 %2118
        %v2120 = vsel %vm1435, %v2100, 0.0
        %2121 = vadd.xlane.f32.xlu0 %v2120
        %v2122 = vpop.xlane.xlu0 %2121
        %v2123 = vsel %vm1435, %v2102, 0.0
        %2124 = vadd.xlane.f32.xlu0 %v2123
        %v2125 = vpop.xlane.xlu0 %2124
        %v2126 = vsel %vm1435, %v2104, 0.0
        %2127 = vadd.xlane.f32.xlu0 %v2126
        %v2128 = vpop.xlane.xlu0 %2127
        %v2129 = vrcp.pop %v2107
        %v2130 = vrcp.pop %v2110
        %v2131 = vrcp.pop %v2113
        %v2132 = vrcp.pop %v2116
        %v2133 = vrcp.pop %v2119
        %v2134 = vrcp.pop %v2122
        %v2135 = vrcp.pop %v2125
        %v2136 = vrcp.pop %v2128
        %v2137 = vmul.f32 %v2090, %v2129
        %v2138 = vmul.f32 %v2092, %v2130
        %v2139 = vmul.f32 %v2094, %v2131
        %v2140 = vmul.f32 %v2096, %v2132
        %v2141 = vmul.f32 %v2098, %v2133
        %v2142 = vmul.f32 %v2100, %v2134
        %v2143 = vmul.f32 %v2102, %v2135
        %v2144 = vmul.f32 %v2104, %v2136
        %v2145 = vpack.c.bf16 %v2138, %v2137
        %v2146 = vpack.c.bf16 %v2140, %v2139
        %v2147 = vpack.c.bf16 %v2142, %v2141
        %v2148 = vpack.c.bf16 %v2144, %v2143
        %2149 = vrot.lane.b32.xlu0 %v1314, 96
        %v2150 = vpop.permute.xlu0 %2149
        %2151 = vrot.lane.b32.xlu0 %v1315, 96
        %v2152 = vpop.permute.xlu0 %2151
        %2153 = vrot.lane.b32.xlu0 %v1316, 96
        %v2154 = vpop.permute.xlu0 %2153
        %2155 = vrot.lane.b32.xlu0 %v1317, 96
        %v2156 = vpop.permute.xlu0 %2155
        %v2162 = vsel %vm1435, %v2145, 0
        %v2165 = vsel %vm1435, %v2146, 0
        %v2168 = vsel %vm1435, %v2147, 0
        %v2171 = vsel %vm1435, %v2148, 0
        %2173 = vmatprep.subr.bf16.mxu0 0
        %2174 = vmatpush1.bf16.msra.mxu0 %v2150
        %2175 = vmatprep.subr.bf16.mxu0 0
        %2176 = vmatpush1.bf16.msra.mxu0 %v2152
        %2177 = vmatprep.subr.bf16.mxu0 0
        %2178 = vmatpush1.bf16.msra.mxu0 %v2154
        %2179 = vmatprep.subr.bf16.mxu0 0
        %2180 = vmatpush1.bf16.msra.mxu0 %v2156
        %2181 = vmatprep.subr.bf16.mxu0 0
        %2182 = vmatpush1.bf16.msra.mxu0 0
        %2183 = vmatprep.subr.bf16.mxu0 0
        %2184 = vmatpush1.bf16.msra.mxu0 0
        %2185 = vmatprep.subr.bf16.mxu0 0
        %2186 = vmatpush1.bf16.msra.mxu0 0
        %2187 = vmatprep.subr.bf16.mxu0 0
        %2188 = vmatpush1.bf16.msra.mxu0 0
        %2189 = vmatprep.subr.bf16.mxu0 0
        %2190 = vmatpush1.bf16.msra.mxu0 0
        %2191 = vmatprep.subr.bf16.mxu0 0
        %2192 = vmatpush1.bf16.msra.mxu0 0
        %2193 = vmatprep.subr.bf16.mxu0 0
        %2194 = vmatpush1.bf16.msra.mxu0 0
        %2195 = vmatprep.subr.bf16.mxu0 0
        %2196 = vmatpush1.bf16.msra.mxu0 0
        %2197 = vmatprep.subr.bf16.mxu0 0
        %2198 = vmatpush1.bf16.msra.mxu0 0
        %2199 = vmatprep.subr.bf16.mxu0 0
        %2200 = vmatpush1.bf16.msra.mxu0 0
        %2201 = vmatprep.subr.bf16.mxu0 0
        %2202 = vmatpush1.bf16.msra.mxu0 0
        %2203 = vmatprep.subr.bf16.mxu0 0
        %2204 = vmatpush1.bf16.msra.mxu0 0
        %2205 = vmatprep.mubr.bf16.mxu0 0
        %2206 = vmatmul.mubr.bf16.gmra.mrb[0].mxu0 %v2162
        %v2207 = vpop.f32.mrb[0].mxu0
        %v2208 = vadd.f32 0.0, %v2207
        %v2209 = vpop.f32.mrb[0].mxu0
        %v2210 = vpop.f32.mrb[0].mxu0
        %v2211 = vadd.f32 0.0, %v2210
        %v2212 = vpop.f32.mrb[0].mxu0
        %2213 = vmatprep.mubr.bf16.mxu0 0
        %2214 = vmatmul.mubr.bf16.gmra.mrb[0].mxu0 %v2165
        %v2215 = vpop.f32.mrb[0].mxu0
        %v2216 = vadd.f32 0.0, %v2215
        %v2217 = vpop.f32.mrb[0].mxu0
        %v2218 = vpop.f32.mrb[0].mxu0
        %v2219 = vadd.f32 0.0, %v2218
        %v2220 = vpop.f32.mrb[0].mxu0
        %2221 = vmatprep.mubr.bf16.mxu0 0
        %2222 = vmatmul.mubr.bf16.gmra.mrb[0].mxu0 %v2168
        %v2223 = vpop.f32.mrb[0].mxu0
        %v2224 = vadd.f32 0.0, %v2223
        %v2225 = vpop.f32.mrb[0].mxu0
        %v2226 = vpop.f32.mrb[0].mxu0
        %v2227 = vadd.f32 0.0, %v2226
        %v2228 = vpop.f32.mrb[0].mxu0
        %2229 = vmatprep.mubr.bf16.mxu0 0
        %2230 = vmatmul.mubr.bf16.gmra.mrb[0].mxu0 %v2171
        %v2231 = vpop.f32.mrb[0].mxu0
        %v2232 = vadd.f32 0.0, %v2231
        %v2233 = vpop.f32.mrb[0].mxu0
        %v2234 = vpop.f32.mrb[0].mxu0
        %v2235 = vadd.f32 0.0, %v2234
        %v2236 = vpop.f32.mrb[0].mxu0
        %2237 = vdwg.mxu0
        %v2238 = vpack.c.bf16 %v2211, %v2208
        %v2239 = vpack.c.bf16 %v2219, %v2216
        %v2240 = vpack.c.bf16 %v2227, %v2224
        %v2241 = vpack.c.bf16 %v2235, %v2232
        %2246 = vrot.lane.b32.xlu0 %v2238, 32
        %v2247 = vpop.permute.xlu0 %2246
        %2248 = vrot.lane.b32.xlu0 %v2239, 32
        %v2249 = vpop.permute.xlu0 %2248
        %2250 = vrot.lane.b32.xlu0 %v2240, 32
        %v2251 = vpop.permute.xlu0 %2250
        %2252 = vrot.lane.b32.xlu0 %v2241, 32
        %v2253 = vpop.permute.xlu0 %2252
        %vm2258 = vcmask 392448
        %2259 = vst.msk [vmem:[#allocation3] sm:$0xff] %vm2258, %v2247
        %2260 = vst.msk [vmem:[#allocation3 + $0x8] sm:$0xff] %vm2258, %v2249
        %2261 = vst.msk [vmem:[#allocation3 + $0x10] sm:$0xff] %vm2258, %v2251
        %2262 = vst.msk [vmem:[#allocation3 + $0x18] sm:$0xff] %vm2258, %v2253
        %2263 = vrot.lane.b32.xlu0 %v1306, 80
        %v2264 = vpop.permute.xlu0 %2263
        %2265 = vrot.lane.b32.xlu0 %v1307, 80
        %v2266 = vpop.permute.xlu0 %2265
        %2267 = vrot.lane.b32.xlu0 %v1308, 80
        %v2268 = vpop.permute.xlu0 %2267
        %2269 = vrot.lane.b32.xlu0 %v1309, 80
        %v2270 = vpop.permute.xlu0 %2269
        %2271 = vrot.lane.b32.xlu0 %v1310, 80
        %v2272 = vpop.permute.xlu0 %2271
        %2273 = vrot.lane.b32.xlu0 %v1311, 80
        %v2274 = vpop.permute.xlu0 %2273
        %2275 = vrot.lane.b32.xlu0 %v1312, 80
        %v2276 = vpop.permute.xlu0 %2275
        %2277 = vrot.lane.b32.xlu0 %v1313, 80
        %v2278 = vpop.permute.xlu0 %2277
        %v2280 = vsel %vm1337, %v2264, 0
        %v2283 = vsel %vm1337, %v2266, 0
        %v2286 = vsel %vm1337, %v2268, 0
        %v2289 = vsel %vm1337, %v2270, 0
        %v2292 = vsel %vm1337, %v2272, 0
        %v2295 = vsel %vm1337, %v2274, 0
        %v2298 = vsel %vm1337, %v2276, 0
        %v2301 = vsel %vm1337, %v2278, 0
        %2303 = vmatprep.subr.bf16.mxu0 0
        %2304 = vmatpush1.bf16.xpose.msra.mxu0 %v2292
        %2305 = vmatprep.subr.bf16.mxu0 0
        %2306 = vmatpush1.bf16.xpose.msra.mxu0 %v2295
        %2307 = vmatprep.subr.bf16.mxu0 0
        %2308 = vmatpush1.bf16.xpose.msra.mxu0 %v2298
        %2309 = vmatprep.subr.bf16.mxu0 0
        %2310 = vmatpush1.bf16.xpose.msra.mxu0 %v2301
        %2311 = vmatprep.subr.bf16.mxu0 0
        %2312 = vmatpush1.bf16.xpose.msra.mxu0 0
        %2313 = vmatprep.subr.bf16.mxu0 0
        %2314 = vmatpush1.bf16.xpose.msra.mxu0 0
        %2315 = vmatprep.subr.bf16.mxu0 0
        %2316 = vmatpush1.bf16.xpose.msra.mxu0 0
        %2317 = vmatprep.subr.bf16.mxu0 0
        %2318 = vmatpush1.bf16.xpose.msra.mxu0 0
        %2319 = vmatprep.subr.bf16.mxu0 0
        %2320 = vmatpush1.bf16.xpose.msra.mxu0 0
        %2321 = vmatprep.subr.bf16.mxu0 0
        %2322 = vmatpush1.bf16.xpose.msra.mxu0 0
        %2323 = vmatprep.subr.bf16.mxu0 0
        %2324 = vmatpush1.bf16.xpose.msra.mxu0 0
        %2325 = vmatprep.subr.bf16.mxu0 0
        %2326 = vmatpush1.bf16.xpose.msra.mxu0 0
        %2327 = vmatprep.subr.bf16.mxu0 0
        %2328 = vmatpush1.bf16.xpose.msra.mxu0 0
        %2329 = vmatprep.subr.bf16.mxu0 0
        %2330 = vmatpush1.bf16.xpose.msra.mxu0 0
        %2331 = vmatprep.subr.bf16.mxu0 0
        %2332 = vmatpush1.bf16.xpose.msra.mxu0 0
        %2333 = vmatprep.subr.bf16.mxu0 0
        %2334 = vmatpush1.bf16.xpose.msra.mxu0 0
        %2335 = vmatprep.mubr.bf16.mxu0 0
        %2336 = vmatmul.mubr.bf16.gmra.mrb[0].mxu0 %v2280
        %v2337 = vpop.f32.mrb[0].mxu0
        %v2338 = vadd.f32 0.0, %v2337
        %v2339 = vpop.f32.mrb[0].mxu0
        %v2340 = vpop.f32.mrb[0].mxu0
        %v2341 = vadd.f32 0.0, %v2340
        %v2342 = vpop.f32.mrb[0].mxu0
        %2343 = vmatprep.mubr.bf16.mxu0 0
        %2344 = vmatmul.mubr.bf16.gmra.mrb[0].mxu0 %v2283
        %v2345 = vpop.f32.mrb[0].mxu0
        %v2346 = vadd.f32 0.0, %v2345
        %v2347 = vpop.f32.mrb[0].mxu0
        %v2348 = vpop.f32.mrb[0].mxu0
        %v2349 = vadd.f32 0.0, %v2348
        %v2350 = vpop.f32.mrb[0].mxu0
        %2351 = vmatprep.mubr.bf16.mxu0 0
        %2352 = vmatmul.mubr.bf16.gmra.mrb[0].mxu0 %v2286
        %v2353 = vpop.f32.mrb[0].mxu0
        %v2354 = vadd.f32 0.0, %v2353
        %v2355 = vpop.f32.mrb[0].mxu0
        %v2356 = vpop.f32.mrb[0].mxu0
        %v2357 = vadd.f32 0.0, %v2356
        %v2358 = vpop.f32.mrb[0].mxu0
        %2359 = vmatprep.mubr.bf16.mxu0 0
        %2360 = vmatmul.mubr.bf16.gmra.mrb[0].mxu0 %v2289
        %v2361 = vpop.f32.mrb[0].mxu0
        %v2362 = vadd.f32 0.0, %v2361
        %v2363 = vpop.f32.mrb[0].mxu0
        %v2364 = vpop.f32.mrb[0].mxu0
        %v2365 = vadd.f32 0.0, %v2364
        %v2366 = vpop.f32.mrb[0].mxu0
        %2367 = vdwg.mxu0
        %v2368 = vsel %vm1329, %v2338, -inf
        %v2369 = vsel %vm1330, %v2341, -inf
        %v2370 = vsel %vm1331, %v2346, -inf
        %v2371 = vsel %vm1332, %v2349, -inf
        %v2372 = vsel %vm1333, %v2354, -inf
        %v2373 = vsel %vm1334, %v2357, -inf
        %v2374 = vsel %vm1335, %v2362, -inf
        %v2375 = vsel %vm1336, %v2365, -inf
        %v2376 = vsel %vm1435, %v2368, -inf
        %2377 = vmax.xlane.f32.xlu0 %v2376
        %v2378 = vpop.xlane.xlu0 %2377
        %v2379 = vsel %vm1435, %v2369, -inf
        %2380 = vmax.xlane.f32.xlu0 %v2379
        %v2381 = vpop.xlane.xlu0 %2380
        %v2382 = vsel %vm1435, %v2370, -inf
        %2383 = vmax.xlane.f32.xlu0 %v2382
        %v2384 = vpop.xlane.xlu0 %2383
        %v2385 = vsel %vm1435, %v2371, -inf
        %2386 = vmax.xlane.f32.xlu0 %v2385
        %v2387 = vpop.xlane.xlu0 %2386
        %v2388 = vsel %vm1435, %v2372, -inf
        %2389 = vmax.xlane.f32.xlu0 %v2388
        %v2390 = vpop.xlane.xlu0 %2389
        %v2391 = vsel %vm1435, %v2373, -inf
        %2392 = vmax.xlane.f32.xlu0 %v2391
        %v2393 = vpop.xlane.xlu0 %2392
        %v2394 = vsel %vm1435, %v2374, -inf
        %2395 = vmax.xlane.f32.xlu0 %v2394
        %v2396 = vpop.xlane.xlu0 %2395
        %v2397 = vsel %vm1435, %v2375, -inf
        %2398 = vmax.xlane.f32.xlu0 %v2397
        %v2399 = vpop.xlane.xlu0 %2398
        %v2400 = vsub.f32 %v2368, %v2378
        %v2401 = vsub.f32 %v2369, %v2381
        %v2402 = vsub.f32 %v2370, %v2384
        %v2403 = vsub.f32 %v2371, %v2387
        %v2404 = vsub.f32 %v2372, %v2390
        %v2405 = vsub.f32 %v2373, %v2393
        %v2406 = vsub.f32 %v2374, %v2396
        %v2407 = vsub.f32 %v2375, %v2399
        %v2408 = vmul.f32 %v2400, 1.442695
        %v2409 = vpow.pop %v2408
        %v2410 = vmul.f32 %v2401, 1.442695
        %v2411 = vpow.pop %v2410
        %v2412 = vmul.f32 %v2402, 1.442695
        %v2413 = vpow.pop %v2412
        %v2414 = vmul.f32 %v2403, 1.442695
        %v2415 = vpow.pop %v2414
        %v2416 = vmul.f32 %v2404, 1.442695
        %v2417 = vpow.pop %v2416
        %v2418 = vmul.f32 %v2405, 1.442695
        %v2419 = vpow.pop %v2418
        %v2420 = vmul.f32 %v2406, 1.442695
        %v2421 = vpow.pop %v2420
        %v2422 = vmul.f32 %v2407, 1.442695
        %v2423 = vpow.pop %v2422
        %v2424 = vsel %vm1435, %v2409, 0.0
        %2425 = vadd.xlane.f32.xlu0 %v2424
        %v2426 = vpop.xlane.xlu0 %2425
        %v2427 = vsel %vm1435, %v2411, 0.0
        %2428 = vadd.xlane.f32.xlu0 %v2427
        %v2429 = vpop.xlane.xlu0 %2428
        %v2430 = vsel %vm1435, %v2413, 0.0
        %2431 = vadd.xlane.f32.xlu0 %v2430
        %v2432 = vpop.xlane.xlu0 %2431
        %v2433 = vsel %vm1435, %v2415, 0.0
        %2434 = vadd.xlane.f32.xlu0 %v2433
        %v2435 = vpop.xlane.xlu0 %2434
        %v2436 = vsel %vm1435, %v2417, 0.0
        %2437 = vadd.xlane.f32.xlu0 %v2436
        %v2438 = vpop.xlane.xlu0 %2437
        %v2439 = vsel %vm1435, %v2419, 0.0
        %2440 = vadd.xlane.f32.xlu0 %v2439
        %v2441 = vpop.xlane.xlu0 %2440
        %v2442 = vsel %vm1435, %v2421, 0.0
        %2443 = vadd.xlane.f32.xlu0 %v2442
        %v2444 = vpop.xlane.xlu0 %2443
        %v2445 = vsel %vm1435, %v2423, 0.0
        %2446 = vadd.xlane.f32.xlu0 %v2445
        %v2447 = vpop.xlane.xlu0 %2446
        %v2448 = vrcp.pop %v2426
        %v2449 = vrcp.pop %v2429
        %v2450 = vrcp.pop %v2432
        %v2451 = vrcp.pop %v2435
        %v2452 = vrcp.pop %v2438
        %v2453 = vrcp.pop %v2441
        %v2454 = vrcp.pop %v2444
        %v2455 = vrcp.pop %v2447
        %v2456 = vmul.f32 %v2409, %v2448
        %v2457 = vmul.f32 %v2411, %v2449
        %v2458 = vmul.f32 %v2413, %v2450
        %v2459 = vmul.f32 %v2415, %v2451
        %v2460 = vmul.f32 %v2417, %v2452
        %v2461 = vmul.f32 %v2419, %v2453
        %v2462 = vmul.f32 %v2421, %v2454
        %v2463 = vmul.f32 %v2423, %v2455
        %v2464 = vpack.c.bf16 %v2457, %v2456
        %v2465 = vpack.c.bf16 %v2459, %v2458
        %v2466 = vpack.c.bf16 %v2461, %v2460
        %v2467 = vpack.c.bf16 %v2463, %v2462
        %2468 = vrot.lane.b32.xlu0 %v1314, 80
        %v2469 = vpop.permute.xlu0 %2468
        %2470 = vrot.lane.b32.xlu0 %v1315, 80
        %v2471 = vpop.permute.xlu0 %2470
        %2472 = vrot.lane.b32.xlu0 %v1316, 80
        %v2473 = vpop.permute.xlu0 %2472
        %2474 = vrot.lane.b32.xlu0 %v1317, 80
        %v2475 = vpop.permute.xlu0 %2474
        %v2481 = vsel %vm1435, %v2464, 0
        %v2484 = vsel %vm1435, %v2465, 0
        %v2487 = vsel %vm1435, %v2466, 0
        %v2490 = vsel %vm1435, %v2467, 0
        %2492 = vmatprep.subr.bf16.mxu0 0
        %2493 = vmatpush1.bf16.msra.mxu0 %v2469
        %2494 = vmatprep.subr.bf16.mxu0 0
        %2495 = vmatpush1.bf16.msra.mxu0 %v2471
        %2496 = vmatprep.subr.bf16.mxu0 0
        %2497 = vmatpush1.bf16.msra.mxu0 %v2473
        %2498 = vmatprep.subr.bf16.mxu0 0
        %2499 = vmatpush1.bf16.msra.mxu0 %v2475
        %2500 = vmatprep.subr.bf16.mxu0 0
        %2501 = vmatpush1.bf16.msra.mxu0 0
        %2502 = vmatprep.subr.bf16.mxu0 0
        %2503 = vmatpush1.bf16.msra.mxu0 0
        %2504 = vmatprep.subr.bf16.mxu0 0
        %2505 = vmatpush1.bf16.msra.mxu0 0
        %2506 = vmatprep.subr.bf16.mxu0 0
        %2507 = vmatpush1.bf16.msra.mxu0 0
        %2508 = vmatprep.subr.bf16.mxu0 0
        %2509 = vmatpush1.bf16.msra.mxu0 0
        %2510 = vmatprep.subr.bf16.mxu0 0
        %2511 = vmatpush1.bf16.msra.mxu0 0
        %2512 = vmatprep.subr.bf16.mxu0 0
        %2513 = vmatpush1.bf16.msra.mxu0 0
        %2514 = vmatprep.subr.bf16.mxu0 0
        %2515 = vmatpush1.bf16.msra.mxu0 0
        %2516 = vmatprep.subr.bf16.mxu0 0
        %2517 = vmatpush1.bf16.msra.mxu0 0
        %2518 = vmatprep.subr.bf16.mxu0 0
        %2519 = vmatpush1.bf16.msra.mxu0 0
        %2520 = vmatprep.subr.bf16.mxu0 0
        %2521 = vmatpush1.bf16.msra.mxu0 0
        %2522 = vmatprep.subr.bf16.mxu0 0
        %2523 = vmatpush1.bf16.msra.mxu0 0
        %2524 = vmatprep.mubr.bf16.mxu0 0
        %2525 = vmatmul.mubr.bf16.gmra.mrb[0].mxu0 %v2481
        %v2526 = vpop.f32.mrb[0].mxu0
        %v2527 = vadd.f32 0.0, %v2526
        %v2528 = vpop.f32.mrb[0].mxu0
        %v2529 = vpop.f32.mrb[0].mxu0
        %v2530 = vadd.f32 0.0, %v2529
        %v2531 = vpop.f32.mrb[0].mxu0
        %2532 = vmatprep.mubr.bf16.mxu0 0
        %2533 = vmatmul.mubr.bf16.gmra.mrb[0].mxu0 %v2484
        %v2534 = vpop.f32.mrb[0].mxu0
        %v2535 = vadd.f32 0.0, %v2534
        %v2536 = vpop.f32.mrb[0].mxu0
        %v2537 = vpop.f32.mrb[0].mxu0
        %v2538 = vadd.f32 0.0, %v2537
        %v2539 = vpop.f32.mrb[0].mxu0
        %2540 = vmatprep.mubr.bf16.mxu0 0
        %2541 = vmatmul.mubr.bf16.gmra.mrb[0].mxu0 %v2487
        %v2542 = vpop.f32.mrb[0].mxu0
        %v2543 = vadd.f32 0.0, %v2542
        %v2544 = vpop.f32.mrb[0].mxu0
        %v2545 = vpop.f32.mrb[0].mxu0
        %v2546 = vadd.f32 0.0, %v2545
        %v2547 = vpop.f32.mrb[0].mxu0
        %2548 = vmatprep.mubr.bf16.mxu0 0
        %2549 = vmatmul.mubr.bf16.gmra.mrb[0].mxu0 %v2490
        %v2550 = vpop.f32.mrb[0].mxu0
        %v2551 = vadd.f32 0.0, %v2550
        %v2552 = vpop.f32.mrb[0].mxu0
        %v2553 = vpop.f32.mrb[0].mxu0
        %v2554 = vadd.f32 0.0, %v2553
        %v2555 = vpop.f32.mrb[0].mxu0
        %2556 = vdwg.mxu0
        %v2557 = vpack.c.bf16 %v2530, %v2527
        %v2558 = vpack.c.bf16 %v2538, %v2535
        %v2559 = vpack.c.bf16 %v2546, %v2543
        %v2560 = vpack.c.bf16 %v2554, %v2551
        %2565 = vrot.lane.b32.xlu0 %v2557, 48
        %v2566 = vpop.permute.xlu0 %2565
        %2567 = vrot.lane.b32.xlu0 %v2558, 48
        %v2568 = vpop.permute.xlu0 %2567
        %2569 = vrot.lane.b32.xlu0 %v2559, 48
        %v2570 = vpop.permute.xlu0 %2569
        %2571 = vrot.lane.b32.xlu0 %v2560, 48
        %v2572 = vpop.permute.xlu0 %2571
        %vm2577 = vcmask 523648
        %2578 = vst.msk [vmem:[#allocation3] sm:$0xff] %vm2577, %v2566
        %2579 = vst.msk [vmem:[#allocation3 + $0x8] sm:$0xff] %vm2577, %v2568
        %2580 = vst.msk [vmem:[#allocation3 + $0x10] sm:$0xff] %vm2577, %v2570
        %2581 = vst.msk [vmem:[#allocation3 + $0x18] sm:$0xff] %vm2577, %v2572
        %2582 = vrot.lane.b32.xlu0 %v1306, 64
        %v2583 = vpop.permute.xlu0 %2582
        %2584 = vrot.lane.b32.xlu0 %v1307, 64
        %v2585 = vpop.permute.xlu0 %2584
        %2586 = vrot.lane.b32.xlu0 %v1308, 64
        %v2587 = vpop.permute.xlu0 %2586
        %2588 = vrot.lane.b32.xlu0 %v1309, 64
        %v2589 = vpop.permute.xlu0 %2588
        %2590 = vrot.lane.b32.xlu0 %v1310, 64
        %v2591 = vpop.permute.xlu0 %2590
        %2592 = vrot.lane.b32.xlu0 %v1311, 64
        %v2593 = vpop.permute.xlu0 %2592
        %2594 = vrot.lane.b32.xlu0 %v1312, 64
        %v2595 = vpop.permute.xlu0 %2594
        %2596 = vrot.lane.b32.xlu0 %v1313, 64
        %v2597 = vpop.permute.xlu0 %2596
        %v2599 = vsel %vm1337, %v2583, 0
        %v2602 = vsel %vm1337, %v2585, 0
        %v2605 = vsel %vm1337, %v2587, 0
        %v2608 = vsel %vm1337, %v2589, 0
        %v2611 = vsel %vm1337, %v2591, 0
        %v2614 = vsel %vm1337, %v2593, 0
        %v2617 = vsel %vm1337, %v2595, 0
        %v2620 = vsel %vm1337, %v2597, 0
        %2622 = vmatprep.subr.bf16.mxu0 0
        %2623 = vmatpush1.bf16.xpose.msra.mxu0 %v2611
        %2624 = vmatprep.subr.bf16.mxu0 0
        %2625 = vmatpush1.bf16.xpose.msra.mxu0 %v2614
        %2626 = vmatprep.subr.bf16.mxu0 0
        %2627 = vmatpush1.bf16.xpose.msra.mxu0 %v2617
        %2628 = vmatprep.subr.bf16.mxu0 0
        %2629 = vmatpush1.bf16.xpose.msra.mxu0 %v2620
        %2630 = vmatprep.subr.bf16.mxu0 0
        %2631 = vmatpush1.bf16.xpose.msra.mxu0 0
        %2632 = vmatprep.subr.bf16.mxu0 0
        %2633 = vmatpush1.bf16.xpose.msra.mxu0 0
        %2634 = vmatprep.subr.bf16.mxu0 0
        %2635 = vmatpush1.bf16.xpose.msra.mxu0 0
        %2636 = vmatprep.subr.bf16.mxu0 0
        %2637 = vmatpush1.bf16.xpose.msra.mxu0 0
        %2638 = vmatprep.subr.bf16.mxu0 0
        %2639 = vmatpush1.bf16.xpose.msra.mxu0 0
        %2640 = vmatprep.subr.bf16.mxu0 0
        %2641 = vmatpush1.bf16.xpose.msra.mxu0 0
        %2642 = vmatprep.subr.bf16.mxu0 0
        %2643 = vmatpush1.bf16.xpose.msra.mxu0 0
        %2644 = vmatprep.subr.bf16.mxu0 0
        %2645 = vmatpush1.bf16.xpose.msra.mxu0 0
        %2646 = vmatprep.subr.bf16.mxu0 0
        %2647 = vmatpush1.bf16.xpose.msra.mxu0 0
        %2648 = vmatprep.subr.bf16.mxu0 0
        %2649 = vmatpush1.bf16.xpose.msra.mxu0 0
        %2650 = vmatprep.subr.bf16.mxu0 0
        %2651 = vmatpush1.bf16.xpose.msra.mxu0 0
        %2652 = vmatprep.subr.bf16.mxu0 0
        %2653 = vmatpush1.bf16.xpose.msra.mxu0 0
        %2654 = vmatprep.mubr.bf16.mxu0 0
        %2655 = vmatmul.mubr.bf16.gmra.mrb[0].mxu0 %v2599
        %v2656 = vpop.f32.mrb[0].mxu0
        %v2657 = vadd.f32 0.0, %v2656
        %v2658 = vpop.f32.mrb[0].mxu0
        %v2659 = vpop.f32.mrb[0].mxu0
        %v2660 = vadd.f32 0.0, %v2659
        %v2661 = vpop.f32.mrb[0].mxu0
        %2662 = vmatprep.mubr.bf16.mxu0 0
        %2663 = vmatmul.mubr.bf16.gmra.mrb[0].mxu0 %v2602
        %v2664 = vpop.f32.mrb[0].mxu0
        %v2665 = vadd.f32 0.0, %v2664
        %v2666 = vpop.f32.mrb[0].mxu0
        %v2667 = vpop.f32.mrb[0].mxu0
        %v2668 = vadd.f32 0.0, %v2667
        %v2669 = vpop.f32.mrb[0].mxu0
        %2670 = vmatprep.mubr.bf16.mxu0 0
        %2671 = vmatmul.mubr.bf16.gmra.mrb[0].mxu0 %v2605
        %v2672 = vpop.f32.mrb[0].mxu0
        %v2673 = vadd.f32 0.0, %v2672
        %v2674 = vpop.f32.mrb[0].mxu0
        %v2675 = vpop.f32.mrb[0].mxu0
        %v2676 = vadd.f32 0.0, %v2675
        %v2677 = vpop.f32.mrb[0].mxu0
        %2678 = vmatprep.mubr.bf16.mxu0 0
        %2679 = vmatmul.mubr.bf16.gmra.mrb[0].mxu0 %v2608
        %v2680 = vpop.f32.mrb[0].mxu0
        %v2681 = vadd.f32 0.0, %v2680
        %v2682 = vpop.f32.mrb[0].mxu0
        %v2683 = vpop.f32.mrb[0].mxu0
        %v2684 = vadd.f32 0.0, %v2683
        %v2685 = vpop.f32.mrb[0].mxu0
        %2686 = vdwg.mxu0
        %v2687 = vsel %vm1329, %v2657, -inf
        %v2688 = vsel %vm1330, %v2660, -inf
        %v2689 = vsel %vm1331, %v2665, -inf
        %v2690 = vsel %vm1332, %v2668, -inf
        %v2691 = vsel %vm1333, %v2673, -inf
        %v2692 = vsel %vm1334, %v2676, -inf
        %v2693 = vsel %vm1335, %v2681, -inf
        %v2694 = vsel %vm1336, %v2684, -inf
        %v2695 = vsel %vm1435, %v2687, -inf
        %2696 = vmax.xlane.f32.xlu0 %v2695
        %v2697 = vpop.xlane.xlu0 %2696
        %v2698 = vsel %vm1435, %v2688, -inf
        %2699 = vmax.xlane.f32.xlu0 %v2698
        %v2700 = vpop.xlane.xlu0 %2699
        %v2701 = vsel %vm1435, %v2689, -inf
        %2702 = vmax.xlane.f32.xlu0 %v2701
        %v2703 = vpop.xlane.xlu0 %2702
        %v2704 = vsel %vm1435, %v2690, -inf
        %2705 = vmax.xlane.f32.xlu0 %v2704
        %v2706 = vpop.xlane.xlu0 %2705
        %v2707 = vsel %vm1435, %v2691, -inf
        %2708 = vmax.xlane.f32.xlu0 %v2707
        %v2709 = vpop.xlane.xlu0 %2708
        %v2710 = vsel %vm1435, %v2692, -inf
        %2711 = vmax.xlane.f32.xlu0 %v2710
        %v2712 = vpop.xlane.xlu0 %2711
        %v2713 = vsel %vm1435, %v2693, -inf
        %2714 = vmax.xlane.f32.xlu0 %v2713
        %v2715 = vpop.xlane.xlu0 %2714
        %v2716 = vsel %vm1435, %v2694, -inf
        %2717 = vmax.xlane.f32.xlu0 %v2716
        %v2718 = vpop.xlane.xlu0 %2717
        %v2719 = vsub.f32 %v2687, %v2697
        %v2720 = vsub.f32 %v2688, %v2700
        %v2721 = vsub.f32 %v2689, %v2703
        %v2722 = vsub.f32 %v2690, %v2706
        %v2723 = vsub.f32 %v2691, %v2709
        %v2724 = vsub.f32 %v2692, %v2712
        %v2725 = vsub.f32 %v2693, %v2715
        %v2726 = vsub.f32 %v2694, %v2718
        %v2727 = vmul.f32 %v2719, 1.442695
        %v2728 = vpow.pop %v2727
        %v2729 = vmul.f32 %v2720, 1.442695
        %v2730 = vpow.pop %v2729
        %v2731 = vmul.f32 %v2721, 1.442695
        %v2732 = vpow.pop %v2731
        %v2733 = vmul.f32 %v2722, 1.442695
        %v2734 = vpow.pop %v2733
        %v2735 = vmul.f32 %v2723, 1.442695
        %v2736 = vpow.pop %v2735
        %v2737 = vmul.f32 %v2724, 1.442695
        %v2738 = vpow.pop %v2737
        %v2739 = vmul.f32 %v2725, 1.442695
        %v2740 = vpow.pop %v2739
        %v2741 = vmul.f32 %v2726, 1.442695
        %v2742 = vpow.pop %v2741
        %v2743 = vsel %vm1435, %v2728, 0.0
        %2744 = vadd.xlane.f32.xlu0 %v2743
        %v2745 = vpop.xlane.xlu0 %2744
        %v2746 = vsel %vm1435, %v2730, 0.0
        %2747 = vadd.xlane.f32.xlu0 %v2746
        %v2748 = vpop.xlane.xlu0 %2747
        %v2749 = vsel %vm1435, %v2732, 0.0
        %2750 = vadd.xlane.f32.xlu0 %v2749
        %v2751 = vpop.xlane.xlu0 %2750
        %v2752 = vsel %vm1435, %v2734, 0.0
        %2753 = vadd.xlane.f32.xlu0 %v2752
        %v2754 = vpop.xlane.xlu0 %2753
        %v2755 = vsel %vm1435, %v2736, 0.0
        %2756 = vadd.xlane.f32.xlu0 %v2755
        %v2757 = vpop.xlane.xlu0 %2756
        %v2758 = vsel %vm1435, %v2738, 0.0
        %2759 = vadd.xlane.f32.xlu0 %v2758
        %v2760 = vpop.xlane.xlu0 %2759
        %v2761 = vsel %vm1435, %v2740, 0.0
        %2762 = vadd.xlane.f32.xlu0 %v2761
        %v2763 = vpop.xlane.xlu0 %2762
        %v2764 = vsel %vm1435, %v2742, 0.0
        %2765 = vadd.xlane.f32.xlu0 %v2764
        %v2766 = vpop.xlane.xlu0 %2765
        %v2767 = vrcp.pop %v2745
        %v2768 = vrcp.pop %v2748
        %v2769 = vrcp.pop %v2751
        %v2770 = vrcp.pop %v2754
        %v2771 = vrcp.pop %v2757
        %v2772 = vrcp.pop %v2760
        %v2773 = vrcp.pop %v2763
        %v2774 = vrcp.pop %v2766
        %v2775 = vmul.f32 %v2728, %v2767
        %v2776 = vmul.f32 %v2730, %v2768
        %v2777 = vmul.f32 %v2732, %v2769
        %v2778 = vmul.f32 %v2734, %v2770
        %v2779 = vmul.f32 %v2736, %v2771
        %v2780 = vmul.f32 %v2738, %v2772
        %v2781 = vmul.f32 %v2740, %v2773
        %v2782 = vmul.f32 %v2742, %v2774
        %v2783 = vpack.c.bf16 %v2776, %v2775
        %v2784 = vpack.c.bf16 %v2778, %v2777
        %v2785 = vpack.c.bf16 %v2780, %v2779
        %v2786 = vpack.c.bf16 %v2782, %v2781
        %2787 = vrot.lane.b32.xlu0 %v1314, 64
        %v2788 = vpop.permute.xlu0 %2787
        %2789 = vrot.lane.b32.xlu0 %v1315, 64
        %v2790 = vpop.permute.xlu0 %2789
        %2791 = vrot.lane.b32.xlu0 %v1316, 64
        %v2792 = vpop.permute.xlu0 %2791
        %2793 = vrot.lane.b32.xlu0 %v1317, 64
        %v2794 = vpop.permute.xlu0 %2793
        %v2800 = vsel %vm1435, %v2783, 0
        %v2803 = vsel %vm1435, %v2784, 0
        %v2806 = vsel %vm1435, %v2785, 0
        %v2809 = vsel %vm1435, %v2786, 0
        %2811 = vmatprep.subr.bf16.mxu0 0
        %2812 = vmatpush1.bf16.msra.mxu0 %v2788
        %2813 = vmatprep.subr.bf16.mxu0 0
        %2814 = vmatpush1.bf16.msra.mxu0 %v2790
        %2815 = vmatprep.subr.bf16.mxu0 0
        %2816 = vmatpush1.bf16.msra.mxu0 %v2792
        %2817 = vmatprep.subr.bf16.mxu0 0
        %2818 = vmatpush1.bf16.msra.mxu0 %v2794
        %2819 = vmatprep.subr.bf16.mxu0 0
        %2820 = vmatpush1.bf16.msra.mxu0 0
        %2821 = vmatprep.subr.bf16.mxu0 0
        %2822 = vmatpush1.bf16.msra.mxu0 0
        %2823 = vmatprep.subr.bf16.mxu0 0
        %2824 = vmatpush1.bf16.msra.mxu0 0
        %2825 = vmatprep.subr.bf16.mxu0 0
        %2826 = vmatpush1.bf16.msra.mxu0 0
        %2827 = vmatprep.subr.bf16.mxu0 0
        %2828 = vmatpush1.bf16.msra.mxu0 0
        %2829 = vmatprep.subr.bf16.mxu0 0
        %2830 = vmatpush1.bf16.msra.mxu0 0
        %2831 = vmatprep.subr.bf16.mxu0 0
        %2832 = vmatpush1.bf16.msra.mxu0 0
        %2833 = vmatprep.subr.bf16.mxu0 0
        %2834 = vmatpush1.bf16.msra.mxu0 0
        %2835 = vmatprep.subr.bf16.mxu0 0
        %2836 = vmatpush1.bf16.msra.mxu0 0
        %2837 = vmatprep.subr.bf16.mxu0 0
        %2838 = vmatpush1.bf16.msra.mxu0 0
        %2839 = vmatprep.subr.bf16.mxu0 0
        %2840 = vmatpush1.bf16.msra.mxu0 0
        %2841 = vmatprep.subr.bf16.mxu0 0
        %2842 = vmatpush1.bf16.msra.mxu0 0
        %2843 = vmatprep.mubr.bf16.mxu0 0
        %2844 = vmatmul.mubr.bf16.gmra.mrb[0].mxu0 %v2800
        %v2845 = vpop.f32.mrb[0].mxu0
        %v2846 = vadd.f32 0.0, %v2845
        %v2847 = vpop.f32.mrb[0].mxu0
        %v2848 = vpop.f32.mrb[0].mxu0
        %v2849 = vadd.f32 0.0, %v2848
        %v2850 = vpop.f32.mrb[0].mxu0
        %2851 = vmatprep.mubr.bf16.mxu0 0
        %2852 = vmatmul.mubr.bf16.gmra.mrb[0].mxu0 %v2803
        %v2853 = vpop.f32.mrb[0].mxu0
        %v2854 = vadd.f32 0.0, %v2853
        %v2855 = vpop.f32.mrb[0].mxu0
        %v2856 = vpop.f32.mrb[0].mxu0
        %v2857 = vadd.f32 0.0, %v2856
        %v2858 = vpop.f32.mrb[0].mxu0
        %2859 = vmatprep.mubr.bf16.mxu0 0
        %2860 = vmatmul.mubr.bf16.gmra.mrb[0].mxu0 %v2806
        %v2861 = vpop.f32.mrb[0].mxu0
        %v2862 = vadd.f32 0.0, %v2861
        %v2863 = vpop.f32.mrb[0].mxu0
        %v2864 = vpop.f32.mrb[0].mxu0
        %v2865 = vadd.f32 0.0, %v2864
        %v2866 = vpop.f32.mrb[0].mxu0
        %2867 = vmatprep.mubr.bf16.mxu0 0
        %2868 = vmatmul.mubr.bf16.gmra.mrb[0].mxu0 %v2809
        %v2869 = vpop.f32.mrb[0].mxu0
        %v2870 = vadd.f32 0.0, %v2869
        %v2871 = vpop.f32.mrb[0].mxu0
        %v2872 = vpop.f32.mrb[0].mxu0
        %v2873 = vadd.f32 0.0, %v2872
        %v2874 = vpop.f32.mrb[0].mxu0
        %2875 = vdwg.mxu0
        %v2876 = vpack.c.bf16 %v2849, %v2846
        %v2877 = vpack.c.bf16 %v2857, %v2854
        %v2878 = vpack.c.bf16 %v2865, %v2862
        %v2879 = vpack.c.bf16 %v2873, %v2870
        %2884 = vrot.lane.b32.xlu0 %v2876, 64
        %v2885 = vpop.permute.xlu0 %2884
        %2886 = vrot.lane.b32.xlu0 %v2877, 64
        %v2887 = vpop.permute.xlu0 %2886
        %2888 = vrot.lane.b32.xlu0 %v2878, 64
        %v2889 = vpop.permute.xlu0 %2888
        %2890 = vrot.lane.b32.xlu0 %v2879, 64
        %v2891 = vpop.permute.xlu0 %2890
        %vm2896 = vcmask 654848
        %2897 = vst.msk [vmem:[#allocation3] sm:$0xff] %vm2896, %v2885
        %2898 = vst.msk [vmem:[#allocation3 + $0x8] sm:$0xff] %vm2896, %v2887
        %2899 = vst.msk [vmem:[#allocation3 + $0x10] sm:$0xff] %vm2896, %v2889
        %2900 = vst.msk [vmem:[#allocation3 + $0x18] sm:$0xff] %vm2896, %v2891
        %2901 = vrot.lane.b32.xlu0 %v1306, 48
        %v2902 = vpop.permute.xlu0 %2901
        %2903 = vrot.lane.b32.xlu0 %v1307, 48
        %v2904 = vpop.permute.xlu0 %2903
        %2905 = vrot.lane.b32.xlu0 %v1308, 48
        %v2906 = vpop.permute.xlu0 %2905
        %2907 = vrot.lane.b32.xlu0 %v1309, 48
        %v2908 = vpop.permute.xlu0 %2907
        %2909 = vrot.lane.b32.xlu0 %v1310, 48
        %v2910 = vpop.permute.xlu0 %2909
        %2911 = vrot.lane.b32.xlu0 %v1311, 48
        %v2912 = vpop.permute.xlu0 %2911
        %2913 = vrot.lane.b32.xlu0 %v1312, 48
        %v2914 = vpop.permute.xlu0 %2913
        %2915 = vrot.lane.b32.xlu0 %v1313, 48
        %v2916 = vpop.permute.xlu0 %2915
        %v2918 = vsel %vm1337, %v2902, 0
        %v2921 = vsel %vm1337, %v2904, 0
        %v2924 = vsel %vm1337, %v2906, 0
        %v2927 = vsel %vm1337, %v2908, 0
        %v2930 = vsel %vm1337, %v2910, 0
        %v2933 = vsel %vm1337, %v2912, 0
        %v2936 = vsel %vm1337, %v2914, 0
        %v2939 = vsel %vm1337, %v2916, 0
        %2941 = vmatprep.subr.bf16.mxu0 0
        %2942 = vmatpush1.bf16.xpose.msra.mxu0 %v2930
        %2943 = vmatprep.subr.bf16.mxu0 0
        %2944 = vmatpush1.bf16.xpose.msra.mxu0 %v2933
        %2945 = vmatprep.subr.bf16.mxu0 0
        %2946 = vmatpush1.bf16.xpose.msra.mxu0 %v2936
        %2947 = vmatprep.subr.bf16.mxu0 0
        %2948 = vmatpush1.bf16.xpose.msra.mxu0 %v2939
        %2949 = vmatprep.subr.bf16.mxu0 0
        %2950 = vmatpush1.bf16.xpose.msra.mxu0 0
        %2951 = vmatprep.subr.bf16.mxu0 0
        %2952 = vmatpush1.bf16.xpose.msra.mxu0 0
        %2953 = vmatprep.subr.bf16.mxu0 0
        %2954 = vmatpush1.bf16.xpose.msra.mxu0 0
        %2955 = vmatprep.subr.bf16.mxu0 0
        %2956 = vmatpush1.bf16.xpose.msra.mxu0 0
        %2957 = vmatprep.subr.bf16.mxu0 0
        %2958 = vmatpush1.bf16.xpose.msra.mxu0 0
        %2959 = vmatprep.subr.bf16.mxu0 0
        %2960 = vmatpush1.bf16.xpose.msra.mxu0 0
        %2961 = vmatprep.subr.bf16.mxu0 0
        %2962 = vmatpush1.bf16.xpose.msra.mxu0 0
        %2963 = vmatprep.subr.bf16.mxu0 0
        %2964 = vmatpush1.bf16.xpose.msra.mxu0 0
        %2965 = vmatprep.subr.bf16.mxu0 0
        %2966 = vmatpush1.bf16.xpose.msra.mxu0 0
        %2967 = vmatprep.subr.bf16.mxu0 0
        %2968 = vmatpush1.bf16.xpose.msra.mxu0 0
        %2969 = vmatprep.subr.bf16.mxu0 0
        %2970 = vmatpush1.bf16.xpose.msra.mxu0 0
        %2971 = vmatprep.subr.bf16.mxu0 0
        %2972 = vmatpush1.bf16.xpose.msra.mxu0 0
        %2973 = vmatprep.mubr.bf16.mxu0 0
        %2974 = vmatmul.mubr.bf16.gmra.mrb[0].mxu0 %v2918
        %v2975 = vpop.f32.mrb[0].mxu0
        %v2976 = vadd.f32 0.0, %v2975
        %v2977 = vpop.f32.mrb[0].mxu0
        %v2978 = vpop.f32.mrb[0].mxu0
        %v2979 = vadd.f32 0.0, %v2978
        %v2980 = vpop.f32.mrb[0].mxu0
        %2981 = vmatprep.mubr.bf16.mxu0 0
        %2982 = vmatmul.mubr.bf16.gmra.mrb[0].mxu0 %v2921
        %v2983 = vpop.f32.mrb[0].mxu0
        %v2984 = vadd.f32 0.0, %v2983
        %v2985 = vpop.f32.mrb[0].mxu0
        %v2986 = vpop.f32.mrb[0].mxu0
        %v2987 = vadd.f32 0.0, %v2986
        %v2988 = vpop.f32.mrb[0].mxu0
        %2989 = vmatprep.mubr.bf16.mxu0 0
        %2990 = vmatmul.mubr.bf16.gmra.mrb[0].mxu0 %v2924
        %v2991 = vpop.f32.mrb[0].mxu0
        %v2992 = vadd.f32 0.0, %v2991
        %v2993 = vpop.f32.mrb[0].mxu0
        %v2994 = vpop.f32.mrb[0].mxu0
        %v2995 = vadd.f32 0.0, %v2994
        %v2996 = vpop.f32.mrb[0].mxu0
        %2997 = vmatprep.mubr.bf16.mxu0 0
        %2998 = vmatmul.mubr.bf16.gmra.mrb[0].mxu0 %v2927
        %v2999 = vpop.f32.mrb[0].mxu0
        %v3000 = vadd.f32 0.0, %v2999
        %v3001 = vpop.f32.mrb[0].mxu0
        %v3002 = vpop.f32.mrb[0].mxu0
        %v3003 = vadd.f32 0.0, %v3002
        %v3004 = vpop.f32.mrb[0].mxu0
        %3005 = vdwg.mxu0
        %v3006 = vsel %vm1329, %v2976, -inf
        %v3007 = vsel %vm1330, %v2979, -inf
        %v3008 = vsel %vm1331, %v2984, -inf
        %v3009 = vsel %vm1332, %v2987, -inf
        %v3010 = vsel %vm1333, %v2992, -inf
        %v3011 = vsel %vm1334, %v2995, -inf
        %v3012 = vsel %vm1335, %v3000, -inf
        %v3013 = vsel %vm1336, %v3003, -inf
        %v3014 = vsel %vm1435, %v3006, -inf
        %3015 = vmax.xlane.f32.xlu0 %v3014
        %v3016 = vpop.xlane.xlu0 %3015
        %v3017 = vsel %vm1435, %v3007, -inf
        %3018 = vmax.xlane.f32.xlu0 %v3017
        %v3019 = vpop.xlane.xlu0 %3018
        %v3020 = vsel %vm1435, %v3008, -inf
        %3021 = vmax.xlane.f32.xlu0 %v3020
        %v3022 = vpop.xlane.xlu0 %3021
        %v3023 = vsel %vm1435, %v3009, -inf
        %3024 = vmax.xlane.f32.xlu0 %v3023
        %v3025 = vpop.xlane.xlu0 %3024
        %v3026 = vsel %vm1435, %v3010, -inf
        %3027 = vmax.xlane.f32.xlu0 %v3026
        %v3028 = vpop.xlane.xlu0 %3027
        %v3029 = vsel %vm1435, %v3011, -inf
        %3030 = vmax.xlane.f32.xlu0 %v3029
        %v3031 = vpop.xlane.xlu0 %3030
        %v3032 = vsel %vm1435, %v3012, -inf
        %3033 = vmax.xlane.f32.xlu0 %v3032
        %v3034 = vpop.xlane.xlu0 %3033
        %v3035 = vsel %vm1435, %v3013, -inf
        %3036 = vmax.xlane.f32.xlu0 %v3035
        %v3037 = vpop.xlane.xlu0 %3036
        %v3038 = vsub.f32 %v3006, %v3016
        %v3039 = vsub.f32 %v3007, %v3019
        %v3040 = vsub.f32 %v3008, %v3022
        %v3041 = vsub.f32 %v3009, %v3025
        %v3042 = vsub.f32 %v3010, %v3028
        %v3043 = vsub.f32 %v3011, %v3031
        %v3044 = vsub.f32 %v3012, %v3034
        %v3045 = vsub.f32 %v3013, %v3037
        %v3046 = vmul.f32 %v3038, 1.442695
        %v3047 = vpow.pop %v3046
        %v3048 = vmul.f32 %v3039, 1.442695
        %v3049 = vpow.pop %v3048
        %v3050 = vmul.f32 %v3040, 1.442695
        %v3051 = vpow.pop %v3050
        %v3052 = vmul.f32 %v3041, 1.442695
        %v3053 = vpow.pop %v3052
        %v3054 = vmul.f32 %v3042, 1.442695
        %v3055 = vpow.pop %v3054
        %v3056 = vmul.f32 %v3043, 1.442695
        %v3057 = vpow.pop %v3056
        %v3058 = vmul.f32 %v3044, 1.442695
        %v3059 = vpow.pop %v3058
        %v3060 = vmul.f32 %v3045, 1.442695
        %v3061 = vpow.pop %v3060
        %v3062 = vsel %vm1435, %v3047, 0.0
        %3063 = vadd.xlane.f32.xlu0 %v3062
        %v3064 = vpop.xlane.xlu0 %3063
        %v3065 = vsel %vm1435, %v3049, 0.0
        %3066 = vadd.xlane.f32.xlu0 %v3065
        %v3067 = vpop.xlane.xlu0 %3066
        %v3068 = vsel %vm1435, %v3051, 0.0
        %3069 = vadd.xlane.f32.xlu0 %v3068
        %v3070 = vpop.xlane.xlu0 %3069
        %v3071 = vsel %vm1435, %v3053, 0.0
        %3072 = vadd.xlane.f32.xlu0 %v3071
        %v3073 = vpop.xlane.xlu0 %3072
        %v3074 = vsel %vm1435, %v3055, 0.0
        %3075 = vadd.xlane.f32.xlu0 %v3074
        %v3076 = vpop.xlane.xlu0 %3075
        %v3077 = vsel %vm1435, %v3057, 0.0
        %3078 = vadd.xlane.f32.xlu0 %v3077
        %v3079 = vpop.xlane.xlu0 %3078
        %v3080 = vsel %vm1435, %v3059, 0.0
        %3081 = vadd.xlane.f32.xlu0 %v3080
        %v3082 = vpop.xlane.xlu0 %3081
        %v3083 = vsel %vm1435, %v3061, 0.0
        %3084 = vadd.xlane.f32.xlu0 %v3083
        %v3085 = vpop.xlane.xlu0 %3084
        %v3086 = vrcp.pop %v3064
        %v3087 = vrcp.pop %v3067
        %v3088 = vrcp.pop %v3070
        %v3089 = vrcp.pop %v3073
        %v3090 = vrcp.pop %v3076
        %v3091 = vrcp.pop %v3079
        %v3092 = vrcp.pop %v3082
        %v3093 = vrcp.pop %v3085
        %v3094 = vmul.f32 %v3047, %v3086
        %v3095 = vmul.f32 %v3049, %v3087
        %v3096 = vmul.f32 %v3051, %v3088
        %v3097 = vmul.f32 %v3053, %v3089
        %v3098 = vmul.f32 %v3055, %v3090
        %v3099 = vmul.f32 %v3057, %v3091
        %v3100 = vmul.f32 %v3059, %v3092
        %v3101 = vmul.f32 %v3061, %v3093
        %v3102 = vpack.c.bf16 %v3095, %v3094
        %v3103 = vpack.c.bf16 %v3097, %v3096
        %v3104 = vpack.c.bf16 %v3099, %v3098
        %v3105 = vpack.c.bf16 %v3101, %v3100
        %3106 = vrot.lane.b32.xlu0 %v1314, 48
        %v3107 = vpop.permute.xlu0 %3106
        %3108 = vrot.lane.b32.xlu0 %v1315, 48
        %v3109 = vpop.permute.xlu0 %3108
        %3110 = vrot.lane.b32.xlu0 %v1316, 48
        %v3111 = vpop.permute.xlu0 %3110
        %3112 = vrot.lane.b32.xlu0 %v1317, 48
        %v3113 = vpop.permute.xlu0 %3112
        %v3119 = vsel %vm1435, %v3102, 0
        %v3122 = vsel %vm1435, %v3103, 0
        %v3125 = vsel %vm1435, %v3104, 0
        %v3128 = vsel %vm1435, %v3105, 0
        %3130 = vmatprep.subr.bf16.mxu0 0
        %3131 = vmatpush1.bf16.msra.mxu0 %v3107
        %3132 = vmatprep.subr.bf16.mxu0 0
        %3133 = vmatpush1.bf16.msra.mxu0 %v3109
        %3134 = vmatprep.subr.bf16.mxu0 0
        %3135 = vmatpush1.bf16.msra.mxu0 %v3111
        %3136 = vmatprep.subr.bf16.mxu0 0
        %3137 = vmatpush1.bf16.msra.mxu0 %v3113
        %3138 = vmatprep.subr.bf16.mxu0 0
        %3139 = vmatpush1.bf16.msra.mxu0 0
        %3140 = vmatprep.subr.bf16.mxu0 0
        %3141 = vmatpush1.bf16.msra.mxu0 0
        %3142 = vmatprep.subr.bf16.mxu0 0
        %3143 = vmatpush1.bf16.msra.mxu0 0
        %3144 = vmatprep.subr.bf16.mxu0 0
        %3145 = vmatpush1.bf16.msra.mxu0 0
        %3146 = vmatprep.subr.bf16.mxu0 0
        %3147 = vmatpush1.bf16.msra.mxu0 0
        %3148 = vmatprep.subr.bf16.mxu0 0
        %3149 = vmatpush1.bf16.msra.mxu0 0
        %3150 = vmatprep.subr.bf16.mxu0 0
        %3151 = vmatpush1.bf16.msra.mxu0 0
        %3152 = vmatprep.subr.bf16.mxu0 0
        %3153 = vmatpush1.bf16.msra.mxu0 0
        %3154 = vmatprep.subr.bf16.mxu0 0
        %3155 = vmatpush1.bf16.msra.mxu0 0
        %3156 = vmatprep.subr.bf16.mxu0 0
        %3157 = vmatpush1.bf16.msra.mxu0 0
        %3158 = vmatprep.subr.bf16.mxu0 0
        %3159 = vmatpush1.bf16.msra.mxu0 0
        %3160 = vmatprep.subr.bf16.mxu0 0
        %3161 = vmatpush1.bf16.msra.mxu0 0
        %3162 = vmatprep.mubr.bf16.mxu0 0
        %3163 = vmatmul.mubr.bf16.gmra.mrb[0].mxu0 %v3119
        %v3164 = vpop.f32.mrb[0].mxu0
        %v3165 = vadd.f32 0.0, %v3164
        %v3166 = vpop.f32.mrb[0].mxu0
        %v3167 = vpop.f32.mrb[0].mxu0
        %v3168 = vadd.f32 0.0, %v3167
        %v3169 = vpop.f32.mrb[0].mxu0
        %3170 = vmatprep.mubr.bf16.mxu0 0
        %3171 = vmatmul.mubr.bf16.gmra.mrb[0].mxu0 %v3122
        %v3172 = vpop.f32.mrb[0].mxu0
        %v3173 = vadd.f32 0.0, %v3172
        %v3174 = vpop.f32.mrb[0].mxu0
        %v3175 = vpop.f32.mrb[0].mxu0
        %v3176 = vadd.f32 0.0, %v3175
        %v3177 = vpop.f32.mrb[0].mxu0
        %3178 = vmatprep.mubr.bf16.mxu0 0
        %3179 = vmatmul.mubr.bf16.gmra.mrb[0].mxu0 %v3125
        %v3180 = vpop.f32.mrb[0].mxu0
        %v3181 = vadd.f32 0.0, %v3180
        %v3182 = vpop.f32.mrb[0].mxu0
        %v3183 = vpop.f32.mrb[0].mxu0
        %v3184 = vadd.f32 0.0, %v3183
        %v3185 = vpop.f32.mrb[0].mxu0
        %3186 = vmatprep.mubr.bf16.mxu0 0
        %3187 = vmatmul.mubr.bf16.gmra.mrb[0].mxu0 %v3128
        %v3188 = vpop.f32.mrb[0].mxu0
        %v3189 = vadd.f32 0.0, %v3188
        %v3190 = vpop.f32.mrb[0].mxu0
        %v3191 = vpop.f32.mrb[0].mxu0
        %v3192 = vadd.f32 0.0, %v3191
        %v3193 = vpop.f32.mrb[0].mxu0
        %3194 = vdwg.mxu0
        %v3195 = vpack.c.bf16 %v3168, %v3165
        %v3196 = vpack.c.bf16 %v3176, %v3173
        %v3197 = vpack.c.bf16 %v3184, %v3181
        %v3198 = vpack.c.bf16 %v3192, %v3189
        %3203 = vrot.lane.b32.xlu0 %v3195, 80
        %v3204 = vpop.permute.xlu0 %3203
        %3205 = vrot.lane.b32.xlu0 %v3196, 80
        %v3206 = vpop.permute.xlu0 %3205
        %3207 = vrot.lane.b32.xlu0 %v3197, 80
        %v3208 = vpop.permute.xlu0 %3207
        %3209 = vrot.lane.b32.xlu0 %v3198, 80
        %v3210 = vpop.permute.xlu0 %3209
        %vm3215 = vcmask 786048
        %3216 = vst.msk [vmem:[#allocation3] sm:$0xff] %vm3215, %v3204
        %3217 = vst.msk [vmem:[#allocation3 + $0x8] sm:$0xff] %vm3215, %v3206
        %3218 = vst.msk [vmem:[#allocation3 + $0x10] sm:$0xff] %vm3215, %v3208
        %3219 = vst.msk [vmem:[#allocation3 + $0x18] sm:$0xff] %vm3215, %v3210
        %3220 = vrot.lane.b32.xlu0 %v1306, 32
        %v3221 = vpop.permute.xlu0 %3220
        %3222 = vrot.lane.b32.xlu0 %v1307, 32
        %v3223 = vpop.permute.xlu0 %3222
        %3224 = vrot.lane.b32.xlu0 %v1308, 32
        %v3225 = vpop.permute.xlu0 %3224
        %3226 = vrot.lane.b32.xlu0 %v1309, 32
        %v3227 = vpop.permute.xlu0 %3226
        %3228 = vrot.lane.b32.xlu0 %v1310, 32
        %v3229 = vpop.permute.xlu0 %3228
        %3230 = vrot.lane.b32.xlu0 %v1311, 32
        %v3231 = vpop.permute.xlu0 %3230
        %3232 = vrot.lane.b32.xlu0 %v1312, 32
        %v3233 = vpop.permute.xlu0 %3232
        %3234 = vrot.lane.b32.xlu0 %v1313, 32
        %v3235 = vpop.permute.xlu0 %3234
        %v3237 = vsel %vm1337, %v3221, 0
        %v3240 = vsel %vm1337, %v3223, 0
        %v3243 = vsel %vm1337, %v3225, 0
        %v3246 = vsel %vm1337, %v3227, 0
        %v3249 = vsel %vm1337, %v3229, 0
        %v3252 = vsel %vm1337, %v3231, 0
        %v3255 = vsel %vm1337, %v3233, 0
        %v3258 = vsel %vm1337, %v3235, 0
        %3260 = vmatprep.subr.bf16.mxu0 0
        %3261 = vmatpush1.bf16.xpose.msra.mxu0 %v3249
        %3262 = vmatprep.subr.bf16.mxu0 0
        %3263 = vmatpush1.bf16.xpose.msra.mxu0 %v3252
        %3264 = vmatprep.subr.bf16.mxu0 0
        %3265 = vmatpush1.bf16.xpose.msra.mxu0 %v3255
        %3266 = vmatprep.subr.bf16.mxu0 0
        %3267 = vmatpush1.bf16.xpose.msra.mxu0 %v3258
        %3268 = vmatprep.subr.bf16.mxu0 0
        %3269 = vmatpush1.bf16.xpose.msra.mxu0 0
        %3270 = vmatprep.subr.bf16.mxu0 0
        %3271 = vmatpush1.bf16.xpose.msra.mxu0 0
        %3272 = vmatprep.subr.bf16.mxu0 0
        %3273 = vmatpush1.bf16.xpose.msra.mxu0 0
        %3274 = vmatprep.subr.bf16.mxu0 0
        %3275 = vmatpush1.bf16.xpose.msra.mxu0 0
        %3276 = vmatprep.subr.bf16.mxu0 0
        %3277 = vmatpush1.bf16.xpose.msra.mxu0 0
        %3278 = vmatprep.subr.bf16.mxu0 0
        %3279 = vmatpush1.bf16.xpose.msra.mxu0 0
        %3280 = vmatprep.subr.bf16.mxu0 0
        %3281 = vmatpush1.bf16.xpose.msra.mxu0 0
        %3282 = vmatprep.subr.bf16.mxu0 0
        %3283 = vmatpush1.bf16.xpose.msra.mxu0 0
        %3284 = vmatprep.subr.bf16.mxu0 0
        %3285 = vmatpush1.bf16.xpose.msra.mxu0 0
        %3286 = vmatprep.subr.bf16.mxu0 0
        %3287 = vmatpush1.bf16.xpose.msra.mxu0 0
        %3288 = vmatprep.subr.bf16.mxu0 0
        %3289 = vmatpush1.bf16.xpose.msra.mxu0 0
        %3290 = vmatprep.subr.bf16.mxu0 0
        %3291 = vmatpush1.bf16.xpose.msra.mxu0 0
        %3292 = vmatprep.mubr.bf16.mxu0 0
        %3293 = vmatmul.mubr.bf16.gmra.mrb[0].mxu0 %v3237
        %v3294 = vpop.f32.mrb[0].mxu0
        %v3295 = vadd.f32 0.0, %v3294
        %v3296 = vpop.f32.mrb[0].mxu0
        %v3297 = vpop.f32.mrb[0].mxu0
        %v3298 = vadd.f32 0.0, %v3297
        %v3299 = vpop.f32.mrb[0].mxu0
        %3300 = vmatprep.mubr.bf16.mxu0 0
        %3301 = vmatmul.mubr.bf16.gmra.mrb[0].mxu0 %v3240
        %v3302 = vpop.f32.mrb[0].mxu0
        %v3303 = vadd.f32 0.0, %v3302
        %v3304 = vpop.f32.mrb[0].mxu0
        %v3305 = vpop.f32.mrb[0].mxu0
        %v3306 = vadd.f32 0.0, %v3305
        %v3307 = vpop.f32.mrb[0].mxu0
        %3308 = vmatprep.mubr.bf16.mxu0 0
        %3309 = vmatmul.mubr.bf16.gmra.mrb[0].mxu0 %v3243
        %v3310 = vpop.f32.mrb[0].mxu0
        %v3311 = vadd.f32 0.0, %v3310
        %v3312 = vpop.f32.mrb[0].mxu0
        %v3313 = vpop.f32.mrb[0].mxu0
        %v3314 = vadd.f32 0.0, %v3313
        %v3315 = vpop.f32.mrb[0].mxu0
        %3316 = vmatprep.mubr.bf16.mxu0 0
        %3317 = vmatmul.mubr.bf16.gmra.mrb[0].mxu0 %v3246
        %v3318 = vpop.f32.mrb[0].mxu0
        %v3319 = vadd.f32 0.0, %v3318
        %v3320 = vpop.f32.mrb[0].mxu0
        %v3321 = vpop.f32.mrb[0].mxu0
        %v3322 = vadd.f32 0.0, %v3321
        %v3323 = vpop.f32.mrb[0].mxu0
        %3324 = vdwg.mxu0
        %v3325 = vsel %vm1329, %v3295, -inf
        %v3326 = vsel %vm1330, %v3298, -inf
        %v3327 = vsel %vm1331, %v3303, -inf
        %v3328 = vsel %vm1332, %v3306, -inf
        %v3329 = vsel %vm1333, %v3311, -inf
        %v3330 = vsel %vm1334, %v3314, -inf
        %v3331 = vsel %vm1335, %v3319, -inf
        %v3332 = vsel %vm1336, %v3322, -inf
        %v3333 = vsel %vm1435, %v3325, -inf
        %3334 = vmax.xlane.f32.xlu0 %v3333
        %v3335 = vpop.xlane.xlu0 %3334
        %v3336 = vsel %vm1435, %v3326, -inf
        %3337 = vmax.xlane.f32.xlu0 %v3336
        %v3338 = vpop.xlane.xlu0 %3337
        %v3339 = vsel %vm1435, %v3327, -inf
        %3340 = vmax.xlane.f32.xlu0 %v3339
        %v3341 = vpop.xlane.xlu0 %3340
        %v3342 = vsel %vm1435, %v3328, -inf
        %3343 = vmax.xlane.f32.xlu0 %v3342
        %v3344 = vpop.xlane.xlu0 %3343
        %v3345 = vsel %vm1435, %v3329, -inf
        %3346 = vmax.xlane.f32.xlu0 %v3345
        %v3347 = vpop.xlane.xlu0 %3346
        %v3348 = vsel %vm1435, %v3330, -inf
        %3349 = vmax.xlane.f32.xlu0 %v3348
        %v3350 = vpop.xlane.xlu0 %3349
        %v3351 = vsel %vm1435, %v3331, -inf
        %3352 = vmax.xlane.f32.xlu0 %v3351
        %v3353 = vpop.xlane.xlu0 %3352
        %v3354 = vsel %vm1435, %v3332, -inf
        %3355 = vmax.xlane.f32.xlu0 %v3354
        %v3356 = vpop.xlane.xlu0 %3355
        %v3357 = vsub.f32 %v3325, %v3335
        %v3358 = vsub.f32 %v3326, %v3338
        %v3359 = vsub.f32 %v3327, %v3341
        %v3360 = vsub.f32 %v3328, %v3344
        %v3361 = vsub.f32 %v3329, %v3347
        %v3362 = vsub.f32 %v3330, %v3350
        %v3363 = vsub.f32 %v3331, %v3353
        %v3364 = vsub.f32 %v3332, %v3356
        %v3365 = vmul.f32 %v3357, 1.442695
        %v3366 = vpow.pop %v3365
        %v3367 = vmul.f32 %v3358, 1.442695
        %v3368 = vpow.pop %v3367
        %v3369 = vmul.f32 %v3359, 1.442695
        %v3370 = vpow.pop %v3369
        %v3371 = vmul.f32 %v3360, 1.442695
        %v3372 = vpow.pop %v3371
        %v3373 = vmul.f32 %v3361, 1.442695
        %v3374 = vpow.pop %v3373
        %v3375 = vmul.f32 %v3362, 1.442695
        %v3376 = vpow.pop %v3375
        %v3377 = vmul.f32 %v3363, 1.442695
        %v3378 = vpow.pop %v3377
        %v3379 = vmul.f32 %v3364, 1.442695
        %v3380 = vpow.pop %v3379
        %v3381 = vsel %vm1435, %v3366, 0.0
        %3382 = vadd.xlane.f32.xlu0 %v3381
        %v3383 = vpop.xlane.xlu0 %3382
        %v3384 = vsel %vm1435, %v3368, 0.0
        %3385 = vadd.xlane.f32.xlu0 %v3384
        %v3386 = vpop.xlane.xlu0 %3385
        %v3387 = vsel %vm1435, %v3370, 0.0
        %3388 = vadd.xlane.f32.xlu0 %v3387
        %v3389 = vpop.xlane.xlu0 %3388
        %v3390 = vsel %vm1435, %v3372, 0.0
        %3391 = vadd.xlane.f32.xlu0 %v3390
        %v3392 = vpop.xlane.xlu0 %3391
        %v3393 = vsel %vm1435, %v3374, 0.0
        %3394 = vadd.xlane.f32.xlu0 %v3393
        %v3395 = vpop.xlane.xlu0 %3394
        %v3396 = vsel %vm1435, %v3376, 0.0
        %3397 = vadd.xlane.f32.xlu0 %v3396
        %v3398 = vpop.xlane.xlu0 %3397
        %v3399 = vsel %vm1435, %v3378, 0.0
        %3400 = vadd.xlane.f32.xlu0 %v3399
        %v3401 = vpop.xlane.xlu0 %3400
        %v3402 = vsel %vm1435, %v3380, 0.0
        %3403 = vadd.xlane.f32.xlu0 %v3402
        %v3404 = vpop.xlane.xlu0 %3403
        %v3405 = vrcp.pop %v3383
        %v3406 = vrcp.pop %v3386
        %v3407 = vrcp.pop %v3389
        %v3408 = vrcp.pop %v3392
        %v3409 = vrcp.pop %v3395
        %v3410 = vrcp.pop %v3398
        %v3411 = vrcp.pop %v3401
        %v3412 = vrcp.pop %v3404
        %v3413 = vmul.f32 %v3366, %v3405
        %v3414 = vmul.f32 %v3368, %v3406
        %v3415 = vmul.f32 %v3370, %v3407
        %v3416 = vmul.f32 %v3372, %v3408
        %v3417 = vmul.f32 %v3374, %v3409
        %v3418 = vmul.f32 %v3376, %v3410
        %v3419 = vmul.f32 %v3378, %v3411
        %v3420 = vmul.f32 %v3380, %v3412
        %v3421 = vpack.c.bf16 %v3414, %v3413
        %v3422 = vpack.c.bf16 %v3416, %v3415
        %v3423 = vpack.c.bf16 %v3418, %v3417
        %v3424 = vpack.c.bf16 %v3420, %v3419
        %3425 = vrot.lane.b32.xlu0 %v1314, 32
        %v3426 = vpop.permute.xlu0 %3425
        %3427 = vrot.lane.b32.xlu0 %v1315, 32
        %v3428 = vpop.permute.xlu0 %3427
        %3429 = vrot.lane.b32.xlu0 %v1316, 32
        %v3430 = vpop.permute.xlu0 %3429
        %3431 = vrot.lane.b32.xlu0 %v1317, 32
        %v3432 = vpop.permute.xlu0 %3431
        %v3438 = vsel %vm1435, %v3421, 0
        %v3441 = vsel %vm1435, %v3422, 0
        %v3444 = vsel %vm1435, %v3423, 0
        %v3447 = vsel %vm1435, %v3424, 0
        %3449 = vmatprep.subr.bf16.mxu0 0
        %3450 = vmatpush1.bf16.msra.mxu0 %v3426
        %3451 = vmatprep.subr.bf16.mxu0 0
        %3452 = vmatpush1.bf16.msra.mxu0 %v3428
        %3453 = vmatprep.subr.bf16.mxu0 0
        %3454 = vmatpush1.bf16.msra.mxu0 %v3430
        %3455 = vmatprep.subr.bf16.mxu0 0
        %3456 = vmatpush1.bf16.msra.mxu0 %v3432
        %3457 = vmatprep.subr.bf16.mxu0 0
        %3458 = vmatpush1.bf16.msra.mxu0 0
        %3459 = vmatprep.subr.bf16.mxu0 0
        %3460 = vmatpush1.bf16.msra.mxu0 0
        %3461 = vmatprep.subr.bf16.mxu0 0
        %3462 = vmatpush1.bf16.msra.mxu0 0
        %3463 = vmatprep.subr.bf16.mxu0 0
        %3464 = vmatpush1.bf16.msra.mxu0 0
        %3465 = vmatprep.subr.bf16.mxu0 0
        %3466 = vmatpush1.bf16.msra.mxu0 0
        %3467 = vmatprep.subr.bf16.mxu0 0
        %3468 = vmatpush1.bf16.msra.mxu0 0
        %3469 = vmatprep.subr.bf16.mxu0 0
        %3470 = vmatpush1.bf16.msra.mxu0 0
        %3471 = vmatprep.subr.bf16.mxu0 0
        %3472 = vmatpush1.bf16.msra.mxu0 0
        %3473 = vmatprep.subr.bf16.mxu0 0
        %3474 = vmatpush1.bf16.msra.mxu0 0
        %3475 = vmatprep.subr.bf16.mxu0 0
        %3476 = vmatpush1.bf16.msra.mxu0 0
        %3477 = vmatprep.subr.bf16.mxu0 0
        %3478 = vmatpush1.bf16.msra.mxu0 0
        %3479 = vmatprep.subr.bf16.mxu0 0
        %3480 = vmatpush1.bf16.msra.mxu0 0
        %3481 = vmatprep.mubr.bf16.mxu0 0
        %3482 = vmatmul.mubr.bf16.gmra.mrb[0].mxu0 %v3438
        %v3483 = vpop.f32.mrb[0].mxu0
        %v3484 = vadd.f32 0.0, %v3483
        %v3485 = vpop.f32.mrb[0].mxu0
        %v3486 = vpop.f32.mrb[0].mxu0
        %v3487 = vadd.f32 0.0, %v3486
        %v3488 = vpop.f32.mrb[0].mxu0
        %3489 = vmatprep.mubr.bf16.mxu0 0
        %3490 = vmatmul.mubr.bf16.gmra.mrb[0].mxu0 %v3441
        %v3491 = vpop.f32.mrb[0].mxu0
        %v3492 = vadd.f32 0.0, %v3491
        %v3493 = vpop.f32.mrb[0].mxu0
        %v3494 = vpop.f32.mrb[0].mxu0
        %v3495 = vadd.f32 0.0, %v3494
        %v3496 = vpop.f32.mrb[0].mxu0
        %3497 = vmatprep.mubr.bf16.mxu0 0
        %3498 = vmatmul.mubr.bf16.gmra.mrb[0].mxu0 %v3444
        %v3499 = vpop.f32.mrb[0].mxu0
        %v3500 = vadd.f32 0.0, %v3499
        %v3501 = vpop.f32.mrb[0].mxu0
        %v3502 = vpop.f32.mrb[0].mxu0
        %v3503 = vadd.f32 0.0, %v3502
        %v3504 = vpop.f32.mrb[0].mxu0
        %3505 = vmatprep.mubr.bf16.mxu0 0
        %3506 = vmatmul.mubr.bf16.gmra.mrb[0].mxu0 %v3447
        %v3507 = vpop.f32.mrb[0].mxu0
        %v3508 = vadd.f32 0.0, %v3507
        %v3509 = vpop.f32.mrb[0].mxu0
        %v3510 = vpop.f32.mrb[0].mxu0
        %v3511 = vadd.f32 0.0, %v3510
        %v3512 = vpop.f32.mrb[0].mxu0
        %3513 = vdwg.mxu0
        %v3514 = vpack.c.bf16 %v3487, %v3484
        %v3515 = vpack.c.bf16 %v3495, %v3492
        %v3516 = vpack.c.bf16 %v3503, %v3500
        %v3517 = vpack.c.bf16 %v3511, %v3508
        %3522 = vrot.lane.b32.xlu0 %v3514, 96
        %v3523 = vpop.permute.xlu0 %3522
        %3524 = vrot.lane.b32.xlu0 %v3515, 96
        %v3525 = vpop.permute.xlu0 %3524
        %3526 = vrot.lane.b32.xlu0 %v3516, 96
        %v3527 = vpop.permute.xlu0 %3526
        %3528 = vrot.lane.b32.xlu0 %v3517, 96
        %v3529 = vpop.permute.xlu0 %3528
        %vm3534 = vcmask 917248
        %3535 = vst.msk [vmem:[#allocation3] sm:$0xff] %vm3534, %v3523
        %3536 = vst.msk [vmem:[#allocation3 + $0x8] sm:$0xff] %vm3534, %v3525
        %3537 = vst.msk [vmem:[#allocation3 + $0x10] sm:$0xff] %vm3534, %v3527
        %3538 = vst.msk [vmem:[#allocation3 + $0x18] sm:$0xff] %vm3534, %v3529
        %3539 = vrot.lane.b32.xlu0 %v1306, 16
        %v3540 = vpop.permute.xlu0 %3539
        %3541 = vrot.lane.b32.xlu0 %v1307, 16
        %v3542 = vpop.permute.xlu0 %3541
        %3543 = vrot.lane.b32.xlu0 %v1308, 16
        %v3544 = vpop.permute.xlu0 %3543
        %3545 = vrot.lane.b32.xlu0 %v1309, 16
        %v3546 = vpop.permute.xlu0 %3545
        %3547 = vrot.lane.b32.xlu0 %v1310, 16
        %v3548 = vpop.permute.xlu0 %3547
        %3549 = vrot.lane.b32.xlu0 %v1311, 16
        %v3550 = vpop.permute.xlu0 %3549
        %3551 = vrot.lane.b32.xlu0 %v1312, 16
        %v3552 = vpop.permute.xlu0 %3551
        %3553 = vrot.lane.b32.xlu0 %v1313, 16
        %v3554 = vpop.permute.xlu0 %3553
        %v3556 = vsel %vm1337, %v3540, 0
        %v3559 = vsel %vm1337, %v3542, 0
        %v3562 = vsel %vm1337, %v3544, 0
        %v3565 = vsel %vm1337, %v3546, 0
        %v3568 = vsel %vm1337, %v3548, 0
        %v3571 = vsel %vm1337, %v3550, 0
        %v3574 = vsel %vm1337, %v3552, 0
        %v3577 = vsel %vm1337, %v3554, 0
        %3579 = vmatprep.subr.bf16.mxu0 0
        %3580 = vmatpush1.bf16.xpose.msra.mxu0 %v3568
        %3581 = vmatprep.subr.bf16.mxu0 0
        %3582 = vmatpush1.bf16.xpose.msra.mxu0 %v3571
        %3583 = vmatprep.subr.bf16.mxu0 0
        %3584 = vmatpush1.bf16.xpose.msra.mxu0 %v3574
        %3585 = vmatprep.subr.bf16.mxu0 0
        %3586 = vmatpush1.bf16.xpose.msra.mxu0 %v3577
        %3587 = vmatprep.subr.bf16.mxu0 0
        %3588 = vmatpush1.bf16.xpose.msra.mxu0 0
        %3589 = vmatprep.subr.bf16.mxu0 0
        %3590 = vmatpush1.bf16.xpose.msra.mxu0 0
        %3591 = vmatprep.subr.bf16.mxu0 0
        %3592 = vmatpush1.bf16.xpose.msra.mxu0 0
        %3593 = vmatprep.subr.bf16.mxu0 0
        %3594 = vmatpush1.bf16.xpose.msra.mxu0 0
        %3595 = vmatprep.subr.bf16.mxu0 0
        %3596 = vmatpush1.bf16.xpose.msra.mxu0 0
        %3597 = vmatprep.subr.bf16.mxu0 0
        %3598 = vmatpush1.bf16.xpose.msra.mxu0 0
        %3599 = vmatprep.subr.bf16.mxu0 0
        %3600 = vmatpush1.bf16.xpose.msra.mxu0 0
        %3601 = vmatprep.subr.bf16.mxu0 0
        %3602 = vmatpush1.bf16.xpose.msra.mxu0 0
        %3603 = vmatprep.subr.bf16.mxu0 0
        %3604 = vmatpush1.bf16.xpose.msra.mxu0 0
        %3605 = vmatprep.subr.bf16.mxu0 0
        %3606 = vmatpush1.bf16.xpose.msra.mxu0 0
        %3607 = vmatprep.subr.bf16.mxu0 0
        %3608 = vmatpush1.bf16.xpose.msra.mxu0 0
        %3609 = vmatprep.subr.bf16.mxu0 0
        %3610 = vmatpush1.bf16.xpose.msra.mxu0 0
        %3611 = vmatprep.mubr.bf16.mxu0 0
        %3612 = vmatmul.mubr.bf16.gmra.mrb[0].mxu0 %v3556
        %v3613 = vpop.f32.mrb[0].mxu0
        %v3614 = vadd.f32 0.0, %v3613
        %v3615 = vpop.f32.mrb[0].mxu0
        %v3616 = vpop.f32.mrb[0].mxu0
        %v3617 = vadd.f32 0.0, %v3616
        %v3618 = vpop.f32.mrb[0].mxu0
        %3619 = vmatprep.mubr.bf16.mxu0 0
        %3620 = vmatmul.mubr.bf16.gmra.mrb[0].mxu0 %v3559
        %v3621 = vpop.f32.mrb[0].mxu0
        %v3622 = vadd.f32 0.0, %v3621
        %v3623 = vpop.f32.mrb[0].mxu0
        %v3624 = vpop.f32.mrb[0].mxu0
        %v3625 = vadd.f32 0.0, %v3624
        %v3626 = vpop.f32.mrb[0].mxu0
        %3627 = vmatprep.mubr.bf16.mxu0 0
        %3628 = vmatmul.mubr.bf16.gmra.mrb[0].mxu0 %v3562
        %v3629 = vpop.f32.mrb[0].mxu0
        %v3630 = vadd.f32 0.0, %v3629
        %v3631 = vpop.f32.mrb[0].mxu0
        %v3632 = vpop.f32.mrb[0].mxu0
        %v3633 = vadd.f32 0.0, %v3632
        %v3634 = vpop.f32.mrb[0].mxu0
        %3635 = vmatprep.mubr.bf16.mxu0 0
        %3636 = vmatmul.mubr.bf16.gmra.mrb[0].mxu0 %v3565
        %v3637 = vpop.f32.mrb[0].mxu0
        %v3638 = vadd.f32 0.0, %v3637
        %v3639 = vpop.f32.mrb[0].mxu0
        %v3640 = vpop.f32.mrb[0].mxu0
        %v3641 = vadd.f32 0.0, %v3640
        %v3642 = vpop.f32.mrb[0].mxu0
        %3643 = vdwg.mxu0
        %v3644 = vsel %vm1329, %v3614, -inf
        %v3645 = vsel %vm1330, %v3617, -inf
        %v3646 = vsel %vm1331, %v3622, -inf
        %v3647 = vsel %vm1332, %v3625, -inf
        %v3648 = vsel %vm1333, %v3630, -inf
        %v3649 = vsel %vm1334, %v3633, -inf
        %v3650 = vsel %vm1335, %v3638, -inf
        %v3651 = vsel %vm1336, %v3641, -inf
        %v3652 = vsel %vm1435, %v3644, -inf
        %3653 = vmax.xlane.f32.xlu0 %v3652
        %v3654 = vpop.xlane.xlu0 %3653
        %v3655 = vsel %vm1435, %v3645, -inf
        %3656 = vmax.xlane.f32.xlu0 %v3655
        %v3657 = vpop.xlane.xlu0 %3656
        %v3658 = vsel %vm1435, %v3646, -inf
        %3659 = vmax.xlane.f32.xlu0 %v3658
        %v3660 = vpop.xlane.xlu0 %3659
        %v3661 = vsel %vm1435, %v3647, -inf
        %3662 = vmax.xlane.f32.xlu0 %v3661
        %v3663 = vpop.xlane.xlu0 %3662
        %v3664 = vsel %vm1435, %v3648, -inf
        %3665 = vmax.xlane.f32.xlu0 %v3664
        %v3666 = vpop.xlane.xlu0 %3665
        %v3667 = vsel %vm1435, %v3649, -inf
        %3668 = vmax.xlane.f32.xlu0 %v3667
        %v3669 = vpop.xlane.xlu0 %3668
        %v3670 = vsel %vm1435, %v3650, -inf
        %3671 = vmax.xlane.f32.xlu0 %v3670
        %v3672 = vpop.xlane.xlu0 %3671
        %v3673 = vsel %vm1435, %v3651, -inf
        %3674 = vmax.xlane.f32.xlu0 %v3673
        %v3675 = vpop.xlane.xlu0 %3674
        %v3676 = vsub.f32 %v3644, %v3654
        %v3677 = vsub.f32 %v3645, %v3657
        %v3678 = vsub.f32 %v3646, %v3660
        %v3679 = vsub.f32 %v3647, %v3663
        %v3680 = vsub.f32 %v3648, %v3666
        %v3681 = vsub.f32 %v3649, %v3669
        %v3682 = vsub.f32 %v3650, %v3672
        %v3683 = vsub.f32 %v3651, %v3675
        %v3684 = vmul.f32 %v3676, 1.442695
        %v3685 = vpow.pop %v3684
        %v3686 = vmul.f32 %v3677, 1.442695
        %v3687 = vpow.pop %v3686
        %v3688 = vmul.f32 %v3678, 1.442695
        %v3689 = vpow.pop %v3688
        %v3690 = vmul.f32 %v3679, 1.442695
        %v3691 = vpow.pop %v3690
        %v3692 = vmul.f32 %v3680, 1.442695
        %v3693 = vpow.pop %v3692
        %v3694 = vmul.f32 %v3681, 1.442695
        %v3695 = vpow.pop %v3694
        %v3696 = vmul.f32 %v3682, 1.442695
        %v3697 = vpow.pop %v3696
        %v3698 = vmul.f32 %v3683, 1.442695
        %v3699 = vpow.pop %v3698
        %v3700 = vsel %vm1435, %v3685, 0.0
        %3701 = vadd.xlane.f32.xlu0 %v3700
        %v3702 = vpop.xlane.xlu0 %3701
        %v3703 = vsel %vm1435, %v3687, 0.0
        %3704 = vadd.xlane.f32.xlu0 %v3703
        %v3705 = vpop.xlane.xlu0 %3704
        %v3706 = vsel %vm1435, %v3689, 0.0
        %3707 = vadd.xlane.f32.xlu0 %v3706
        %v3708 = vpop.xlane.xlu0 %3707
        %v3709 = vsel %vm1435, %v3691, 0.0
        %3710 = vadd.xlane.f32.xlu0 %v3709
        %v3711 = vpop.xlane.xlu0 %3710
        %v3712 = vsel %vm1435, %v3693, 0.0
        %3713 = vadd.xlane.f32.xlu0 %v3712
        %v3714 = vpop.xlane.xlu0 %3713
        %v3715 = vsel %vm1435, %v3695, 0.0
        %3716 = vadd.xlane.f32.xlu0 %v3715
        %v3717 = vpop.xlane.xlu0 %3716
        %v3718 = vsel %vm1435, %v3697, 0.0
        %3719 = vadd.xlane.f32.xlu0 %v3718
        %v3720 = vpop.xlane.xlu0 %3719
        %v3721 = vsel %vm1435, %v3699, 0.0
        %3722 = vadd.xlane.f32.xlu0 %v3721
        %v3723 = vpop.xlane.xlu0 %3722
        %v3724 = vrcp.pop %v3702
        %v3725 = vrcp.pop %v3705
        %v3726 = vrcp.pop %v3708
        %v3727 = vrcp.pop %v3711
        %v3728 = vrcp.pop %v3714
        %v3729 = vrcp.pop %v3717
        %v3730 = vrcp.pop %v3720
        %v3731 = vrcp.pop %v3723
        %v3732 = vmul.f32 %v3685, %v3724
        %v3733 = vmul.f32 %v3687, %v3725
        %v3734 = vmul.f32 %v3689, %v3726
        %v3735 = vmul.f32 %v3691, %v3727
        %v3736 = vmul.f32 %v3693, %v3728
        %v3737 = vmul.f32 %v3695, %v3729
        %v3738 = vmul.f32 %v3697, %v3730
        %v3739 = vmul.f32 %v3699, %v3731
        %v3740 = vpack.c.bf16 %v3733, %v3732
        %v3741 = vpack.c.bf16 %v3735, %v3734
        %v3742 = vpack.c.bf16 %v3737, %v3736
        %v3743 = vpack.c.bf16 %v3739, %v3738
        %3744 = vrot.lane.b32.xlu0 %v1314, 16
        %v3745 = vpop.permute.xlu0 %3744
        %3746 = vrot.lane.b32.xlu0 %v1315, 16
        %v3747 = vpop.permute.xlu0 %3746
        %3748 = vrot.lane.b32.xlu0 %v1316, 16
        %v3749 = vpop.permute.xlu0 %3748
        %3750 = vrot.lane.b32.xlu0 %v1317, 16
        %v3751 = vpop.permute.xlu0 %3750
        %v3757 = vsel %vm1435, %v3740, 0
        %v3760 = vsel %vm1435, %v3741, 0
        %v3763 = vsel %vm1435, %v3742, 0
        %v3766 = vsel %vm1435, %v3743, 0
        %3768 = vmatprep.subr.bf16.mxu0 0
        %3769 = vmatpush1.bf16.msra.mxu0 %v3745
        %3770 = vmatprep.subr.bf16.mxu0 0
        %3771 = vmatpush1.bf16.msra.mxu0 %v3747
        %3772 = vmatprep.subr.bf16.mxu0 0
        %3773 = vmatpush1.bf16.msra.mxu0 %v3749
        %3774 = vmatprep.subr.bf16.mxu0 0
        %3775 = vmatpush1.bf16.msra.mxu0 %v3751
        %3776 = vmatprep.subr.bf16.mxu0 0
        %3777 = vmatpush1.bf16.msra.mxu0 0
        %3778 = vmatprep.subr.bf16.mxu0 0
        %3779 = vmatpush1.bf16.msra.mxu0 0
        %3780 = vmatprep.subr.bf16.mxu0 0
        %3781 = vmatpush1.bf16.msra.mxu0 0
        %3782 = vmatprep.subr.bf16.mxu0 0
        %3783 = vmatpush1.bf16.msra.mxu0 0
        %3784 = vmatprep.subr.bf16.mxu0 0
        %3785 = vmatpush1.bf16.msra.mxu0 0
        %3786 = vmatprep.subr.bf16.mxu0 0
        %3787 = vmatpush1.bf16.msra.mxu0 0
        %3788 = vmatprep.subr.bf16.mxu0 0
        %3789 = vmatpush1.bf16.msra.mxu0 0
        %3790 = vmatprep.subr.bf16.mxu0 0
        %3791 = vmatpush1.bf16.msra.mxu0 0
        %3792 = vmatprep.subr.bf16.mxu0 0
        %3793 = vmatpush1.bf16.msra.mxu0 0
        %3794 = vmatprep.subr.bf16.mxu0 0
        %3795 = vmatpush1.bf16.msra.mxu0 0
        %3796 = vmatprep.subr.bf16.mxu0 0
        %3797 = vmatpush1.bf16.msra.mxu0 0
        %3798 = vmatprep.subr.bf16.mxu0 0
        %3799 = vmatpush1.bf16.msra.mxu0 0
        %3800 = vmatprep.mubr.bf16.mxu0 0
        %3801 = vmatmul.mubr.bf16.gmra.mrb[0].mxu0 %v3757
        %v3802 = vpop.f32.mrb[0].mxu0
        %v3803 = vadd.f32 0.0, %v3802
        %v3804 = vpop.f32.mrb[0].mxu0
        %v3805 = vpop.f32.mrb[0].mxu0
        %v3806 = vadd.f32 0.0, %v3805
        %v3807 = vpop.f32.mrb[0].mxu0
        %3808 = vmatprep.mubr.bf16.mxu0 0
        %3809 = vmatmul.mubr.bf16.gmra.mrb[0].mxu0 %v3760
        %v3810 = vpop.f32.mrb[0].mxu0
        %v3811 = vadd.f32 0.0, %v3810
        %v3812 = vpop.f32.mrb[0].mxu0
        %v3813 = vpop.f32.mrb[0].mxu0
        %v3814 = vadd.f32 0.0, %v3813
        %v3815 = vpop.f32.mrb[0].mxu0
        %3816 = vmatprep.mubr.bf16.mxu0 0
        %3817 = vmatmul.mubr.bf16.gmra.mrb[0].mxu0 %v3763
        %v3818 = vpop.f32.mrb[0].mxu0
        %v3819 = vadd.f32 0.0, %v3818
        %v3820 = vpop.f32.mrb[0].mxu0
        %v3821 = vpop.f32.mrb[0].mxu0
        %v3822 = vadd.f32 0.0, %v3821
        %v3823 = vpop.f32.mrb[0].mxu0
        %3824 = vmatprep.mubr.bf16.mxu0 0
        %3825 = vmatmul.mubr.bf16.gmra.mrb[0].mxu0 %v3766
        %v3826 = vpop.f32.mrb[0].mxu0
        %v3827 = vadd.f32 0.0, %v3826
        %v3828 = vpop.f32.mrb[0].mxu0
        %v3829 = vpop.f32.mrb[0].mxu0
        %v3830 = vadd.f32 0.0, %v3829
        %v3831 = vpop.f32.mrb[0].mxu0
        %3832 = vdwg.mxu0
        %v3833 = vpack.c.bf16 %v3806, %v3803
        %v3834 = vpack.c.bf16 %v3814, %v3811
        %v3835 = vpack.c.bf16 %v3822, %v3819
        %v3836 = vpack.c.bf16 %v3830, %v3827
        %3841 = vrot.lane.b32.xlu0 %v3833, 112
        %v3842 = vpop.permute.xlu0 %3841
        %3843 = vrot.lane.b32.xlu0 %v3834, 112
        %v3844 = vpop.permute.xlu0 %3843
        %3845 = vrot.lane.b32.xlu0 %v3835, 112
        %v3846 = vpop.permute.xlu0 %3845
        %3847 = vrot.lane.b32.xlu0 %v3836, 112
        %v3848 = vpop.permute.xlu0 %3847
        %vm3853 = vcmask 1048448
        %3854 = vst.msk [vmem:[#allocation3] sm:$0xff] %vm3853, %v3842
        %3855 = vst.msk [vmem:[#allocation3 + $0x8] sm:$0xff] %vm3853, %v3844
        %3856 = vst.msk [vmem:[#allocation3 + $0x10] sm:$0xff] %vm3853, %v3846
        %3857 = vst.msk [vmem:[#allocation3 + $0x18] sm:$0xff] %vm3853, %v3848
        %v3858 = vld [vmem:[%s269] sm:$0xff]
        %v3859 = vld [vmem:[%s269 + $0x8] sm:$0xff]
        %v3860 = vld [vmem:[%s269 + $0x10] sm:$0xff]
        %v3861 = vld [vmem:[%s269 + $0x18] sm:$0xff]
        %v3862 = vld [vmem:[%s269 + $0x20] sm:$0xff]
        %v3863 = vld [vmem:[%s269 + $0x28] sm:$0xff]
        %v3864 = vld [vmem:[%s269 + $0x30] sm:$0xff]
        %v3865 = vld [vmem:[%s269 + $0x38] sm:$0xff]
        %v3866 = vld [vmem:[%s269 + $0x40] sm:$0xff]
        %v3867 = vld [vmem:[%s269 + $0x48] sm:$0xff]
        %v3868 = vld [vmem:[%s269 + $0x50] sm:$0xff]
        %v3869 = vld [vmem:[%s269 + $0x58] sm:$0xff]
        %v3870 = vld [vmem:[%s269 + $0x60] sm:$0xff]
        %v3871 = vld [vmem:[%s269 + $0x68] sm:$0xff]
        %v3872 = vld [vmem:[%s269 + $0x70] sm:$0xff]
        %v3873 = vld [vmem:[%s269 + $0x78] sm:$0xff]
        %v3874 = vld [vmem:[%s269 + $0x80] sm:$0xff]
        %v3875 = vld [vmem:[%s269 + $0x88] sm:$0xff]
        %v3876 = vld [vmem:[%s269 + $0x90] sm:$0xff]
        %v3877 = vld [vmem:[%s269 + $0x98] sm:$0xff]
        %v3878 = vld [vmem:[%s269 + $0xa0] sm:$0xff]
        %v3879 = vld [vmem:[%s269 + $0xa8] sm:$0xff]
        %v3880 = vld [vmem:[%s269 + $0xb0] sm:$0xff]
        %v3881 = vld [vmem:[%s269 + $0xb8] sm:$0xff]
        %v3882 = vld [vmem:[%s269 + $0xc0] sm:$0xff]
        %v3883 = vld [vmem:[%s269 + $0xc8] sm:$0xff]
        %v3884 = vld [vmem:[%s269 + $0xd0] sm:$0xff]
        %v3885 = vld [vmem:[%s269 + $0xd8] sm:$0xff]
        %v3886 = vld [vmem:[%s269 + $0xe0] sm:$0xff]
        %v3887 = vld [vmem:[%s269 + $0xe8] sm:$0xff]
        %v3888 = vld [vmem:[%s269 + $0xf0] sm:$0xff]
        %v3889 = vld [vmem:[%s269 + $0xf8] sm:$0xff]
        %v3890 = vld [vmem:[#allocation3] sm:$0xff]
        %v3891 = vld [vmem:[#allocation3 + $0x8] sm:$0xff]
        %v3892 = vld [vmem:[#allocation3 + $0x10] sm:$0xff]
        %v3893 = vld [vmem:[#allocation3 + $0x18] sm:$0xff]
        %s3894 = smul.u32 %s28, 64
        %s3895 = smul.addr %s3894, 4
        %s3896 = scalar_lea.vmem [#allocation9], %s3895
        %v3897 = vld [vmem:[%s3896] sm:$0xff]
        %v3898 = vld [vmem:[%s3896 + $0x8] sm:$0xff]
        %v3899 = vld [vmem:[%s3896 + $0x10] sm:$0xff]
        %v3900 = vld [vmem:[%s3896 + $0x18] sm:$0xff]
        %v3901 = vld [vmem:[%s3896 + $0x20] sm:$0xff]
        %v3902 = vld [vmem:[%s3896 + $0x28] sm:$0xff]
        %v3903 = vld [vmem:[%s3896 + $0x30] sm:$0xff]
        %v3904 = vld [vmem:[%s3896 + $0x38] sm:$0xff]
        %v3905 = vld [vmem:[%s3896 + $0x40] sm:$0xff]
        %v3906 = vld [vmem:[%s3896 + $0x48] sm:$0xff]
        %v3907 = vld [vmem:[%s3896 + $0x50] sm:$0xff]
        %v3908 = vld [vmem:[%s3896 + $0x58] sm:$0xff]
        %v3909 = vld [vmem:[%s3896 + $0x60] sm:$0xff]
        %v3910 = vld [vmem:[%s3896 + $0x68] sm:$0xff]
        %v3911 = vld [vmem:[%s3896 + $0x70] sm:$0xff]
        %v3912 = vld [vmem:[%s3896 + $0x78] sm:$0xff]
        %v3913 = vld [vmem:[%s3896 + $0x80] sm:$0xff]
        %v3914 = vld [vmem:[%s3896 + $0x88] sm:$0xff]
        %v3915 = vld [vmem:[%s3896 + $0x90] sm:$0xff]
        %v3916 = vld [vmem:[%s3896 + $0x98] sm:$0xff]
        %v3917 = vld [vmem:[%s3896 + $0xa0] sm:$0xff]
        %v3918 = vld [vmem:[%s3896 + $0xa8] sm:$0xff]
        %v3919 = vld [vmem:[%s3896 + $0xb0] sm:$0xff]
        %v3920 = vld [vmem:[%s3896 + $0xb8] sm:$0xff]
        %v3921 = vld [vmem:[%s3896 + $0xc0] sm:$0xff]
        %v3922 = vld [vmem:[%s3896 + $0xc8] sm:$0xff]
        %v3923 = vld [vmem:[%s3896 + $0xd0] sm:$0xff]
        %v3924 = vld [vmem:[%s3896 + $0xd8] sm:$0xff]
        %v3925 = vld [vmem:[%s3896 + $0xe0] sm:$0xff]
        %v3926 = vld [vmem:[%s3896 + $0xe8] sm:$0xff]
        %v3927 = vld [vmem:[%s3896 + $0xf0] sm:$0xff]
        %v3928 = vld [vmem:[%s3896 + $0xf8] sm:$0xff]
        %v3961 = vunpack.c.l.b16 %v3897
        %v3962 = vunpack.c.h.b16 %v3897
        %v3963 = vunpack.c.l.b16 %v3898
        %v3964 = vunpack.c.h.b16 %v3898
        %v3965 = vunpack.c.l.b16 %v3899
        %v3966 = vunpack.c.h.b16 %v3899
        %v3967 = vunpack.c.l.b16 %v3900
        %v3968 = vunpack.c.h.b16 %v3900
        %v3969 = vunpack.c.l.b16 %v3901
        %v3970 = vunpack.c.h.b16 %v3901
        %v3971 = vunpack.c.l.b16 %v3902
        %v3972 = vunpack.c.h.b16 %v3902
        %v3973 = vunpack.c.l.b16 %v3903
        %v3974 = vunpack.c.h.b16 %v3903
        %v3975 = vunpack.c.l.b16 %v3904
        %v3976 = vunpack.c.h.b16 %v3904
        %v3977 = vunpack.c.l.b16 %v3905
        %v3978 = vunpack.c.h.b16 %v3905
        %v3979 = vunpack.c.l.b16 %v3906
        %v3980 = vunpack.c.h.b16 %v3906
        %v3981 = vunpack.c.l.b16 %v3907
        %v3982 = vunpack.c.h.b16 %v3907
        %v3983 = vunpack.c.l.b16 %v3908
        %v3984 = vunpack.c.h.b16 %v3908
        %v3985 = vunpack.c.l.b16 %v3909
        %v3986 = vunpack.c.h.b16 %v3909
        %v3987 = vunpack.c.l.b16 %v3910
        %v3988 = vunpack.c.h.b16 %v3910
        %v3989 = vunpack.c.l.b16 %v3911
        %v3990 = vunpack.c.h.b16 %v3911
        %v3991 = vunpack.c.l.b16 %v3912
        %v3992 = vunpack.c.h.b16 %v3912
        %v3993 = vunpack.c.l.b16 %v3913
        %v3994 = vunpack.c.h.b16 %v3913
        %v3995 = vunpack.c.l.b16 %v3914
        %v3996 = vunpack.c.h.b16 %v3914
        %v3997 = vunpack.c.l.b16 %v3915
        %v3998 = vunpack.c.h.b16 %v3915
        %v3999 = vunpack.c.l.b16 %v3916
        %v4000 = vunpack.c.h.b16 %v3916
        %v4001 = vunpack.c.l.b16 %v3917
        %v4002 = vunpack.c.h.b16 %v3917
        %v4003 = vunpack.c.l.b16 %v3918
        %v4004 = vunpack.c.h.b16 %v3918
        %v4005 = vunpack.c.l.b16 %v3919
        %v4006 = vunpack.c.h.b16 %v3919
        %v4007 = vunpack.c.l.b16 %v3920
        %v4008 = vunpack.c.h.b16 %v3920
        %v4009 = vunpack.c.l.b16 %v3921
        %v4010 = vunpack.c.h.b16 %v3921
        %v4011 = vunpack.c.l.b16 %v3922
        %v4012 = vunpack.c.h.b16 %v3922
        %v4013 = vunpack.c.l.b16 %v3923
        %v4014 = vunpack.c.h.b16 %v3923
        %v4015 = vunpack.c.l.b16 %v3924
        %v4016 = vunpack.c.h.b16 %v3924
        %v4017 = vunpack.c.l.b16 %v3925
        %v4018 = vunpack.c.h.b16 %v3925
        %v4019 = vunpack.c.l.b16 %v3926
        %v4020 = vunpack.c.h.b16 %v3926
        %v4021 = vunpack.c.l.b16 %v3927
        %v4022 = vunpack.c.h.b16 %v3927
        %v4023 = vunpack.c.l.b16 %v3928
        %v4024 = vunpack.c.h.b16 %v3928
        %v4025 = vpack.c.b16 %v3965, %v3961
        %v4026 = vpack.c.b16 %v3966, %v3962
        %v4027 = vpack.c.b16 %v3967, %v3963
        %v4028 = vpack.c.b16 %v3968, %v3964
        %v4029 = vpack.c.b16 %v3973, %v3969
        %v4030 = vpack.c.b16 %v3974, %v3970
        %v4031 = vpack.c.b16 %v3975, %v3971
        %v4032 = vpack.c.b16 %v3976, %v3972
        %v4033 = vpack.c.b16 %v3981, %v3977
        %v4034 = vpack.c.b16 %v3982, %v3978
        %v4035 = vpack.c.b16 %v3983, %v3979
        %v4036 = vpack.c.b16 %v3984, %v3980
        %v4037 = vpack.c.b16 %v3989, %v3985
        %v4038 = vpack.c.b16 %v3990, %v3986
        %v4039 = vpack.c.b16 %v3991, %v3987
        %v4040 = vpack.c.b16 %v3992, %v3988
        %v4041 = vpack.c.b16 %v3997, %v3993
        %v4042 = vpack.c.b16 %v3998, %v3994
        %v4043 = vpack.c.b16 %v3999, %v3995
        %v4044 = vpack.c.b16 %v4000, %v3996
        %v4045 = vpack.c.b16 %v4005, %v4001
        %v4046 = vpack.c.b16 %v4006, %v4002
        %v4047 = vpack.c.b16 %v4007, %v4003
        %v4048 = vpack.c.b16 %v4008, %v4004
        %v4049 = vpack.c.b16 %v4013, %v4009
        %v4050 = vpack.c.b16 %v4014, %v4010
        %v4051 = vpack.c.b16 %v4015, %v4011
        %v4052 = vpack.c.b16 %v4016, %v4012
        %v4053 = vpack.c.b16 %v4021, %v4017
        %v4054 = vpack.c.b16 %v4022, %v4018
        %v4055 = vpack.c.b16 %v4023, %v4019
        %v4056 = vpack.c.b16 %v4024, %v4020
        %4089 = vmatprep.subr.bf16.mxu0 %v4026
        %4090 = vmatpush1.bf16.msra.mxu0 %v4025
        %4091 = vmatprep.subr.bf16.mxu0 %v4030
        %4092 = vmatpush1.bf16.msra.mxu0 %v4029
        %4093 = vmatprep.subr.bf16.mxu0 %v4034
        %4094 = vmatpush1.bf16.msra.mxu0 %v4033
        %4095 = vmatprep.subr.bf16.mxu0 %v4038
        %4096 = vmatpush1.bf16.msra.mxu0 %v4037
        %4097 = vmatprep.subr.bf16.mxu0 %v4042
        %4098 = vmatpush1.bf16.msra.mxu0 %v4041
        %4099 = vmatprep.subr.bf16.mxu0 %v4046
        %4100 = vmatpush1.bf16.msra.mxu0 %v4045
        %4101 = vmatprep.subr.bf16.mxu0 %v4050
        %4102 = vmatpush1.bf16.msra.mxu0 %v4049
        %4103 = vmatprep.subr.bf16.mxu0 %v4054
        %4104 = vmatpush1.bf16.msra.mxu0 %v4053
        %4105 = vmatprep.subr.bf16.mxu0 0
        %4106 = vmatpush1.bf16.msra.mxu0 0
        %4107 = vmatprep.subr.bf16.mxu0 0
        %4108 = vmatpush1.bf16.msra.mxu0 0
        %4109 = vmatprep.subr.bf16.mxu0 0
        %4110 = vmatpush1.bf16.msra.mxu0 0
        %4111 = vmatprep.subr.bf16.mxu0 0
        %4112 = vmatpush1.bf16.msra.mxu0 0
        %4113 = vmatprep.subr.bf16.mxu0 0
        %4114 = vmatpush1.bf16.msra.mxu0 0
        %4115 = vmatprep.subr.bf16.mxu0 0
        %4116 = vmatpush1.bf16.msra.mxu0 0
        %4117 = vmatprep.subr.bf16.mxu0 0
        %4118 = vmatpush1.bf16.msra.mxu0 0
        %4119 = vmatprep.subr.bf16.mxu0 0
        %4120 = vmatpush1.bf16.msra.mxu0 0
        %4121 = vmatprep.mubr.bf16.mxu0 0
        %4122 = vmatmul.mubr.bf16.gmra.mrb[0].mxu0 %v3890
        %v4123 = vpop.f32.mrb[0].mxu0
        %v4124 = vadd.f32 0.0, %v4123
        %v4125 = vpop.f32.mrb[0].mxu0
        %v4126 = vadd.f32 0.0, %v4125
        %v4127 = vpop.f32.mrb[0].mxu0
        %v4128 = vadd.f32 0.0, %v4127
        %v4129 = vpop.f32.mrb[0].mxu0
        %v4130 = vadd.f32 0.0, %v4129
        %4131 = vmatprep.mubr.bf16.mxu0 0
        %4132 = vmatmul.mubr.bf16.gmra.mrb[0].mxu0 %v3891
        %v4133 = vpop.f32.mrb[0].mxu0
        %v4134 = vadd.f32 0.0, %v4133
        %v4135 = vpop.f32.mrb[0].mxu0
        %v4136 = vadd.f32 0.0, %v4135
        %v4137 = vpop.f32.mrb[0].mxu0
        %v4138 = vadd.f32 0.0, %v4137
        %v4139 = vpop.f32.mrb[0].mxu0
        %v4140 = vadd.f32 0.0, %v4139
        %4141 = vmatprep.mubr.bf16.mxu0 0
        %4142 = vmatmul.mubr.bf16.gmra.mrb[0].mxu0 %v3892
        %v4143 = vpop.f32.mrb[0].mxu0
        %v4144 = vadd.f32 0.0, %v4143
        %v4145 = vpop.f32.mrb[0].mxu0
        %v4146 = vadd.f32 0.0, %v4145
        %v4147 = vpop.f32.mrb[0].mxu0
        %v4148 = vadd.f32 0.0, %v4147
        %v4149 = vpop.f32.mrb[0].mxu0
        %v4150 = vadd.f32 0.0, %v4149
        %4151 = vmatprep.mubr.bf16.mxu0 0
        %4152 = vmatmul.mubr.bf16.gmra.mrb[0].mxu0 %v3893
        %v4153 = vpop.f32.mrb[0].mxu0
        %v4154 = vadd.f32 0.0, %v4153
        %v4155 = vpop.f32.mrb[0].mxu0
        %v4156 = vadd.f32 0.0, %v4155
        %v4157 = vpop.f32.mrb[0].mxu0
        %v4158 = vadd.f32 0.0, %v4157
        %v4159 = vpop.f32.mrb[0].mxu0
        %v4160 = vadd.f32 0.0, %v4159
        %4161 = vdwg.mxu0
        %4162 = vmatprep.subr.bf16.mxu0 %v4028
        %4163 = vmatpush1.bf16.msra.mxu0 %v4027
        %4164 = vmatprep.subr.bf16.mxu0 %v4032
        %4165 = vmatpush1.bf16.msra.mxu0 %v4031
        %4166 = vmatprep.subr.bf16.mxu0 %v4036
        %4167 = vmatpush1.bf16.msra.mxu0 %v4035
        %4168 = vmatprep.subr.bf16.mxu0 %v4040
        %4169 = vmatpush1.bf16.msra.mxu0 %v4039
        %4170 = vmatprep.subr.bf16.mxu0 %v4044
        %4171 = vmatpush1.bf16.msra.mxu0 %v4043
        %4172 = vmatprep.subr.bf16.mxu0 %v4048
        %4173 = vmatpush1.bf16.msra.mxu0 %v4047
        %4174 = vmatprep.subr.bf16.mxu0 %v4052
        %4175 = vmatpush1.bf16.msra.mxu0 %v4051
        %4176 = vmatprep.subr.bf16.mxu0 %v4056
        %4177 = vmatpush1.bf16.msra.mxu0 %v4055
        %4178 = vmatprep.subr.bf16.mxu0 0
        %4179 = vmatpush1.bf16.msra.mxu0 0
        %4180 = vmatprep.subr.bf16.mxu0 0
        %4181 = vmatpush1.bf16.msra.mxu0 0
        %4182 = vmatprep.subr.bf16.mxu0 0
        %4183 = vmatpush1.bf16.msra.mxu0 0
        %4184 = vmatprep.subr.bf16.mxu0 0
        %4185 = vmatpush1.bf16.msra.mxu0 0
        %4186 = vmatprep.subr.bf16.mxu0 0
        %4187 = vmatpush1.bf16.msra.mxu0 0
        %4188 = vmatprep.subr.bf16.mxu0 0
        %4189 = vmatpush1.bf16.msra.mxu0 0
        %4190 = vmatprep.subr.bf16.mxu0 0
        %4191 = vmatpush1.bf16.msra.mxu0 0
        %4192 = vmatprep.subr.bf16.mxu0 0
        %4193 = vmatpush1.bf16.msra.mxu0 0
        %4194 = vmatprep.mubr.bf16.mxu0 0
        %4195 = vmatmul.mubr.bf16.gmra.mrb[0].mxu0 %v3890
        %v4196 = vpop.f32.mrb[0].mxu0
        %v4197 = vadd.f32 0.0, %v4196
        %v4198 = vpop.f32.mrb[0].mxu0
        %v4199 = vadd.f32 0.0, %v4198
        %v4200 = vpop.f32.mrb[0].mxu0
        %v4201 = vadd.f32 0.0, %v4200
        %v4202 = vpop.f32.mrb[0].mxu0
        %v4203 = vadd.f32 0.0, %v4202
        %4204 = vmatprep.mubr.bf16.mxu0 0
        %4205 = vmatmul.mubr.bf16.gmra.mrb[0].mxu0 %v3891
        %v4206 = vpop.f32.mrb[0].mxu0
        %v4207 = vadd.f32 0.0, %v4206
        %v4208 = vpop.f32.mrb[0].mxu0
        %v4209 = vadd.f32 0.0, %v4208
        %v4210 = vpop.f32.mrb[0].mxu0
        %v4211 = vadd.f32 0.0, %v4210
        %v4212 = vpop.f32.mrb[0].mxu0
        %v4213 = vadd.f32 0.0, %v4212
        %4214 = vmatprep.mubr.bf16.mxu0 0
        %4215 = vmatmul.mubr.bf16.gmra.mrb[0].mxu0 %v3892
        %v4216 = vpop.f32.mrb[0].mxu0
        %v4217 = vadd.f32 0.0, %v4216
        %v4218 = vpop.f32.mrb[0].mxu0
        %v4219 = vadd.f32 0.0, %v4218
        %v4220 = vpop.f32.mrb[0].mxu0
        %v4221 = vadd.f32 0.0, %v4220
        %v4222 = vpop.f32.mrb[0].mxu0
        %v4223 = vadd.f32 0.0, %v4222
        %4224 = vmatprep.mubr.bf16.mxu0 0
        %4225 = vmatmul.mubr.bf16.gmra.mrb[0].mxu0 %v3893
        %v4226 = vpop.f32.mrb[0].mxu0
        %v4227 = vadd.f32 0.0, %v4226
        %v4228 = vpop.f32.mrb[0].mxu0
        %v4229 = vadd.f32 0.0, %v4228
        %v4230 = vpop.f32.mrb[0].mxu0
        %v4231 = vadd.f32 0.0, %v4230
        %v4232 = vpop.f32.mrb[0].mxu0
        %v4233 = vadd.f32 0.0, %v4232
        %4234 = vdwg.mxu0
        %v4235 = vadd.f32 %v3858, %v4124
        %v4236 = vadd.f32 %v3859, %v4126
        %v4237 = vadd.f32 %v3860, %v4197
        %v4238 = vadd.f32 %v3861, %v4199
        %v4239 = vadd.f32 %v3862, %v4128
        %v4240 = vadd.f32 %v3863, %v4130
        %v4241 = vadd.f32 %v3864, %v4201
        %v4242 = vadd.f32 %v3865, %v4203
        %v4243 = vadd.f32 %v3866, %v4134
        %v4244 = vadd.f32 %v3867, %v4136
        %v4245 = vadd.f32 %v3868, %v4207
        %v4246 = vadd.f32 %v3869, %v4209
        %v4247 = vadd.f32 %v3870, %v4138
        %v4248 = vadd.f32 %v3871, %v4140
        %v4249 = vadd.f32 %v3872, %v4211
        %v4250 = vadd.f32 %v3873, %v4213
        %v4251 = vadd.f32 %v3874, %v4144
        %v4252 = vadd.f32 %v3875, %v4146
        %v4253 = vadd.f32 %v3876, %v4217
        %v4254 = vadd.f32 %v3877, %v4219
        %v4255 = vadd.f32 %v3878, %v4148
        %v4256 = vadd.f32 %v3879, %v4150
        %v4257 = vadd.f32 %v3880, %v4221
        %v4258 = vadd.f32 %v3881, %v4223
        %v4259 = vadd.f32 %v3882, %v4154
        %v4260 = vadd.f32 %v3883, %v4156
        %v4261 = vadd.f32 %v3884, %v4227
        %v4262 = vadd.f32 %v3885, %v4229
        %v4263 = vadd.f32 %v3886, %v4158
        %v4264 = vadd.f32 %v3887, %v4160
        %v4265 = vadd.f32 %v3888, %v4231
        %v4266 = vadd.f32 %v3889, %v4233
        %4267 = vst [vmem:[%s269] sm:$0xff] %v4235
        %4268 = vst [vmem:[%s269 + $0x8] sm:$0xff] %v4236
        %4269 = vst [vmem:[%s269 + $0x10] sm:$0xff] %v4237
        %4270 = vst [vmem:[%s269 + $0x18] sm:$0xff] %v4238
        %4271 = vst [vmem:[%s269 + $0x20] sm:$0xff] %v4239
        %4272 = vst [vmem:[%s269 + $0x28] sm:$0xff] %v4240
        %4273 = vst [vmem:[%s269 + $0x30] sm:$0xff] %v4241
        %4274 = vst [vmem:[%s269 + $0x38] sm:$0xff] %v4242
        %4275 = vst [vmem:[%s269 + $0x40] sm:$0xff] %v4243
        %4276 = vst [vmem:[%s269 + $0x48] sm:$0xff] %v4244
        %4277 = vst [vmem:[%s269 + $0x50] sm:$0xff] %v4245
        %4278 = vst [vmem:[%s269 + $0x58] sm:$0xff] %v4246
        %4279 = vst [vmem:[%s269 + $0x60] sm:$0xff] %v4247
        %4280 = vst [vmem:[%s269 + $0x68] sm:$0xff] %v4248
        %4281 = vst [vmem:[%s269 + $0x70] sm:$0xff] %v4249
        %4282 = vst [vmem:[%s269 + $0x78] sm:$0xff] %v4250
        %4283 = vst [vmem:[%s269 + $0x80] sm:$0xff] %v4251
        %4284 = vst [vmem:[%s269 + $0x88] sm:$0xff] %v4252
        %4285 = vst [vmem:[%s269 + $0x90] sm:$0xff] %v4253
        %4286 = vst [vmem:[%s269 + $0x98] sm:$0xff] %v4254
        %4287 = vst [vmem:[%s269 + $0xa0] sm:$0xff] %v4255
        %4288 = vst [vmem:[%s269 + $0xa8] sm:$0xff] %v4256
        %4289 = vst [vmem:[%s269 + $0xb0] sm:$0xff] %v4257
        %4290 = vst [vmem:[%s269 + $0xb8] sm:$0xff] %v4258
        %4291 = vst [vmem:[%s269 + $0xc0] sm:$0xff] %v4259
        %4292 = vst [vmem:[%s269 + $0xc8] sm:$0xff] %v4260
        %4293 = vst [vmem:[%s269 + $0xd0] sm:$0xff] %v4261
        %4294 = vst [vmem:[%s269 + $0xd8] sm:$0xff] %v4262
        %4295 = vst [vmem:[%s269 + $0xe0] sm:$0xff] %v4263
        %4296 = vst [vmem:[%s269 + $0xe8] sm:$0xff] %v4264
        %4297 = vst [vmem:[%s269 + $0xf0] sm:$0xff] %v4265
        %4298 = vst [vmem:[%s269 + $0xf8] sm:$0xff] %v4266
        %p4299 = scmp.eq.s32.totalorder %s28, 3
        // Predicated region
        $region57: #{multihead_forward.1} parent=35 // pred_check
          %p4300 = pneg %p4299
        $region58: #{multihead_forward.1} parent=35 // pred_check_branch
          %4302 = sbr.rel (%p4300) target = $region60
        $region59: #{multihead_forward.1} parent=35 // pred_region
          %v4303 = vld [vmem:[%s269] sm:$0xff]
          %v4304 = vld [vmem:[%s269 + $0x8] sm:$0xff]
          %v4305 = vld [vmem:[%s269 + $0x10] sm:$0xff]
          %v4306 = vld [vmem:[%s269 + $0x18] sm:$0xff]
          %v4307 = vld [vmem:[%s269 + $0x20] sm:$0xff]
          %v4308 = vld [vmem:[%s269 + $0x28] sm:$0xff]
          %v4309 = vld [vmem:[%s269 + $0x30] sm:$0xff]
          %v4310 = vld [vmem:[%s269 + $0x38] sm:$0xff]
          %v4311 = vld [vmem:[%s269 + $0x40] sm:$0xff]
          %v4312 = vld [vmem:[%s269 + $0x48] sm:$0xff]
          %v4313 = vld [vmem:[%s269 + $0x50] sm:$0xff]
          %v4314 = vld [vmem:[%s269 + $0x58] sm:$0xff]
          %v4315 = vld [vmem:[%s269 + $0x60] sm:$0xff]
          %v4316 = vld [vmem:[%s269 + $0x68] sm:$0xff]
          %v4317 = vld [vmem:[%s269 + $0x70] sm:$0xff]
          %v4318 = vld [vmem:[%s269 + $0x78] sm:$0xff]
          %v4319 = vld [vmem:[%s269 + $0x80] sm:$0xff]
          %v4320 = vld [vmem:[%s269 + $0x88] sm:$0xff]
          %v4321 = vld [vmem:[%s269 + $0x90] sm:$0xff]
          %v4322 = vld [vmem:[%s269 + $0x98] sm:$0xff]
          %v4323 = vld [vmem:[%s269 + $0xa0] sm:$0xff]
          %v4324 = vld [vmem:[%s269 + $0xa8] sm:$0xff]
          %v4325 = vld [vmem:[%s269 + $0xb0] sm:$0xff]
          %v4326 = vld [vmem:[%s269 + $0xb8] sm:$0xff]
          %v4327 = vld [vmem:[%s269 + $0xc0] sm:$0xff]
          %v4328 = vld [vmem:[%s269 + $0xc8] sm:$0xff]
          %v4329 = vld [vmem:[%s269 + $0xd0] sm:$0xff]
          %v4330 = vld [vmem:[%s269 + $0xd8] sm:$0xff]
          %v4331 = vld [vmem:[%s269 + $0xe0] sm:$0xff]
          %v4332 = vld [vmem:[%s269 + $0xe8] sm:$0xff]
          %v4333 = vld [vmem:[%s269 + $0xf0] sm:$0xff]
          %v4334 = vld [vmem:[%s269 + $0xf8] sm:$0xff]
          %v4335 = vld [vmem:[#allocation10] sm:$0xf]
          %v4337 = vlaneseq
          %v4338 = vshrl.u32 %v4337, 7
          %v4339 = vsub.s32 0, %v4338
          %v4340 = vrot.slane %v4335, %v4339
          %v4341 = vlaneseq
          %v4342 = vshrl.u32 %v4341, 7
          %v4343 = vsub.s32 1, %v4342
          %v4344 = vrot.slane %v4335, %v4343
          %v4345 = vlaneseq
          %v4346 = vshrl.u32 %v4345, 7
          %v4347 = vsub.s32 2, %v4346
          %v4348 = vrot.slane %v4335, %v4347
          %v4349 = vlaneseq
          %v4350 = vshrl.u32 %v4349, 7
          %v4351 = vsub.s32 3, %v4350
          %v4352 = vrot.slane %v4335, %v4351
          %v4357 = vadd.f32 %v4303, %v4340
          %v4358 = vadd.f32 %v4304, %v4344
          %v4359 = vadd.f32 %v4305, %v4348
          %v4360 = vadd.f32 %v4306, %v4352
          %v4361 = vadd.f32 %v4307, %v4340
          %v4362 = vadd.f32 %v4308, %v4344
          %v4363 = vadd.f32 %v4309, %v4348
          %v4364 = vadd.f32 %v4310, %v4352
          %v4365 = vadd.f32 %v4311, %v4340
          %v4366 = vadd.f32 %v4312, %v4344
          %v4367 = vadd.f32 %v4313, %v4348
          %v4368 = vadd.f32 %v4314, %v4352
          %v4369 = vadd.f32 %v4315, %v4340
          %v4370 = vadd.f32 %v4316, %v4344
          %v4371 = vadd.f32 %v4317, %v4348
          %v4372 = vadd.f32 %v4318, %v4352
          %v4373 = vadd.f32 %v4319, %v4340
          %v4374 = vadd.f32 %v4320, %v4344
          %v4375 = vadd.f32 %v4321, %v4348
          %v4376 = vadd.f32 %v4322, %v4352
          %v4377 = vadd.f32 %v4323, %v4340
          %v4378 = vadd.f32 %v4324, %v4344
          %v4379 = vadd.f32 %v4325, %v4348
          %v4380 = vadd.f32 %v4326, %v4352
          %v4381 = vadd.f32 %v4327, %v4340
          %v4382 = vadd.f32 %v4328, %v4344
          %v4383 = vadd.f32 %v4329, %v4348
          %v4384 = vadd.f32 %v4330, %v4352
          %v4385 = vadd.f32 %v4331, %v4340
          %v4386 = vadd.f32 %v4332, %v4344
          %v4387 = vadd.f32 %v4333, %v4348
          %v4388 = vadd.f32 %v4334, %v4352
          %4389 = vst [vmem:[%s269] sm:$0xff] %v4357
          %4390 = vst [vmem:[%s269 + $0x8] sm:$0xff] %v4358
          %4391 = vst [vmem:[%s269 + $0x10] sm:$0xff] %v4359
          %4392 = vst [vmem:[%s269 + $0x18] sm:$0xff] %v4360
          %4393 = vst [vmem:[%s269 + $0x20] sm:$0xff] %v4361
          %4394 = vst [vmem:[%s269 + $0x28] sm:$0xff] %v4362
          %4395 = vst [vmem:[%s269 + $0x30] sm:$0xff] %v4363
          %4396 = vst [vmem:[%s269 + $0x38] sm:$0xff] %v4364
          %4397 = vst [vmem:[%s269 + $0x40] sm:$0xff] %v4365
          %4398 = vst [vmem:[%s269 + $0x48] sm:$0xff] %v4366
          %4399 = vst [vmem:[%s269 + $0x50] sm:$0xff] %v4367
          %4400 = vst [vmem:[%s269 + $0x58] sm:$0xff] %v4368
          %4401 = vst [vmem:[%s269 + $0x60] sm:$0xff] %v4369
          %4402 = vst [vmem:[%s269 + $0x68] sm:$0xff] %v4370
          %4403 = vst [vmem:[%s269 + $0x70] sm:$0xff] %v4371
          %4404 = vst [vmem:[%s269 + $0x78] sm:$0xff] %v4372
          %4405 = vst [vmem:[%s269 + $0x80] sm:$0xff] %v4373
          %4406 = vst [vmem:[%s269 + $0x88] sm:$0xff] %v4374
          %4407 = vst [vmem:[%s269 + $0x90] sm:$0xff] %v4375
          %4408 = vst [vmem:[%s269 + $0x98] sm:$0xff] %v4376
          %4409 = vst [vmem:[%s269 + $0xa0] sm:$0xff] %v4377
          %4410 = vst [vmem:[%s269 + $0xa8] sm:$0xff] %v4378
          %4411 = vst [vmem:[%s269 + $0xb0] sm:$0xff] %v4379
          %4412 = vst [vmem:[%s269 + $0xb8] sm:$0xff] %v4380
          %4413 = vst [vmem:[%s269 + $0xc0] sm:$0xff] %v4381
          %4414 = vst [vmem:[%s269 + $0xc8] sm:$0xff] %v4382
          %4415 = vst [vmem:[%s269 + $0xd0] sm:$0xff] %v4383
          %4416 = vst [vmem:[%s269 + $0xd8] sm:$0xff] %v4384
          %4417 = vst [vmem:[%s269 + $0xe0] sm:$0xff] %v4385
          %4418 = vst [vmem:[%s269 + $0xe8] sm:$0xff] %v4386
          %4419 = vst [vmem:[%s269 + $0xf0] sm:$0xff] %v4387
          %4420 = vst [vmem:[%s269 + $0xf8] sm:$0xff] %v4388
        $region60: #{multihead_forward.1} parent=35 // pred_fallthru
          _
        %s4421 = sand.u32 %s132, 1
        %s4422 = scalar_lea.sflag [#allocation6], %s4421
        %s4423 = sand.u32 %s132, 1
        %s4424 = smul.addr %s4423, 256
        %s4425 = scalar_lea.vmem [#allocation12], %s4424
        // Predicated region
        $region61: #{multihead_forward.1} parent=35 // pred_check
          %p4426 = pneg %p142
        $region62: #{multihead_forward.1} parent=35 // pred_check_branch
          %4428 = sbr.rel (%p4426) target = $region64
        $region63: #{multihead_forward.1} parent=35 // pred_region
          %s4430 = ssub.s32 4096, 4096
          %4431 = vsyncadd %s4422, %s4430
          %s4432 = smul.addr %s27, 32
          %s4433 = smul.addr %s4432, 128
          %s4434 = scalar_lea.hbm %s4, %s4433
          %s4435 = sshll.u32 %s4425, 4
          %s4436 = int_to_ptr.vmem [resolvable:$true] %s4435
          %4441 = dma.vmem_to_hbm [thread:$0]  %s4436, 4096, %s4434, %s4422, 512, 512, 32
        $region64: #{multihead_forward.1} parent=35 // pred_fallthru
          _
      $region36: #{multihead_forward.1} parent=5 // pred_fallthru
        _
      %p4442 = scmp.le.s32.totalorder 2, %s18
      // Predicated region
      $region65: #{multihead_forward.1} parent=5 // pred_check
        %p4443 = pneg %p4442
      $region66: #{multihead_forward.1} parent=5 // pred_check_branch
        %4445 = sbr.rel (%p4443) target = $region68
      $region67: #{multihead_forward.1} parent=5 // pred_region
        %s4446 = ssub.s32 %s18, 2
        // Predicated region
        $region69: #{multihead_forward.1} parent=67 // pred_check
          %p4447 = pneg %p148
        $region70: #{multihead_forward.1} parent=67 // pred_check_branch
          %4449 = sbr.rel (%p4447) target = $region72
        $region71: #{multihead_forward.1} parent=67 // pred_region
          %s4450 = sand.u32 %s133, 1
          %s4451 = scalar_lea.sflag [#allocation6], %s4450
          %s4452 = sand.u32 %s133, 1
          %s4453 = smul.addr %s4452, 256
          %s4454 = scalar_lea.vmem [#allocation12], %s4453
          %4455 = dma.done %s4451, 4096
        $region72: #{multihead_forward.1} parent=67 // pred_fallthru
          _
      $region68: #{multihead_forward.1} parent=5 // pred_fallthru
        _
    $region6: #{multihead_forward.1} parent=1 // loop_footer
      %s22 = sadd.s32 1, %s18
    $region7: #{multihead_forward.1} parent=1 // loop_footer_branch
      %17 = sbr.rel target = $region3
    $region8: #{multihead_forward.1} parent=1 // loop_exit
      _
    %4456 = vsyncpa [#allocation5], 1
    %s4457 = scalar_lea.sflag [#allocation5], 1
    %4458 = vsyncpa %s4457, 1
    %4459 = vsyncpa [#allocation8], 1
    %4460 = vsyncpa [#allocation11], 1
    %4461 = vsyncpa [#allocation6], 1
    %s4462 = scalar_lea.sflag [#allocation6], 1
    %4463 = vsyncpa %s4462, 1

</llo_original>
